<compile_context>
chip_gen: v7x
topology: tpu7x:2x2x1
jax: 0.10.0
libtpu: 0.0.40
codegen_flags: <defaults>
</compile_context>

<pallas_src>
import functools
import math

import jax
import jax.numpy as jnp
from jax.experimental import pallas as pl
from jax.experimental.pallas import tpu as pltpu

# ----- small synthetic BERT config (no checkpoint load), lane-dense dims ----
HIDDEN = 128
HEADS = 2
HEAD_DIM = HIDDEN // HEADS
LAYERS = 2
INTERMEDIATE = 256
VOCAB = 128
MAX_POS = 64
LN_EPS = 1e-12

_VMEM = pl.BlockSpec(memory_space=pltpu.MemorySpace.VMEM)  # whole-array-in-VMEM spec


# ---------------------------------------------------------------------------
# In-kernel helpers (pure jnp on loaded values)
# ---------------------------------------------------------------------------
def _ln(x, g, b):
    mean = jnp.mean(x, axis=-1, keepdims=True)
    var = jnp.mean(jnp.square(x - mean), axis=-1, keepdims=True)
    return (x - mean) * jax.lax.rsqrt(var + LN_EPS) * g + b


def _gelu(x):
    # TODO(synk): HF BERT uses exact erf-GELU; tanh approximation used here
    # (tanh lowers to the EUP; erf is not guaranteed in Mosaic lowering).
    c = math.sqrt(2.0 / math.pi)
    return 0.5 * x * (1.0 + jnp.tanh(c * (x + 0.044715 * x * x * x)))


def _softmax_rows(s):
    s = s - jnp.max(s, axis=-1, keepdims=True)
    p = jnp.exp(s)
    return p * pl.reciprocal(jnp.sum(p, axis=-1, keepdims=True), approx=True)


# ---------------------------------------------------------------------------
# Fused encoder-layer kernel
# ---------------------------------------------------------------------------
def _make_encoder_layer_kernel(batch, seq, heads, head_dim, use_mask):
    hidden = heads * head_dim
    scale = 1.0 / math.sqrt(head_dim)

    def kernel(*refs):
        if use_mask:
            h_ref, mask_ref = refs[0], refs[1]
            rest = refs[2:]
        else:
            h_ref, mask_ref = refs[0], None
            rest = refs[1:]
        (wqkv_ref, bqkv_ref, wo_ref, bo_ref, ln1g_ref, ln1b_ref,
         w1_ref, b1_ref, w2_ref, b2_ref, ln2g_ref, ln2b_ref, o_ref) = rest

        h = h_ref[...]                                     # [N, H] f32
        h_bf = h.astype(jnp.bfloat16)

        # fused QKV projection: one [N,H] x [H,3H] bf16 matmul, f32 accumulate
        qkv = jnp.dot(h_bf, wqkv_ref[...],
                      preferred_element_type=jnp.float32) + bqkv_ref[...]
        q = qkv[:, :hidden]
        k = qkv[:, hidden:2 * hidden]
        v = qkv[:, 2 * hidden:]

        # per-(batch, head) attention, statically unrolled, all in VMEM/vregs
        ctx_rows = []
        for bb in range(batch):
            r0 = bb * seq
            if use_mask:
                # additive bias built in-kernel from the [B,S] mask
                bias_b = (1.0 - mask_ref[pl.ds(bb, 1), :]) * -10000.0   # [1, S]
            head_outs = []
            for hh in range(heads):
                c0 = hh * head_dim
                qh = q[r0:r0 + seq, c0:c0 + head_dim].astype(jnp.bfloat16)
                kh = k[r0:r0 + seq, c0:c0 + head_dim].astype(jnp.bfloat16)
                vh = v[r0:r0 + seq, c0:c0 + head_dim].astype(jnp.bfloat16)
                s = jax.lax.dot_general(
                    qh, kh, (((1,), (1,)), ((), ())),
                    preferred_element_type=jnp.float32) * scale        # [S, S]
                if use_mask:
                    s = s + bias_b
                p = _softmax_rows(s)
                head_outs.append(jnp.dot(p.astype(jnp.bfloat16), vh,
                                         preferred_element_type=jnp.float32))
            ctx_rows.append(jnp.concatenate(head_outs, axis=-1))       # [S, H]
        ctx = jnp.concatenate(ctx_rows, axis=0)                        # [N, H]

        # attention output projection + residual + LayerNorm (fused)
        attn_out = jnp.dot(ctx.astype(jnp.bfloat16), wo_ref[...],
                           preferred_element_type=jnp.float32) + bo_ref[...]
        h1 = _ln(h + attn_out, ln1g_ref[...], ln1b_ref[...])

        # fused FFN: GELU(h1 @ w1 + b1) @ w2 + b2, then residual + LayerNorm
        f = jnp.dot(h1.astype(jnp.bfloat16), w1_ref[...],
                    preferred_element_type=jnp.float32) + b1_ref[...]
        f = _gelu(f)
        f = jnp.dot(f.astype(jnp.bfloat16), w2_ref[...],
                    preferred_element_type=jnp.float32) + b2_ref[...]
        o_ref[...] = _ln(h1 + f, ln2g_ref[...], ln2b_ref[...])

    return kernel


def pallas_encoder_layer(h, mask, layer, batch, seq):
    kernel = _make_encoder_layer_kernel(batch, seq, HEADS, HEAD_DIM,
                                        mask is not None)
    inputs = [h]
    if mask is not None:
        inputs.append(mask.astype(jnp.float32))
    inputs += [layer["wqkv"], layer["bqkv"], layer["wo"], layer["bo"],
               layer["ln1_g"], layer["ln1_b"], layer["w1"], layer["b1"],
               layer["w2"], layer["b2"], layer["ln2_g"], layer["ln2_b"]]
    return pl.pallas_call(
        kernel,
        out_shape=jax.ShapeDtypeStruct(h.shape, jnp.float32),
        in_specs=[_VMEM] * len(inputs),
        out_specs=_VMEM,
    )(*inputs)


# ---------------------------------------------------------------------------
# Embedding LayerNorm kernel
# ---------------------------------------------------------------------------
def _layernorm_kernel(x_ref, g_ref, b_ref, o_ref):
    o_ref[...] = _ln(x_ref[...], g_ref[...], b_ref[...])


def pallas_layernorm(x, g, b):
    return pl.pallas_call(
        _layernorm_kernel,
        out_shape=jax.ShapeDtypeStruct(x.shape, jnp.float32),
        in_specs=[_VMEM, _VMEM, _VMEM],
        out_specs=_VMEM,
    )(x, g, b)


# ---------------------------------------------------------------------------
# Classifier heads (fused with softmax / masked cross-entropy)
# ---------------------------------------------------------------------------
def _classify_softmax_kernel(x_ref, w_ref, b_ref, o_ref):
    logits = jnp.dot(x_ref[...].astype(jnp.bfloat16), w_ref[...],
                     preferred_element_type=jnp.float32) + b_ref[...]
    o_ref[...] = _softmax_rows(logits)


def pallas_classify_softmax(x, w, b):
    n, v = x.shape[0], w.shape[1]
    return pl.pallas_call(
        _classify_softmax_kernel,
        out_shape=jax.ShapeDtypeStruct((n, v), jnp.float32),
        in_specs=[_VMEM, _VMEM, _VMEM],
        out_specs=_VMEM,
    )(x, w, b)


def _classify_ce_kernel(x_ref, w_ref, b_ref, y_ref, loss_ref):
    logits = jnp.dot(x_ref[...].astype(jnp.bfloat16), w_ref[...],
                     preferred_element_type=jnp.float32) + b_ref[...]
    labels = y_ref[...]                                           # [N, 1] int32
    m = jnp.max(logits, axis=-1, keepdims=True)
    lse = m + jnp.log(jnp.sum(jnp.exp(logits - m), axis=-1, keepdims=True))
    vocab_ids = jax.lax.broadcasted_iota(jnp.int32, logits.shape, 1)
    onehot = (vocab_ids == labels).astype(jnp.float32)
    correct = jnp.sum(logits * onehot, axis=-1, keepdims=True)
    valid = (labels != -1).astype(jnp.float32)                    # ignore_index=-1
    per_tok = (lse - correct) * valid
    total = jnp.sum(per_tok, axis=0, keepdims=True)               # [1, 1]
    denom = jnp.maximum(jnp.sum(valid, axis=0, keepdims=True), 1.0)
    loss_ref[...] = total / denom


def pallas_classify_ce(x, w, b, y):
    return pl.pallas_call(
        _classify_ce_kernel,
        out_shape=jax.ShapeDtypeStruct((1, 1), jnp.float32),
        in_specs=[_VMEM, _VMEM, _VMEM, _VMEM],
        out_specs=_VMEM,
    )(x, w, b, y)


# ---------------------------------------------------------------------------
# Parameters (deterministic synthetic init — no checkpoint loading)
# ---------------------------------------------------------------------------
def init_params(key):
    def nrm(k, shape, dtype=jnp.float32):
        return (0.02 * jax.random.normal(k, shape, dtype=jnp.float32)).astype(dtype)

    keys = jax.random.split(key, 4 + LAYERS)
    params = {
        "word_emb": nrm(keys[0], (VOCAB, HIDDEN)),
        "pos_emb": nrm(keys[1], (MAX_POS, HIDDEN)),
        "type_emb": nrm(keys[2], (2, HIDDEN)),
        "emb_ln_g": jnp.ones((1, HIDDEN), jnp.float32),
        "emb_ln_b": jnp.zeros((1, HIDDEN), jnp.float32),
    }
    layers = []
    for l in range(LAYERS):
        lk = jax.random.split(keys[3 + l], 4)
        layers.append({
            # fused QKV weight [H, 3H] in bf16 (MXU-native), f32 biases
            "wqkv": nrm(lk[0], (HIDDEN, 3 * HIDDEN), jnp.bfloat16),
            "bqkv": jnp.zeros((1, 3 * HIDDEN), jnp.float32),
            "wo": nrm(lk[1], (HIDDEN, HIDDEN), jnp.bfloat16),
            "bo": jnp.zeros((1, HIDDEN), jnp.float32),
            "ln1_g": jnp.ones((1, HIDDEN), jnp.float32),
            "ln1_b": jnp.zeros((1, HIDDEN), jnp.float32),
            "w1": nrm(lk[2], (HIDDEN, INTERMEDIATE), jnp.bfloat16),
            "b1": jnp.zeros((1, INTERMEDIATE), jnp.float32),
            "w2": nrm(lk[3], (INTERMEDIATE, HIDDEN), jnp.bfloat16),
            "b2": jnp.zeros((1, HIDDEN), jnp.float32),
            "ln2_g": jnp.ones((1, HIDDEN), jnp.float32),
            "ln2_b": jnp.zeros((1, HIDDEN), jnp.float32),
        })
    params["layers"] = layers
    ck = jax.random.split(keys[3 + LAYERS], 2)
    params["w_cls"] = nrm(ck[0], (HIDDEN, VOCAB), jnp.bfloat16)
    params["b_cls"] = jnp.zeros((1, VOCAB), jnp.float32)
    return params


# ---------------------------------------------------------------------------
# Model forward (BERT encoder + classifier head), matching LanguageModel.forward
# ---------------------------------------------------------------------------
def bert_encode(params, x_ids, mask):
    b, s = x_ids.shape
    h = (params["word_emb"][x_ids]
         + params["pos_emb"][:s][None, :, :]
         + params["type_emb"][0][None, None, :])
    h = h.reshape(b * s, HIDDEN)
    h = pallas_layernorm(h, params["emb_ln_g"], params["emb_ln_b"])
    for layer in params["layers"]:
        h = pallas_encoder_layer(h, mask, layer, b, s)
    return h  # [B*S, H]  (BERT sequence output, flattened)


def language_model_forward(params, x, mask=None, y=None):
    b, s = x.shape
    if y is not None:
        h = bert_encode(params, x, mask)
        loss = pallas_classify_ce(h, params["w_cls"], params["b_cls"],
                                  y.reshape(b * s, 1).astype(jnp.int32))
        return loss[0, 0]                          # scalar CE loss, ignore_index=-1
    else:
        h = bert_encode(params, x, None)           # torch path: bert(x) without mask
        probs = pallas_classify_softmax(h, params["w_cls"], params["b_cls"])
        return probs.reshape(b, s, VOCAB)          # softmax over vocab


# ---------------------------------------------------------------------------
if __name__ == "__main__":
    key = jax.random.PRNGKey(0)
    pkey, xkey, ykey = jax.random.split(key, 3)
    params = init_params(pkey)

    forward = jax.jit(language_model_forward)

    B, S = 2, 8
    x = jax.random.randint(xkey, (B, S), 0, VOCAB, dtype=jnp.int32)

    # inference branch: softmax probabilities over vocab
    probs = jax.block_until_ready(forward(params, x))
    assert probs.shape == (B, S, VOCAB)
    assert bool(jnp.isfinite(probs).all())

    # training branch: masked cross-entropy loss (ignore_index=-1)
    mask = jnp.ones((B, S), jnp.float32)
    y = jax.random.randint(ykey, (B, S), 0, VOCAB, dtype=jnp.int32)
    y = y.at[0, 0].set(-1)
    loss = jax.block_until_ready(forward(params, x, mask=mask, y=y))
    assert loss.shape == ()
    assert bool(jnp.isfinite(loss))

    print("KERNEL_OK")
</pallas_src>

<mosaic_0001>
module attributes {stable_mosaic.version = 11 : i64} {
  func.func @_layernorm_kernel(%arg0: memref<16x128xf32, #tpu.memory_space<vmem>>, %arg1: memref<1x128xf32, #tpu.memory_space<vmem>>, %arg2: memref<1x128xf32, #tpu.memory_space<vmem>>, %arg3: memref<16x128xf32, #tpu.memory_space<vmem>>) attributes {dimension_semantics = [], scalar_prefetch = 0 : i64, scratch_operands = 0 : i64, tpu.core_type = #tpu.core_type<tc>} {
    %c0 = arith.constant 0 : index
    %c0_0 = arith.constant 0 : index
    %0 = vector.load %arg0[%c0, %c0_0] : memref<16x128xf32, #tpu.memory_space<vmem>>, vector<16x128xf32>
    %c0_1 = arith.constant 0 : index
    %c0_2 = arith.constant 0 : index
    %1 = vector.load %arg1[%c0_1, %c0_2] : memref<1x128xf32, #tpu.memory_space<vmem>>, vector<1x128xf32>
    %c0_3 = arith.constant 0 : index
    %c0_4 = arith.constant 0 : index
    %2 = vector.load %arg2[%c0_3, %c0_4] : memref<1x128xf32, #tpu.memory_space<vmem>>, vector<1x128xf32>
    %cst = arith.constant dense<0.000000e+00> : vector<16xf32>
    %3 = vector.multi_reduction <add>, %0, %cst [1] : vector<16x128xf32> to vector<16xf32>
    %4 = vector.shape_cast %3 : vector<16xf32> to vector<16x1xf32>
    %cst_5 = arith.constant 1.280000e+02 : f32
    %5 = vector.broadcast %cst_5 : f32 to vector<16x1xf32>
    %6 = arith.divf %4, %5 : vector<16x1xf32>
    %7 = vector.broadcast %6 : vector<16x1xf32> to vector<16x128xf32>
    %8 = arith.subf %0, %7 : vector<16x128xf32>
    %9 = arith.mulf %8, %8 : vector<16x128xf32>
    %cst_6 = arith.constant dense<0.000000e+00> : vector<16xf32>
    %10 = vector.multi_reduction <add>, %9, %cst_6 [1] : vector<16x128xf32> to vector<16xf32>
    %11 = vector.shape_cast %10 : vector<16xf32> to vector<16x1xf32>
    %cst_7 = arith.constant 1.280000e+02 : f32
    %12 = vector.broadcast %cst_7 : f32 to vector<16x1xf32>
    %13 = arith.divf %11, %12 : vector<16x1xf32>
    %14 = vector.broadcast %6 : vector<16x1xf32> to vector<16x128xf32>
    %15 = arith.subf %0, %14 : vector<16x128xf32>
    %cst_8 = arith.constant 9.99999996E-13 : f32
    %16 = vector.broadcast %cst_8 : f32 to vector<16x1xf32>
    %17 = arith.addf %13, %16 : vector<16x1xf32>
    %18 = math.rsqrt %17 : vector<16x1xf32>
    %19 = vector.broadcast %18 : vector<16x1xf32> to vector<16x128xf32>
    %20 = arith.mulf %15, %19 : vector<16x128xf32>
    %21 = vector.broadcast %1 : vector<1x128xf32> to vector<16x128xf32>
    %22 = arith.mulf %20, %21 : vector<16x128xf32>
    %23 = vector.broadcast %2 : vector<1x128xf32> to vector<16x128xf32>
    %24 = arith.addf %22, %23 : vector<16x128xf32>
    %c0_9 = arith.constant 0 : index
    %c0_10 = arith.constant 0 : index
    %25 = vector.load %arg3[%c0_9, %c0_10] : memref<16x128xf32, #tpu.memory_space<vmem>>, vector<16x128xf32>
    tpu.vector_store %arg3[%c0_9, %c0_10], %24 {strides = array<i32>} : memref<16x128xf32, #tpu.memory_space<vmem>>, vector<16x128xf32>,
    return
  }
}

module attributes {stable_mosaic.version = 11 : i64} {
  func.func @_classify_softmax_kernel(%arg0: memref<16x128xf32, #tpu.memory_space<vmem>>, %arg1: memref<128x128xbf16, #tpu.memory_space<vmem>>, %arg2: memref<1x128xf32, #tpu.memory_space<vmem>>, %arg3: memref<16x128xf32, #tpu.memory_space<vmem>>) attributes {dimension_semantics = [], scalar_prefetch = 0 : i64, scratch_operands = 0 : i64, tpu.core_type = #tpu.core_type<tc>} {
    %c0 = arith.constant 0 : index
    %c0_0 = arith.constant 0 : index
    %0 = vector.load %arg0[%c0, %c0_0] : memref<16x128xf32, #tpu.memory_space<vmem>>, vector<16x128xf32>
    %1 = arith.truncf %0 : vector<16x128xf32> to vector<16x128xbf16>
    %c0_1 = arith.constant 0 : index
    %c0_2 = arith.constant 0 : index
    %2 = vector.load %arg1[%c0_1, %c0_2] : memref<128x128xbf16, #tpu.memory_space<vmem>>, vector<128x128xbf16>
    %cst = arith.constant dense<0.000000e+00> : vector<16x128xf32>
    %3 = tpu.matmul %1, %2, %cst {dimension_numbers = #tpu.dot_dimension_numbers<[1], [0], [0], [1], [0, 0, 1, 1], [], []>} : vector<16x128xbf16>, vector<128x128xbf16>, vector<16x128xf32> -> vector<16x128xf32>
    %c0_3 = arith.constant 0 : index
    %c0_4 = arith.constant 0 : index
    %4 = vector.load %arg2[%c0_3, %c0_4] : memref<1x128xf32, #tpu.memory_space<vmem>>, vector<1x128xf32>
    %5 = vector.broadcast %4 : vector<1x128xf32> to vector<16x128xf32>
    %6 = arith.addf %3, %5 : vector<16x128xf32>
    %cst_5 = arith.constant dense<0xFF800000> : vector<16xf32>
    %7 = vector.multi_reduction <maximumf>, %6, %cst_5 [1] : vector<16x128xf32> to vector<16xf32>
    %8 = vector.shape_cast %7 : vector<16xf32> to vector<16x1xf32>
    %9 = vector.broadcast %8 : vector<16x1xf32> to vector<16x128xf32>
    %10 = arith.subf %6, %9 : vector<16x128xf32>
    %11 = math.exp %10 : vector<16x128xf32>
    %cst_6 = arith.constant dense<0.000000e+00> : vector<16xf32>
    %12 = vector.multi_reduction <add>, %11, %cst_6 [1] : vector<16x128xf32> to vector<16xf32>
    %13 = vector.shape_cast %12 : vector<16xf32> to vector<16x1xf32>
    %14 = tpu.reciprocal %13 {approx = true} : vector<16x1xf32> -> vector<16x1xf32>
    %15 = vector.broadcast %14 : vector<16x1xf32> to vector<16x128xf32>
    %16 = arith.mulf %11, %15 : vector<16x128xf32>
    %c0_7 = arith.constant 0 : index
    %c0_8 = arith.constant 0 : index
    %17 = vector.load %arg3[%c0_7, %c0_8] : memref<16x128xf32, #tpu.memory_space<vmem>>, vector<16x128xf32>
    tpu.vector_store %arg3[%c0_7, %c0_8], %16 {strides = array<i32>} : memref<16x128xf32, #tpu.memory_space<vmem>>, vector<16x128xf32>,
    return
  }
}

module attributes {stable_mosaic.version = 11 : i64} {
  func.func @kernel(%arg0: memref<16x128xf32, #tpu.memory_space<vmem>>, %arg1: memref<128x384xbf16, #tpu.memory_space<vmem>>, %arg2: memref<1x384xf32, #tpu.memory_space<vmem>>, %arg3: memref<128x128xbf16, #tpu.memory_space<vmem>>, %arg4: memref<1x128xf32, #tpu.memory_space<vmem>>, %arg5: memref<1x128xf32, #tpu.memory_space<vmem>>, %arg6: memref<1x128xf32, #tpu.memory_space<vmem>>, %arg7: memref<128x256xbf16, #tpu.memory_space<vmem>>, %arg8: memref<1x256xf32, #tpu.memory_space<vmem>>, %arg9: memref<256x128xbf16, #tpu.memory_space<vmem>>, %arg10: memref<1x128xf32, #tpu.memory_space<vmem>>, %arg11: memref<1x128xf32, #tpu.memory_space<vmem>>, %arg12: memref<1x128xf32, #tpu.memory_space<vmem>>, %arg13: memref<16x128xf32, #tpu.memory_space<vmem>>) attributes {dimension_semantics = [], scalar_prefetch = 0 : i64, scratch_operands = 0 : i64, tpu.core_type = #tpu.core_type<tc>} {
    %c0 = arith.constant 0 : index
    %c0_0 = arith.constant 0 : index
    %0 = vector.load %arg0[%c0, %c0_0] : memref<16x128xf32, #tpu.memory_space<vmem>>, vector<16x128xf32>
    %1 = arith.truncf %0 : vector<16x128xf32> to vector<16x128xbf16>
    %c0_1 = arith.constant 0 : index
    %c0_2 = arith.constant 0 : index
    %2 = vector.load %arg1[%c0_1, %c0_2] : memref<128x384xbf16, #tpu.memory_space<vmem>>, vector<128x384xbf16>
    %cst = arith.constant dense<0.000000e+00> : vector<16x384xf32>
    %3 = tpu.matmul %1, %2, %cst {dimension_numbers = #tpu.dot_dimension_numbers<[1], [0], [0], [1], [0, 0, 1, 1], [], []>} : vector<16x128xbf16>, vector<128x384xbf16>, vector<16x384xf32> -> vector<16x384xf32>
    %c0_3 = arith.constant 0 : index
    %c0_4 = arith.constant 0 : index
    %4 = vector.load %arg2[%c0_3, %c0_4] : memref<1x384xf32, #tpu.memory_space<vmem>>, vector<1x384xf32>
    %5 = vector.broadcast %4 : vector<1x384xf32> to vector<16x384xf32>
    %6 = arith.addf %3, %5 : vector<16x384xf32>
    %7 = vector.extract_strided_slice %6 {offsets = [0, 0], sizes = [16, 128], strides = [1, 1]} : vector<16x384xf32> to vector<16x128xf32>
    %8 = vector.extract_strided_slice %6 {offsets = [0, 128], sizes = [16, 128], strides = [1, 1]} : vector<16x384xf32> to vector<16x128xf32>
    %9 = vector.extract_strided_slice %6 {offsets = [0, 256], sizes = [16, 128], strides = [1, 1]} : vector<16x384xf32> to vector<16x128xf32>
    %10 = vector.extract_strided_slice %7 {offsets = [0, 0], sizes = [8, 64], strides = [1, 1]} : vector<16x128xf32> to vector<8x64xf32>
    %11 = arith.truncf %10 : vector<8x64xf32> to vector<8x64xbf16>
    %12 = vector.extract_strided_slice %8 {offsets = [0, 0], sizes = [8, 64], strides = [1, 1]} : vector<16x128xf32> to vector<8x64xf32>
    %13 = arith.truncf %12 : vector<8x64xf32> to vector<8x64xbf16>
    %14 = vector.extract_strided_slice %9 {offsets = [0, 0], sizes = [8, 64], strides = [1, 1]} : vector<16x128xf32> to vector<8x64xf32>
    %15 = arith.truncf %14 : vector<8x64xf32> to vector<8x64xbf16>
    %cst_5 = arith.constant dense<0.000000e+00> : vector<8x8xf32>
    %16 = tpu.matmul %11, %13, %cst_5 {dimension_numbers = #tpu.dot_dimension_numbers<[1], [1], [0], [0], [0, 0, 1, 0], [], []>} : vector<8x64xbf16>, vector<8x64xbf16>, vector<8x8xf32> -> vector<8x8xf32>
    %cst_6 = arith.constant 1.250000e-01 : f32
    %17 = vector.broadcast %cst_6 : f32 to vector<8x8xf32>
    %18 = arith.mulf %16, %17 : vector<8x8xf32>
    %cst_7 = arith.constant dense<0xFF800000> : vector<8xf32>
    %19 = vector.multi_reduction <maximumf>, %18, %cst_7 [1] : vector<8x8xf32> to vector<8xf32>
    %20 = vector.shape_cast %19 : vector<8xf32> to vector<8x1xf32>
    %21 = vector.broadcast %20 : vector<8x1xf32> to vector<8x8xf32>
    %22 = arith.subf %18, %21 : vector<8x8xf32>
    %23 = math.exp %22 : vector<8x8xf32>
    %cst_8 = arith.constant dense<0.000000e+00> : vector<8xf32>
    %24 = vector.multi_reduction <add>, %23, %cst_8 [1] : vector<8x8xf32> to vector<8xf32>
    %25 = vector.shape_cast %24 : vector<8xf32> to vector<8x1xf32>
    %26 = tpu.reciprocal %25 {approx = true} : vector<8x1xf32> -> vector<8x1xf32>
    %27 = vector.broadcast %26 : vector<8x1xf32> to vector<8x8xf32>
    %28 = arith.mulf %23, %27 : vector<8x8xf32>
    %29 = arith.truncf %28 : vector<8x8xf32> to vector<8x8xbf16>
    %cst_9 = arith.constant dense<0.000000e+00> : vector<8x64xf32>
    %30 = tpu.matmul %29, %15, %cst_9 {dimension_numbers = #tpu.dot_dimension_numbers<[1], [0], [0], [1], [0, 0, 1, 1], [], []>} : vector<8x8xbf16>, vector<8x64xbf16>, vector<8x64xf32> -> vector<8x64xf32>
    %31 = vector.extract_strided_slice %7 {offsets = [0, 64], sizes = [8, 64], strides = [1, 1]} : vector<16x128xf32> to vector<8x64xf32>
    %32 = arith.truncf %31 : vector<8x64xf32> to vector<8x64xbf16>
    %33 = vector.extract_strided_slice %8 {offsets = [0, 64], sizes = [8, 64], strides = [1, 1]} : vector<16x128xf32> to vector<8x64xf32>
    %34 = arith.truncf %33 : vector<8x64xf32> to vector<8x64xbf16>
    %35 = vector.extract_strided_slice %9 {offsets = [0, 64], sizes = [8, 64], strides = [1, 1]} : vector<16x128xf32> to vector<8x64xf32>
    %36 = arith.truncf %35 : vector<8x64xf32> to vector<8x64xbf16>
    %cst_10 = arith.constant dense<0.000000e+00> : vector<8x8xf32>
    %37 = tpu.matmul %32, %34, %cst_10 {dimension_numbers = #tpu.dot_dimension_numbers<[1], [1], [0], [0], [0, 0, 1, 0], [], []>} : vector<8x64xbf16>, vector<8x64xbf16>, vector<8x8xf32> -> vector<8x8xf32>
    %cst_11 = arith.constant 1.250000e-01 : f32
    %38 = vector.broadcast %cst_11 : f32 to vector<8x8xf32>
    %39 = arith.mulf %37, %38 : vector<8x8xf32>
    %cst_12 = arith.constant dense<0xFF800000> : vector<8xf32>
    %40 = vector.multi_reduction <maximumf>, %39, %cst_12 [1] : vector<8x8xf32> to vector<8xf32>
    %41 = vector.shape_cast %40 : vector<8xf32> to vector<8x1xf32>
    %42 = vector.broadcast %41 : vector<8x1xf32> to vector<8x8xf32>
    %43 = arith.subf %39, %42 : vector<8x8xf32>
    %44 = math.exp %43 : vector<8x8xf32>
    %cst_13 = arith.constant dense<0.000000e+00> : vector<8xf32>
    %45 = vector.multi_reduction <add>, %44, %cst_13 [1] : vector<8x8xf32> to vector<8xf32>
    %46 = vector.shape_cast %45 : vector<8xf32> to vector<8x1xf32>
    %47 = tpu.reciprocal %46 {approx = true} : vector<8x1xf32> -> vector<8x1xf32>
    %48 = vector.broadcast %47 : vector<8x1xf32> to vector<8x8xf32>
    %49 = arith.mulf %44, %48 : vector<8x8xf32>
    %50 = arith.truncf %49 : vector<8x8xf32> to vector<8x8xbf16>
    %cst_14 = arith.constant dense<0.000000e+00> : vector<8x64xf32>
    %51 = tpu.matmul %50, %36, %cst_14 {dimension_numbers = #tpu.dot_dimension_numbers<[1], [0], [0], [1], [0, 0, 1, 1], [], []>} : vector<8x8xbf16>, vector<8x64xbf16>, vector<8x64xf32> -> vector<8x64xf32>
    %52 = tpu.concatenate %30, %51 in 1 : vector<8x64xf32>, vector<8x64xf32> -> vector<8x128xf32>
    %53 = vector.extract_strided_slice %7 {offsets = [8, 0], sizes = [8, 64], strides = [1, 1]} : vector<16x128xf32> to vector<8x64xf32>
    %54 = arith.truncf %53 : vector<8x64xf32> to vector<8x64xbf16>
    %55 = vector.extract_strided_slice %8 {offsets = [8, 0], sizes = [8, 64], strides = [1, 1]} : vector<16x128xf32> to vector<8x64xf32>
    %56 = arith.truncf %55 : vector<8x64xf32> to vector<8x64xbf16>
    %57 = vector.extract_strided_slice %9 {offsets = [8, 0], sizes = [8, 64], strides = [1, 1]} : vector<16x128xf32> to vector<8x64xf32>
    %58 = arith.truncf %57 : vector<8x64xf32> to vector<8x64xbf16>
    %cst_15 = arith.constant dense<0.000000e+00> : vector<8x8xf32>
    %59 = tpu.matmul %54, %56, %cst_15 {dimension_numbers = #tpu.dot_dimension_numbers<[1], [1], [0], [0], [0, 0, 1, 0], [], []>} : vector<8x64xbf16>, vector<8x64xbf16>, vector<8x8xf32> -> vector<8x8xf32>
    %cst_16 = arith.constant 1.250000e-01 : f32
    %60 = vector.broadcast %cst_16 : f32 to vector<8x8xf32>
    %61 = arith.mulf %59, %60 : vector<8x8xf32>
    %cst_17 = arith.constant dense<0xFF800000> : vector<8xf32>
    %62 = vector.multi_reduction <maximumf>, %61, %cst_17 [1] : vector<8x8xf32> to vector<8xf32>
    %63 = vector.shape_cast %62 : vector<8xf32> to vector<8x1xf32>
    %64 = vector.broadcast %63 : vector<8x1xf32> to vector<8x8xf32>
    %65 = arith.subf %61, %64 : vector<8x8xf32>
    %66 = math.exp %65 : vector<8x8xf32>
    %cst_18 = arith.constant dense<0.000000e+00> : vector<8xf32>
    %67 = vector.multi_reduction <add>, %66, %cst_18 [1] : vector<8x8xf32> to vector<8xf32>
    %68 = vector.shape_cast %67 : vector<8xf32> to vector<8x1xf32>
    %69 = tpu.reciprocal %68 {approx = true} : vector<8x1xf32> -> vector<8x1xf32>
    %70 = vector.broadcast %69 : vector<8x1xf32> to vector<8x8xf32>
    %71 = arith.mulf %66, %70 : vector<8x8xf32>
    %72 = arith.truncf %71 : vector<8x8xf32> to vector<8x8xbf16>
    %cst_19 = arith.constant dense<0.000000e+00> : vector<8x64xf32>
    %73 = tpu.matmul %72, %58, %cst_19 {dimension_numbers = #tpu.dot_dimension_numbers<[1], [0], [0], [1], [0, 0, 1, 1], [], []>} : vector<8x8xbf16>, vector<8x64xbf16>, vector<8x64xf32> -> vector<8x64xf32>
    %74 = vector.extract_strided_slice %7 {offsets = [8, 64], sizes = [8, 64], strides = [1, 1]} : vector<16x128xf32> to vector<8x64xf32>
    %75 = arith.truncf %74 : vector<8x64xf32> to vector<8x64xbf16>
    %76 = vector.extract_strided_slice %8 {offsets = [8, 64], sizes = [8, 64], strides = [1, 1]} : vector<16x128xf32> to vector<8x64xf32>
    %77 = arith.truncf %76 : vector<8x64xf32> to vector<8x64xbf16>
    %78 = vector.extract_strided_slice %9 {offsets = [8, 64], sizes = [8, 64], strides = [1, 1]} : vector<16x128xf32> to vector<8x64xf32>
    %79 = arith.truncf %78 : vector<8x64xf32> to vector<8x64xbf16>
    %cst_20 = arith.constant dense<0.000000e+00> : vector<8x8xf32>
    %80 = tpu.matmul %75, %77, %cst_20 {dimension_numbers = #tpu.dot_dimension_numbers<[1], [1], [0], [0], [0, 0, 1, 0], [], []>} : vector<8x64xbf16>, vector<8x64xbf16>, vector<8x8xf32> -> vector<8x8xf32>
    %cst_21 = arith.constant 1.250000e-01 : f32
    %81 = vector.broadcast %cst_21 : f32 to vector<8x8xf32>
    %82 = arith.mulf %80, %81 : vector<8x8xf32>
    %cst_22 = arith.constant dense<0xFF800000> : vector<8xf32>
    %83 = vector.multi_reduction <maximumf>, %82, %cst_22 [1] : vector<8x8xf32> to vector<8xf32>
    %84 = vector.shape_cast %83 : vector<8xf32> to vector<8x1xf32>
    %85 = vector.broadcast %84 : vector<8x1xf32> to vector<8x8xf32>
    %86 = arith.subf %82, %85 : vector<8x8xf32>
    %87 = math.exp %86 : vector<8x8xf32>
    %cst_23 = arith.constant dense<0.000000e+00> : vector<8xf32>
    %88 = vector.multi_reduction <add>, %87, %cst_23 [1] : vector<8x8xf32> to vector<8xf32>
    %89 = vector.shape_cast %88 : vector<8xf32> to vector<8x1xf32>
    %90 = tpu.reciprocal %89 {approx = true} : vector<8x1xf32> -> vector<8x1xf32>
    %91 = vector.broadcast %90 : vector<8x1xf32> to vector<8x8xf32>
    %92 = arith.mulf %87, %91 : vector<8x8xf32>
    %93 = arith.truncf %92 : vector<8x8xf32> to vector<8x8xbf16>
    %cst_24 = arith.constant dense<0.000000e+00> : vector<8x64xf32>
    %94 = tpu.matmul %93, %79, %cst_24 {dimension_numbers = #tpu.dot_dimension_numbers<[1], [0], [0], [1], [0, 0, 1, 1], [], []>} : vector<8x8xbf16>, vector<8x64xbf16>, vector<8x64xf32> -> vector<8x64xf32>
    %95 = tpu.concatenate %73, %94 in 1 : vector<8x64xf32>, vector<8x64xf32> -> vector<8x128xf32>
    %96 = tpu.concatenate %52, %95 in 0 : vector<8x128xf32>, vector<8x128xf32> -> vector<16x128xf32>
    %97 = arith.truncf %96 : vector<16x128xf32> to vector<16x128xbf16>
    %c0_25 = arith.constant 0 : index
    %c0_26 = arith.constant 0 : index
    %98 = vector.load %arg3[%c0_25, %c0_26] : memref<128x128xbf16, #tpu.memory_space<vmem>>, vector<128x128xbf16>
    %cst_27 = arith.constant dense<0.000000e+00> : vector<16x128xf32>
    %99 = tpu.matmul %97, %98, %cst_27 {dimension_numbers = #tpu.dot_dimension_numbers<[1], [0], [0], [1], [0, 0, 1, 1], [], []>} : vector<16x128xbf16>, vector<128x128xbf16>, vector<16x128xf32> -> vector<16x128xf32>
    %c0_28 = arith.constant 0 : index
    %c0_29 = arith.constant 0 : index
    %100 = vector.load %arg4[%c0_28, %c0_29] : memref<1x128xf32, #tpu.memory_space<vmem>>, vector<1x128xf32>
    %101 = vector.broadcast %100 : vector<1x128xf32> to vector<16x128xf32>
    %102 = arith.addf %99, %101 : vector<16x128xf32>
    %103 = arith.addf %0, %102 : vector<16x128xf32>
    %c0_30 = arith.constant 0 : index
    %c0_31 = arith.constant 0 : index
    %104 = vector.load %arg5[%c0_30, %c0_31] : memref<1x128xf32, #tpu.memory_space<vmem>>, vector<1x128xf32>
    %c0_32 = arith.constant 0 : index
    %c0_33 = arith.constant 0 : index
    %105 = vector.load %arg6[%c0_32, %c0_33] : memref<1x128xf32, #tpu.memory_space<vmem>>, vector<1x128xf32>
    %cst_34 = arith.constant dense<0.000000e+00> : vector<16xf32>
    %106 = vector.multi_reduction <add>, %103, %cst_34 [1] : vector<16x128xf32> to vector<16xf32>
    %107 = vector.shape_cast %106 : vector<16xf32> to vector<16x1xf32>
    %cst_35 = arith.constant 1.280000e+02 : f32
    %108 = vector.broadcast %cst_35 : f32 to vector<16x1xf32>
    %109 = arith.divf %107, %108 : vector<16x1xf32>
    %110 = vector.broadcast %109 : vector<16x1xf32> to vector<16x128xf32>
    %111 = arith.subf %103, %110 : vector<16x128xf32>
    %112 = arith.mulf %111, %111 : vector<16x128xf32>
    %cst_36 = arith.constant dense<0.000000e+00> : vector<16xf32>
    %113 = vector.multi_reduction <add>, %112, %cst_36 [1] : vector<16x128xf32> to vector<16xf32>
    %114 = vector.shape_cast %113 : vector<16xf32> to vector<16x1xf32>
    %cst_37 = arith.constant 1.280000e+02 : f32
    %115 = vector.broadcast %cst_37 : f32 to vector<16x1xf32>
    %116 = arith.divf %114, %115 : vector<16x1xf32>
    %117 = vector.broadcast %109 : vector<16x1xf32> to vector<16x128xf32>
    %118 = arith.subf %103, %117 : vector<16x128xf32>
    %cst_38 = arith.constant 9.99999996E-13 : f32
    %119 = vector.broadcast %cst_38 : f32 to vector<16x1xf32>
    %120 = arith.addf %116, %119 : vector<16x1xf32>
    %121 = math.rsqrt %120 : vector<16x1xf32>
    %122 = vector.broadcast %121 : vector<16x1xf32> to vector<16x128xf32>
    %123 = arith.mulf %118, %122 : vector<16x128xf32>
    %124 = vector.broadcast %104 : vector<1x128xf32> to vector<16x128xf32>
    %125 = arith.mulf %123, %124 : vector<16x128xf32>
    %126 = vector.broadcast %105 : vector<1x128xf32> to vector<16x128xf32>
    %127 = arith.addf %125, %126 : vector<16x128xf32>
    %128 = arith.truncf %127 : vector<16x128xf32> to vector<16x128xbf16>
    %c0_39 = arith.constant 0 : index
    %c0_40 = arith.constant 0 : index
    %129 = vector.load %arg7[%c0_39, %c0_40] : memref<128x256xbf16, #tpu.memory_space<vmem>>, vector<128x256xbf16>
    %cst_41 = arith.constant dense<0.000000e+00> : vector<16x256xf32>
    %130 = tpu.matmul %128, %129, %cst_41 {dimension_numbers = #tpu.dot_dimension_numbers<[1], [0], [0], [1], [0, 0, 1, 1], [], []>} : vector<16x128xbf16>, vector<128x256xbf16>, vector<16x256xf32> -> vector<16x256xf32>
    %c0_42 = arith.constant 0 : index
    %c0_43 = arith.constant 0 : index
    %131 = vector.load %arg8[%c0_42, %c0_43] : memref<1x256xf32, #tpu.memory_space<vmem>>, vector<1x256xf32>
    %132 = vector.broadcast %131 : vector<1x256xf32> to vector<16x256xf32>
    %133 = arith.addf %130, %132 : vector<16x256xf32>
    %cst_44 = arith.constant 5.000000e-01 : f32
    %134 = vector.broadcast %cst_44 : f32 to vector<16x256xf32>
    %135 = arith.mulf %134, %133 : vector<16x256xf32>
    %cst_45 = arith.constant 4.471500e-02 : f32
    %136 = vector.broadcast %cst_45 : f32 to vector<16x256xf32>
    %137 = arith.mulf %136, %133 : vector<16x256xf32>
    %138 = arith.mulf %137, %133 : vector<16x256xf32>
    %139 = arith.mulf %138, %133 : vector<16x256xf32>
    %140 = arith.addf %133, %139 : vector<16x256xf32>
    %cst_46 = arith.constant 0.797884583 : f32
    %141 = vector.broadcast %cst_46 : f32 to vector<16x256xf32>
    %142 = arith.mulf %141, %140 : vector<16x256xf32>
    %143 = math.tanh %142 : vector<16x256xf32>
    %cst_47 = arith.constant 1.000000e+00 : f32
    %144 = vector.broadcast %cst_47 : f32 to vector<16x256xf32>
    %145 = arith.addf %144, %143 : vector<16x256xf32>
    %146 = arith.mulf %135, %145 : vector<16x256xf32>
    %147 = arith.truncf %146 : vector<16x256xf32> to vector<16x256xbf16>
    %c0_48 = arith.constant 0 : index
    %c0_49 = arith.constant 0 : index
    %148 = vector.load %arg9[%c0_48, %c0_49] : memref<256x128xbf16, #tpu.memory_space<vmem>>, vector<256x128xbf16>
    %cst_50 = arith.constant dense<0.000000e+00> : vector<16x128xf32>
    %149 = tpu.matmul %147, %148, %cst_50 {dimension_numbers = #tpu.dot_dimension_numbers<[1], [0], [0], [1], [0, 0, 1, 1], [], []>} : vector<16x256xbf16>, vector<256x128xbf16>, vector<16x128xf32> -> vector<16x128xf32>
    %c0_51 = arith.constant 0 : index
    %c0_52 = arith.constant 0 : index
    %150 = vector.load %arg10[%c0_51, %c0_52] : memref<1x128xf32, #tpu.memory_space<vmem>>, vector<1x128xf32>
    %151 = vector.broadcast %150 : vector<1x128xf32> to vector<16x128xf32>
    %152 = arith.addf %149, %151 : vector<16x128xf32>
    %153 = arith.addf %127, %152 : vector<16x128xf32>
    %c0_53 = arith.constant 0 : index
    %c0_54 = arith.constant 0 : index
    %154 = vector.load %arg11[%c0_53, %c0_54] : memref<1x128xf32, #tpu.memory_space<vmem>>, vector<1x128xf32>
    %c0_55 = arith.constant 0 : index
    %c0_56 = arith.constant 0 : index
    %155 = vector.load %arg12[%c0_55, %c0_56] : memref<1x128xf32, #tpu.memory_space<vmem>>, vector<1x128xf32>
    %cst_57 = arith.constant dense<0.000000e+00> : vector<16xf32>
    %156 = vector.multi_reduction <add>, %153, %cst_57 [1] : vector<16x128xf32> to vector<16xf32>
    %157 = vector.shape_cast %156 : vector<16xf32> to vector<16x1xf32>
    %cst_58 = arith.constant 1.280000e+02 : f32
    %158 = vector.broadcast %cst_58 : f32 to vector<16x1xf32>
    %159 = arith.divf %157, %158 : vector<16x1xf32>
    %160 = vector.broadcast %159 : vector<16x1xf32> to vector<16x128xf32>
    %161 = arith.subf %153, %160 : vector<16x128xf32>
    %162 = arith.mulf %161, %161 : vector<16x128xf32>
    %cst_59 = arith.constant dense<0.000000e+00> : vector<16xf32>
    %163 = vector.multi_reduction <add>, %162, %cst_59 [1] : vector<16x128xf32> to vector<16xf32>
    %164 = vector.shape_cast %163 : vector<16xf32> to vector<16x1xf32>
    %cst_60 = arith.constant 1.280000e+02 : f32
    %165 = vector.broadcast %cst_60 : f32 to vector<16x1xf32>
    %166 = arith.divf %164, %165 : vector<16x1xf32>
    %167 = vector.broadcast %159 : vector<16x1xf32> to vector<16x128xf32>
    %168 = arith.subf %153, %167 : vector<16x128xf32>
    %cst_61 = arith.constant 9.99999996E-13 : f32
    %169 = vector.broadcast %cst_61 : f32 to vector<16x1xf32>
    %170 = arith.addf %166, %169 : vector<16x1xf32>
    %171 = math.rsqrt %170 : vector<16x1xf32>
    %172 = vector.broadcast %171 : vector<16x1xf32> to vector<16x128xf32>
    %173 = arith.mulf %168, %172 : vector<16x128xf32>
    %174 = vector.broadcast %154 : vector<1x128xf32> to vector<16x128xf32>
    %175 = arith.mulf %173, %174 : vector<16x128xf32>
    %176 = vector.broadcast %155 : vector<1x128xf32> to vector<16x128xf32>
    %177 = arith.addf %175, %176 : vector<16x128xf32>
    %c0_62 = arith.constant 0 : index
    %c0_63 = arith.constant 0 : index
    %178 = vector.load %arg13[%c0_62, %c0_63] : memref<16x128xf32, #tpu.memory_space<vmem>>, vector<16x128xf32>
    tpu.vector_store %arg13[%c0_62, %c0_63], %177 {strides = array<i32>} : memref<16x128xf32, #tpu.memory_space<vmem>>, vector<16x128xf32>,
    return
  }
}

module attributes {stable_mosaic.version = 11 : i64} {
  func.func @kernel(%arg0: memref<16x128xf32, #tpu.memory_space<vmem>>, %arg1: memref<128x384xbf16, #tpu.memory_space<vmem>>, %arg2: memref<1x384xf32, #tpu.memory_space<vmem>>, %arg3: memref<128x128xbf16, #tpu.memory_space<vmem>>, %arg4: memref<1x128xf32, #tpu.memory_space<vmem>>, %arg5: memref<1x128xf32, #tpu.memory_space<vmem>>, %arg6: memref<1x128xf32, #tpu.memory_space<vmem>>, %arg7: memref<128x256xbf16, #tpu.memory_space<vmem>>, %arg8: memref<1x256xf32, #tpu.memory_space<vmem>>, %arg9: memref<256x128xbf16, #tpu.memory_space<vmem>>, %arg10: memref<1x128xf32, #tpu.memory_space<vmem>>, %arg11: memref<1x128xf32, #tpu.memory_space<vmem>>, %arg12: memref<1x128xf32, #tpu.memory_space<vmem>>, %arg13: memref<16x128xf32, #tpu.memory_space<vmem>>) attributes {dimension_semantics = [], scalar_prefetch = 0 : i64, scratch_operands = 0 : i64, tpu.core_type = #tpu.core_type<tc>} {
    %c0 = arith.constant 0 : index
    %c0_0 = arith.constant 0 : index
    %0 = vector.load %arg0[%c0, %c0_0] : memref<16x128xf32, #tpu.memory_space<vmem>>, vector<16x128xf32>
    %1 = arith.truncf %0 : vector<16x128xf32> to vector<16x128xbf16>
    %c0_1 = arith.constant 0 : index
    %c0_2 = arith.constant 0 : index
    %2 = vector.load %arg1[%c0_1, %c0_2] : memref<128x384xbf16, #tpu.memory_space<vmem>>, vector<128x384xbf16>
    %cst = arith.constant dense<0.000000e+00> : vector<16x384xf32>
    %3 = tpu.matmul %1, %2, %cst {dimension_numbers = #tpu.dot_dimension_numbers<[1], [0], [0], [1], [0, 0, 1, 1], [], []>} : vector<16x128xbf16>, vector<128x384xbf16>, vector<16x384xf32> -> vector<16x384xf32>
    %c0_3 = arith.constant 0 : index
    %c0_4 = arith.constant 0 : index
    %4 = vector.load %arg2[%c0_3, %c0_4] : memref<1x384xf32, #tpu.memory_space<vmem>>, vector<1x384xf32>
    %5 = vector.broadcast %4 : vector<1x384xf32> to vector<16x384xf32>
    %6 = arith.addf %3, %5 : vector<16x384xf32>
    %7 = vector.extract_strided_slice %6 {offsets = [0, 0], sizes = [16, 128], strides = [1, 1]} : vector<16x384xf32> to vector<16x128xf32>
    %8 = vector.extract_strided_slice %6 {offsets = [0, 128], sizes = [16, 128], strides = [1, 1]} : vector<16x384xf32> to vector<16x128xf32>
    %9 = vector.extract_strided_slice %6 {offsets = [0, 256], sizes = [16, 128], strides = [1, 1]} : vector<16x384xf32> to vector<16x128xf32>
    %10 = vector.extract_strided_slice %7 {offsets = [0, 0], sizes = [8, 64], strides = [1, 1]} : vector<16x128xf32> to vector<8x64xf32>
    %11 = arith.truncf %10 : vector<8x64xf32> to vector<8x64xbf16>
    %12 = vector.extract_strided_slice %8 {offsets = [0, 0], sizes = [8, 64], strides = [1, 1]} : vector<16x128xf32> to vector<8x64xf32>
    %13 = arith.truncf %12 : vector<8x64xf32> to vector<8x64xbf16>
    %14 = vector.extract_strided_slice %9 {offsets = [0, 0], sizes = [8, 64], strides = [1, 1]} : vector<16x128xf32> to vector<8x64xf32>
    %15 = arith.truncf %14 : vector<8x64xf32> to vector<8x64xbf16>
    %cst_5 = arith.constant dense<0.000000e+00> : vector<8x8xf32>
    %16 = tpu.matmul %11, %13, %cst_5 {dimension_numbers = #tpu.dot_dimension_numbers<[1], [1], [0], [0], [0, 0, 1, 0], [], []>} : vector<8x64xbf16>, vector<8x64xbf16>, vector<8x8xf32> -> vector<8x8xf32>
    %cst_6 = arith.constant 1.250000e-01 : f32
    %17 = vector.broadcast %cst_6 : f32 to vector<8x8xf32>
    %18 = arith.mulf %16, %17 : vector<8x8xf32>
    %cst_7 = arith.constant dense<0xFF800000> : vector<8xf32>
    %19 = vector.multi_reduction <maximumf>, %18, %cst_7 [1] : vector<8x8xf32> to vector<8xf32>
    %20 = vector.shape_cast %19 : vector<8xf32> to vector<8x1xf32>
    %21 = vector.broadcast %20 : vector<8x1xf32> to vector<8x8xf32>
    %22 = arith.subf %18, %21 : vector<8x8xf32>
    %23 = math.exp %22 : vector<8x8xf32>
    %cst_8 = arith.constant dense<0.000000e+00> : vector<8xf32>
    %24 = vector.multi_reduction <add>, %23, %cst_8 [1] : vector<8x8xf32> to vector<8xf32>
    %25 = vector.shape_cast %24 : vector<8xf32> to vector<8x1xf32>
    %26 = tpu.reciprocal %25 {approx = true} : vector<8x1xf32> -> vector<8x1xf32>
    %27 = vector.broadcast %26 : vector<8x1xf32> to vector<8x8xf32>
    %28 = arith.mulf %23, %27 : vector<8x8xf32>
    %29 = arith.truncf %28 : vector<8x8xf32> to vector<8x8xbf16>
    %cst_9 = arith.constant dense<0.000000e+00> : vector<8x64xf32>
    %30 = tpu.matmul %29, %15, %cst_9 {dimension_numbers = #tpu.dot_dimension_numbers<[1], [0], [0], [1], [0, 0, 1, 1], [], []>} : vector<8x8xbf16>, vector<8x64xbf16>, vector<8x64xf32> -> vector<8x64xf32>
    %31 = vector.extract_strided_slice %7 {offsets = [0, 64], sizes = [8, 64], strides = [1, 1]} : vector<16x128xf32> to vector<8x64xf32>
    %32 = arith.truncf %31 : vector<8x64xf32> to vector<8x64xbf16>
    %33 = vector.extract_strided_slice %8 {offsets = [0, 64], sizes = [8, 64], strides = [1, 1]} : vector<16x128xf32> to vector<8x64xf32>
    %34 = arith.truncf %33 : vector<8x64xf32> to vector<8x64xbf16>
    %35 = vector.extract_strided_slice %9 {offsets = [0, 64], sizes = [8, 64], strides = [1, 1]} : vector<16x128xf32> to vector<8x64xf32>
    %36 = arith.truncf %35 : vector<8x64xf32> to vector<8x64xbf16>
    %cst_10 = arith.constant dense<0.000000e+00> : vector<8x8xf32>
    %37 = tpu.matmul %32, %34, %cst_10 {dimension_numbers = #tpu.dot_dimension_numbers<[1], [1], [0], [0], [0, 0, 1, 0], [], []>} : vector<8x64xbf16>, vector<8x64xbf16>, vector<8x8xf32> -> vector<8x8xf32>
    %cst_11 = arith.constant 1.250000e-01 : f32
    %38 = vector.broadcast %cst_11 : f32 to vector<8x8xf32>
    %39 = arith.mulf %37, %38 : vector<8x8xf32>
    %cst_12 = arith.constant dense<0xFF800000> : vector<8xf32>
    %40 = vector.multi_reduction <maximumf>, %39, %cst_12 [1] : vector<8x8xf32> to vector<8xf32>
    %41 = vector.shape_cast %40 : vector<8xf32> to vector<8x1xf32>
    %42 = vector.broadcast %41 : vector<8x1xf32> to vector<8x8xf32>
    %43 = arith.subf %39, %42 : vector<8x8xf32>
    %44 = math.exp %43 : vector<8x8xf32>
    %cst_13 = arith.constant dense<0.000000e+00> : vector<8xf32>
    %45 = vector.multi_reduction <add>, %44, %cst_13 [1] : vector<8x8xf32> to vector<8xf32>
    %46 = vector.shape_cast %45 : vector<8xf32> to vector<8x1xf32>
    %47 = tpu.reciprocal %46 {approx = true} : vector<8x1xf32> -> vector<8x1xf32>
    %48 = vector.broadcast %47 : vector<8x1xf32> to vector<8x8xf32>
    %49 = arith.mulf %44, %48 : vector<8x8xf32>
    %50 = arith.truncf %49 : vector<8x8xf32> to vector<8x8xbf16>
    %cst_14 = arith.constant dense<0.000000e+00> : vector<8x64xf32>
    %51 = tpu.matmul %50, %36, %cst_14 {dimension_numbers = #tpu.dot_dimension_numbers<[1], [0], [0], [1], [0, 0, 1, 1], [], []>} : vector<8x8xbf16>, vector<8x64xbf16>, vector<8x64xf32> -> vector<8x64xf32>
    %52 = tpu.concatenate %30, %51 in 1 : vector<8x64xf32>, vector<8x64xf32> -> vector<8x128xf32>
    %53 = vector.extract_strided_slice %7 {offsets = [8, 0], sizes = [8, 64], strides = [1, 1]} : vector<16x128xf32> to vector<8x64xf32>
    %54 = arith.truncf %53 : vector<8x64xf32> to vector<8x64xbf16>
    %55 = vector.extract_strided_slice %8 {offsets = [8, 0], sizes = [8, 64], strides = [1, 1]} : vector<16x128xf32> to vector<8x64xf32>
    %56 = arith.truncf %55 : vector<8x64xf32> to vector<8x64xbf16>
    %57 = vector.extract_strided_slice %9 {offsets = [8, 0], sizes = [8, 64], strides = [1, 1]} : vector<16x128xf32> to vector<8x64xf32>
    %58 = arith.truncf %57 : vector<8x64xf32> to vector<8x64xbf16>
    %cst_15 = arith.constant dense<0.000000e+00> : vector<8x8xf32>
    %59 = tpu.matmul %54, %56, %cst_15 {dimension_numbers = #tpu.dot_dimension_numbers<[1], [1], [0], [0], [0, 0, 1, 0], [], []>} : vector<8x64xbf16>, vector<8x64xbf16>, vector<8x8xf32> -> vector<8x8xf32>
    %cst_16 = arith.constant 1.250000e-01 : f32
    %60 = vector.broadcast %cst_16 : f32 to vector<8x8xf32>
    %61 = arith.mulf %59, %60 : vector<8x8xf32>
    %cst_17 = arith.constant dense<0xFF800000> : vector<8xf32>
    %62 = vector.multi_reduction <maximumf>, %61, %cst_17 [1] : vector<8x8xf32> to vector<8xf32>
    %63 = vector.shape_cast %62 : vector<8xf32> to vector<8x1xf32>
    %64 = vector.broadcast %63 : vector<8x1xf32> to vector<8x8xf32>
    %65 = arith.subf %61, %64 : vector<8x8xf32>
    %66 = math.exp %65 : vector<8x8xf32>
    %cst_18 = arith.constant dense<0.000000e+00> : vector<8xf32>
    %67 = vector.multi_reduction <add>, %66, %cst_18 [1] : vector<8x8xf32> to vector<8xf32>
    %68 = vector.shape_cast %67 : vector<8xf32> to vector<8x1xf32>
    %69 = tpu.reciprocal %68 {approx = true} : vector<8x1xf32> -> vector<8x1xf32>
    %70 = vector.broadcast %69 : vector<8x1xf32> to vector<8x8xf32>
    %71 = arith.mulf %66, %70 : vector<8x8xf32>
    %72 = arith.truncf %71 : vector<8x8xf32> to vector<8x8xbf16>
    %cst_19 = arith.constant dense<0.000000e+00> : vector<8x64xf32>
    %73 = tpu.matmul %72, %58, %cst_19 {dimension_numbers = #tpu.dot_dimension_numbers<[1], [0], [0], [1], [0, 0, 1, 1], [], []>} : vector<8x8xbf16>, vector<8x64xbf16>, vector<8x64xf32> -> vector<8x64xf32>
    %74 = vector.extract_strided_slice %7 {offsets = [8, 64], sizes = [8, 64], strides = [1, 1]} : vector<16x128xf32> to vector<8x64xf32>
    %75 = arith.truncf %74 : vector<8x64xf32> to vector<8x64xbf16>
    %76 = vector.extract_strided_slice %8 {offsets = [8, 64], sizes = [8, 64], strides = [1, 1]} : vector<16x128xf32> to vector<8x64xf32>
    %77 = arith.truncf %76 : vector<8x64xf32> to vector<8x64xbf16>
    %78 = vector.extract_strided_slice %9 {offsets = [8, 64], sizes = [8, 64], strides = [1, 1]} : vector<16x128xf32> to vector<8x64xf32>
    %79 = arith.truncf %78 : vector<8x64xf32> to vector<8x64xbf16>
    %cst_20 = arith.constant dense<0.000000e+00> : vector<8x8xf32>
    %80 = tpu.matmul %75, %77, %cst_20 {dimension_numbers = #tpu.dot_dimension_numbers<[1], [1], [0], [0], [0, 0, 1, 0], [], []>} : vector<8x64xbf16>, vector<8x64xbf16>, vector<8x8xf32> -> vector<8x8xf32>
    %cst_21 = arith.constant 1.250000e-01 : f32
    %81 = vector.broadcast %cst_21 : f32 to vector<8x8xf32>
    %82 = arith.mulf %80, %81 : vector<8x8xf32>
    %cst_22 = arith.constant dense<0xFF800000> : vector<8xf32>
    %83 = vector.multi_reduction <maximumf>, %82, %cst_22 [1] : vector<8x8xf32> to vector<8xf32>
    %84 = vector.shape_cast %83 : vector<8xf32> to vector<8x1xf32>
    %85 = vector.broadcast %84 : vector<8x1xf32> to vector<8x8xf32>
    %86 = arith.subf %82, %85 : vector<8x8xf32>
    %87 = math.exp %86 : vector<8x8xf32>
    %cst_23 = arith.constant dense<0.000000e+00> : vector<8xf32>
    %88 = vector.multi_reduction <add>, %87, %cst_23 [1] : vector<8x8xf32> to vector<8xf32>
    %89 = vector.shape_cast %88 : vector<8xf32> to vector<8x1xf32>
    %90 = tpu.reciprocal %89 {approx = true} : vector<8x1xf32> -> vector<8x1xf32>
    %91 = vector.broadcast %90 : vector<8x1xf32> to vector<8x8xf32>
    %92 = arith.mulf %87, %91 : vector<8x8xf32>
    %93 = arith.truncf %92 : vector<8x8xf32> to vector<8x8xbf16>
    %cst_24 = arith.constant dense<0.000000e+00> : vector<8x64xf32>
    %94 = tpu.matmul %93, %79, %cst_24 {dimension_numbers = #tpu.dot_dimension_numbers<[1], [0], [0], [1], [0, 0, 1, 1], [], []>} : vector<8x8xbf16>, vector<8x64xbf16>, vector<8x64xf32> -> vector<8x64xf32>
    %95 = tpu.concatenate %73, %94 in 1 : vector<8x64xf32>, vector<8x64xf32> -> vector<8x128xf32>
    %96 = tpu.concatenate %52, %95 in 0 : vector<8x128xf32>, vector<8x128xf32> -> vector<16x128xf32>
    %97 = arith.truncf %96 : vector<16x128xf32> to vector<16x128xbf16>
    %c0_25 = arith.constant 0 : index
    %c0_26 = arith.constant 0 : index
    %98 = vector.load %arg3[%c0_25, %c0_26] : memref<128x128xbf16, #tpu.memory_space<vmem>>, vector<128x128xbf16>
    %cst_27 = arith.constant dense<0.000000e+00> : vector<16x128xf32>
    %99 = tpu.matmul %97, %98, %cst_27 {dimension_numbers = #tpu.dot_dimension_numbers<[1], [0], [0], [1], [0, 0, 1, 1], [], []>} : vector<16x128xbf16>, vector<128x128xbf16>, vector<16x128xf32> -> vector<16x128xf32>
    %c0_28 = arith.constant 0 : index
    %c0_29 = arith.constant 0 : index
    %100 = vector.load %arg4[%c0_28, %c0_29] : memref<1x128xf32, #tpu.memory_space<vmem>>, vector<1x128xf32>
    %101 = vector.broadcast %100 : vector<1x128xf32> to vector<16x128xf32>
    %102 = arith.addf %99, %101 : vector<16x128xf32>
    %103 = arith.addf %0, %102 : vector<16x128xf32>
    %c0_30 = arith.constant 0 : index
    %c0_31 = arith.constant 0 : index
    %104 = vector.load %arg5[%c0_30, %c0_31] : memref<1x128xf32, #tpu.memory_space<vmem>>, vector<1x128xf32>
    %c0_32 = arith.constant 0 : index
    %c0_33 = arith.constant 0 : index
    %105 = vector.load %arg6[%c0_32, %c0_33] : memref<1x128xf32, #tpu.memory_space<vmem>>, vector<1x128xf32>
    %cst_34 = arith.constant dense<0.000000e+00> : vector<16xf32>
    %106 = vector.multi_reduction <add>, %103, %cst_34 [1] : vector<16x128xf32> to vector<16xf32>
    %107 = vector.shape_cast %106 : vector<16xf32> to vector<16x1xf32>
    %cst_35 = arith.constant 1.280000e+02 : f32
    %108 = vector.broadcast %cst_35 : f32 to vector<16x1xf32>
    %109 = arith.divf %107, %108 : vector<16x1xf32>
    %110 = vector.broadcast %109 : vector<16x1xf32> to vector<16x128xf32>
    %111 = arith.subf %103, %110 : vector<16x128xf32>
    %112 = arith.mulf %111, %111 : vector<16x128xf32>
    %cst_36 = arith.constant dense<0.000000e+00> : vector<16xf32>
    %113 = vector.multi_reduction <add>, %112, %cst_36 [1] : vector<16x128xf32> to vector<16xf32>
    %114 = vector.shape_cast %113 : vector<16xf32> to vector<16x1xf32>
    %cst_37 = arith.constant 1.280000e+02 : f32
    %115 = vector.broadcast %cst_37 : f32 to vector<16x1xf32>
    %116 = arith.divf %114, %115 : vector<16x1xf32>
    %117 = vector.broadcast %109 : vector<16x1xf32> to vector<16x128xf32>
    %118 = arith.subf %103, %117 : vector<16x128xf32>
    %cst_38 = arith.constant 9.99999996E-13 : f32
    %119 = vector.broadcast %cst_38 : f32 to vector<16x1xf32>
    %120 = arith.addf %116, %119 : vector<16x1xf32>
    %121 = math.rsqrt %120 : vector<16x1xf32>
    %122 = vector.broadcast %121 : vector<16x1xf32> to vector<16x128xf32>
    %123 = arith.mulf %118, %122 : vector<16x128xf32>
    %124 = vector.broadcast %104 : vector<1x128xf32> to vector<16x128xf32>
    %125 = arith.mulf %123, %124 : vector<16x128xf32>
    %126 = vector.broadcast %105 : vector<1x128xf32> to vector<16x128xf32>
    %127 = arith.addf %125, %126 : vector<16x128xf32>
    %128 = arith.truncf %127 : vector<16x128xf32> to vector<16x128xbf16>
    %c0_39 = arith.constant 0 : index
    %c0_40 = arith.constant 0 : index
    %129 = vector.load %arg7[%c0_39, %c0_40] : memref<128x256xbf16, #tpu.memory_space<vmem>>, vector<128x256xbf16>
    %cst_41 = arith.constant dense<0.000000e+00> : vector<16x256xf32>
    %130 = tpu.matmul %128, %129, %cst_41 {dimension_numbers = #tpu.dot_dimension_numbers<[1], [0], [0], [1], [0, 0, 1, 1], [], []>} : vector<16x128xbf16>, vector<128x256xbf16>, vector<16x256xf32> -> vector<16x256xf32>
    %c0_42 = arith.constant 0 : index
    %c0_43 = arith.constant 0 : index
    %131 = vector.load %arg8[%c0_42, %c0_43] : memref<1x256xf32, #tpu.memory_space<vmem>>, vector<1x256xf32>
    %132 = vector.broadcast %131 : vector<1x256xf32> to vector<16x256xf32>
    %133 = arith.addf %130, %132 : vector<16x256xf32>
    %cst_44 = arith.constant 5.000000e-01 : f32
    %134 = vector.broadcast %cst_44 : f32 to vector<16x256xf32>
    %135 = arith.mulf %134, %133 : vector<16x256xf32>
    %cst_45 = arith.constant 4.471500e-02 : f32
    %136 = vector.broadcast %cst_45 : f32 to vector<16x256xf32>
    %137 = arith.mulf %136, %133 : vector<16x256xf32>
    %138 = arith.mulf %137, %133 : vector<16x256xf32>
    %139 = arith.mulf %138, %133 : vector<16x256xf32>
    %140 = arith.addf %133, %139 : vector<16x256xf32>
    %cst_46 = arith.constant 0.797884583 : f32
    %141 = vector.broadcast %cst_46 : f32 to vector<16x256xf32>
    %142 = arith.mulf %141, %140 : vector<16x256xf32>
    %143 = math.tanh %142 : vector<16x256xf32>
    %cst_47 = arith.constant 1.000000e+00 : f32
    %144 = vector.broadcast %cst_47 : f32 to vector<16x256xf32>
    %145 = arith.addf %144, %143 : vector<16x256xf32>
    %146 = arith.mulf %135, %145 : vector<16x256xf32>
    %147 = arith.truncf %146 : vector<16x256xf32> to vector<16x256xbf16>
    %c0_48 = arith.constant 0 : index
    %c0_49 = arith.constant 0 : index
    %148 = vector.load %arg9[%c0_48, %c0_49] : memref<256x128xbf16, #tpu.memory_space<vmem>>, vector<256x128xbf16>
    %cst_50 = arith.constant dense<0.000000e+00> : vector<16x128xf32>
    %149 = tpu.matmul %147, %148, %cst_50 {dimension_numbers = #tpu.dot_dimension_numbers<[1], [0], [0], [1], [0, 0, 1, 1], [], []>} : vector<16x256xbf16>, vector<256x128xbf16>, vector<16x128xf32> -> vector<16x128xf32>
    %c0_51 = arith.constant 0 : index
    %c0_52 = arith.constant 0 : index
    %150 = vector.load %arg10[%c0_51, %c0_52] : memref<1x128xf32, #tpu.memory_space<vmem>>, vector<1x128xf32>
    %151 = vector.broadcast %150 : vector<1x128xf32> to vector<16x128xf32>
    %152 = arith.addf %149, %151 : vector<16x128xf32>
    %153 = arith.addf %127, %152 : vector<16x128xf32>
    %c0_53 = arith.constant 0 : index
    %c0_54 = arith.constant 0 : index
    %154 = vector.load %arg11[%c0_53, %c0_54] : memref<1x128xf32, #tpu.memory_space<vmem>>, vector<1x128xf32>
    %c0_55 = arith.constant 0 : index
    %c0_56 = arith.constant 0 : index
    %155 = vector.load %arg12[%c0_55, %c0_56] : memref<1x128xf32, #tpu.memory_space<vmem>>, vector<1x128xf32>
    %cst_57 = arith.constant dense<0.000000e+00> : vector<16xf32>
    %156 = vector.multi_reduction <add>, %153, %cst_57 [1] : vector<16x128xf32> to vector<16xf32>
    %157 = vector.shape_cast %156 : vector<16xf32> to vector<16x1xf32>
    %cst_58 = arith.constant 1.280000e+02 : f32
    %158 = vector.broadcast %cst_58 : f32 to vector<16x1xf32>
    %159 = arith.divf %157, %158 : vector<16x1xf32>
    %160 = vector.broadcast %159 : vector<16x1xf32> to vector<16x128xf32>
    %161 = arith.subf %153, %160 : vector<16x128xf32>
    %162 = arith.mulf %161, %161 : vector<16x128xf32>
    %cst_59 = arith.constant dense<0.000000e+00> : vector<16xf32>
    %163 = vector.multi_reduction <add>, %162, %cst_59 [1] : vector<16x128xf32> to vector<16xf32>
    %164 = vector.shape_cast %163 : vector<16xf32> to vector<16x1xf32>
    %cst_60 = arith.constant 1.280000e+02 : f32
    %165 = vector.broadcast %cst_60 : f32 to vector<16x1xf32>
    %166 = arith.divf %164, %165 : vector<16x1xf32>
    %167 = vector.broadcast %159 : vector<16x1xf32> to vector<16x128xf32>
    %168 = arith.subf %153, %167 : vector<16x128xf32>
    %cst_61 = arith.constant 9.99999996E-13 : f32
    %169 = vector.broadcast %cst_61 : f32 to vector<16x1xf32>
    %170 = arith.addf %166, %169 : vector<16x1xf32>
    %171 = math.rsqrt %170 : vector<16x1xf32>
    %172 = vector.broadcast %171 : vector<16x1xf32> to vector<16x128xf32>
    %173 = arith.mulf %168, %172 : vector<16x128xf32>
    %174 = vector.broadcast %154 : vector<1x128xf32> to vector<16x128xf32>
    %175 = arith.mulf %173, %174 : vector<16x128xf32>
    %176 = vector.broadcast %155 : vector<1x128xf32> to vector<16x128xf32>
    %177 = arith.addf %175, %176 : vector<16x128xf32>
    %c0_62 = arith.constant 0 : index
    %c0_63 = arith.constant 0 : index
    %178 = vector.load %arg13[%c0_62, %c0_63] : memref<16x128xf32, #tpu.memory_space<vmem>>, vector<16x128xf32>
    tpu.vector_store %arg13[%c0_62, %c0_63], %177 {strides = array<i32>} : memref<16x128xf32, #tpu.memory_space<vmem>>, vector<16x128xf32>,
    return
  }
}

</mosaic_0001>

<llo_original>
// kernel: language_model_forward.4
$region0: #{language_model_forward.4}
  #allocation0 [shape = 'u32[]', space=smem, size = 0x4, offset = 0x4, fixed_abs, tag = 'smem constant byte address 0x4 - core index']
  #allocation1 [shape = 'u32[144,128]{1,0:T(1,128)}', space=vmem, size = 0x12000, scoped, tag = 'internal scratch']
  %s0 = inlined_call_operand.vmem [shape: f32[16,128], index: 0, kind: input, shape index: {}]
  %s1 = inlined_call_operand.vmem [shape: f32[1,128], index: 1, kind: input, shape index: {}]
  %s2 = inlined_call_operand.vmem [shape: f32[1,128], index: 2, kind: input, shape index: {}]
  %s3 = inlined_call_operand.vmem [shape: f32[16,128], index: 3, kind: output, shape index: {}]
  %s4 = sld [smem:[#allocation0]]
  $region22: #{language_model_forward.4} parent=0
    _
  %s6 = ssub.s32 1, %s4
  %s7 = scalar_select 0, %s6, %s4
  // Predicated region
  $region2: #{language_model_forward.4} parent=0 // pred_check
    _
  $region3: #{language_model_forward.4} parent=0 // pred_check_branch
    %9 = sbr.rel (0) target = $region5
  $region4: #{language_model_forward.4} parent=0 // pred_region
    _
  $region5: #{language_model_forward.4} parent=0 // pred_fallthru
    _
  // Predicated region
  $region6: #{language_model_forward.4} parent=0 // pred_check
    _
  $region7: #{language_model_forward.4} parent=0 // pred_check_branch
    %11 = sbr.rel (0) target = $region9
  $region8: #{language_model_forward.4} parent=0 // pred_region
    _
  $region9: #{language_model_forward.4} parent=0 // pred_fallthru
    _
  // Predicated region
  $region10: #{language_model_forward.4} parent=0 // pred_check
    _
  $region11: #{language_model_forward.4} parent=0 // pred_check_branch
    %13 = sbr.rel (0) target = $region13
  $region12: #{language_model_forward.4} parent=0 // pred_region
    _
  $region13: #{language_model_forward.4} parent=0 // pred_fallthru
    _
  %v14 = vld [vmem:[%s0] sm:$0xff]
  %v15 = vld [vmem:[%s0 + $0x8] sm:$0xff]
  %v16 = vld [vmem:[%s1] sm:$0x1]
  %v17 = vld [vmem:[%s2] sm:$0x1]
  %18 = vadd.xlane.f32.xlu0 %v14
  %v19 = vpop.xlane.xlu0 %18
  %20 = vadd.xlane.f32.xlu0 %v15
  %v21 = vpop.xlane.xlu0 %20
  %v22 = vrcp.pop 128.0
  %v23 = vmul.f32 %v19, %v22
  %v24 = vmul.f32 %v21, %v22
  %v25 = vsub.f32 %v14, %v23
  %v26 = vsub.f32 %v15, %v24
  %v27 = vmul.f32 %v25, %v25
  %v28 = vmul.f32 %v26, %v26
  %29 = vadd.xlane.f32.xlu0 %v27
  %v30 = vpop.xlane.xlu0 %29
  %31 = vadd.xlane.f32.xlu0 %v28
  %v32 = vpop.xlane.xlu0 %31
  %v33 = vmul.f32 %v30, %v22
  %v34 = vmul.f32 %v32, %v22
  %v35 = vadd.f32 %v33, 1e-12
  %v36 = vadd.f32 %v34, 1e-12
  %v37 = vrsqrt.pop %v35
  %v38 = vrsqrt.pop %v36
  %v39 = vmul.f32 %v25, %v37
  %v40 = vmul.f32 %v26, %v38
  %v42 = vlaneseq
  %v43 = vshrl.u32 %v42, 7
  %v44 = vsub.s32 0, %v43
  %v45 = vrot.slane %v16, %v44
  %v47 = vmul.f32 %v39, %v45
  %v48 = vmul.f32 %v40, %v45
  %v50 = vlaneseq
  %v51 = vshrl.u32 %v50, 7
  %v52 = vsub.s32 0, %v51
  %v53 = vrot.slane %v17, %v52
  %v55 = vadd.f32 %v47, %v53
  %v56 = vadd.f32 %v48, %v53
  %57 = vst [vmem:[%s3] sm:$0xff] %v55
  %58 = vst [vmem:[%s3 + $0x8] sm:$0xff] %v56
  // Predicated region
  $region14: #{language_model_forward.4} parent=0 // pred_check
    _
  $region15: #{language_model_forward.4} parent=0 // pred_check_branch
    %60 = sbr.rel (0) target = $region17
  $region16: #{language_model_forward.4} parent=0 // pred_region
    _
  $region17: #{language_model_forward.4} parent=0 // pred_fallthru
    _
  // Predicated region
  $region18: #{language_model_forward.4} parent=0 // pred_check
    _
  $region19: #{language_model_forward.4} parent=0 // pred_check_branch
    %62 = sbr.rel (0) target = $region21
  $region20: #{language_model_forward.4} parent=0 // pred_region
    _
  $region21: #{language_model_forward.4} parent=0 // pred_fallthru
    _

// kernel: language_model_forward.7
$region0: #{language_model_forward.7}
  #allocation0 [shape = 'u32[]', space=smem, size = 0x4, offset = 0x4, fixed_abs, tag = 'smem constant byte address 0x4 - core index']
  #allocation1 [shape = 'u32[144,128]{1,0:T(1,128)}', space=vmem, size = 0x12000, scoped, tag = 'internal scratch']
  %s0 = inlined_call_operand.vmem [shape: f32[16,128], index: 0, kind: input, shape index: {}]
  %s1 = inlined_call_operand.vmem [shape: bf16[128,128], index: 1, kind: input, shape index: {}]
  %s2 = inlined_call_operand.vmem [shape: f32[1,128], index: 2, kind: input, shape index: {}]
  %s3 = inlined_call_operand.hbm [shape: f32[16,128], index: 3, kind: output, shape index: {}]
  %s4 = sld [smem:[#allocation0]]
  $region22: #{language_model_forward.7} parent=0
    _
  %s6 = ssub.s32 1, %s4
  %s7 = scalar_select 0, %s6, %s4
  $region1: #{language_model_forward.7} parent=0
    #allocation2 [shape = 'u8[8192]{0}', space=vmem, size = 0x2000, scoped, tag = 'output window, operand 0, single buffered']
    #allocation3 [shape = 's32[1]{0}', space=sflag, size = 0x4, scoped, tag = 'scoped memory for language_model_forward.7']
    %8 = vsyncpa [#allocation3], 0
    // Predicated region
    $region2: #{language_model_forward.7} parent=1 // pred_check
      _
    $region3: #{language_model_forward.7} parent=1 // pred_check_branch
      %10 = sbr.rel (0) target = $region5
    $region4: #{language_model_forward.7} parent=1 // pred_region
      _
    $region5: #{language_model_forward.7} parent=1 // pred_fallthru
      _
    // Predicated region
    $region6: #{language_model_forward.7} parent=1 // pred_check
      _
    $region7: #{language_model_forward.7} parent=1 // pred_check_branch
      %12 = sbr.rel (0) target = $region9
    $region8: #{language_model_forward.7} parent=1 // pred_region
      _
    $region9: #{language_model_forward.7} parent=1 // pred_fallthru
      _
    // Predicated region
    $region10: #{language_model_forward.7} parent=1 // pred_check
      _
    $region11: #{language_model_forward.7} parent=1 // pred_check_branch
      %14 = sbr.rel (0) target = $region13
    $region12: #{language_model_forward.7} parent=1 // pred_region
      _
    $region13: #{language_model_forward.7} parent=1 // pred_fallthru
      _
    %v16 = vld [vmem:[%s0] sm:$0xff]
    %v17 = vld [vmem:[%s0 + $0x8] sm:$0xff]
    %v18 = vpack.c.bf16 %v17, %v16
    %v19 = vld [vmem:[%s1] sm:$0xf]
    %v20 = vld [vmem:[%s1 + $0x4] sm:$0xf]
    %v21 = vld [vmem:[%s1 + $0x8] sm:$0xf]
    %v22 = vld [vmem:[%s1 + $0xc] sm:$0xf]
    %v23 = vld [vmem:[%s1 + $0x10] sm:$0xf]
    %v24 = vld [vmem:[%s1 + $0x14] sm:$0xf]
    %v25 = vld [vmem:[%s1 + $0x18] sm:$0xf]
    %v26 = vld [vmem:[%s1 + $0x1c] sm:$0xf]
    %v27 = vld [vmem:[%s1 + $0x20] sm:$0xf]
    %v28 = vld [vmem:[%s1 + $0x24] sm:$0xf]
    %v29 = vld [vmem:[%s1 + $0x28] sm:$0xf]
    %v30 = vld [vmem:[%s1 + $0x2c] sm:$0xf]
    %v31 = vld [vmem:[%s1 + $0x30] sm:$0xf]
    %v32 = vld [vmem:[%s1 + $0x34] sm:$0xf]
    %v33 = vld [vmem:[%s1 + $0x38] sm:$0xf]
    %v34 = vld [vmem:[%s1 + $0x3c] sm:$0xf]
    %v35 = vld [vmem:[%s2] sm:$0x1]
    %v37 = vlaneseq
    %v38 = vshrl.u32 %v37, 7
    %v39 = vsub.s32 0, %v38
    %v40 = vrot.slane %v35, %v39
    %v58 = vunpack.c.l.b16 %v19
    %v59 = vunpack.c.l.b16 %v20
    %v60 = vunpack.c.l.b16 %v21
    %v61 = vunpack.c.l.b16 %v22
    %v62 = vunpack.c.l.b16 %v23
    %v63 = vunpack.c.l.b16 %v24
    %v64 = vunpack.c.l.b16 %v25
    %v65 = vunpack.c.l.b16 %v26
    %v66 = vunpack.c.l.b16 %v27
    %v67 = vunpack.c.l.b16 %v28
    %v68 = vunpack.c.l.b16 %v29
    %v69 = vunpack.c.l.b16 %v30
    %v70 = vunpack.c.l.b16 %v31
    %v71 = vunpack.c.l.b16 %v32
    %v72 = vunpack.c.l.b16 %v33
    %v73 = vunpack.c.l.b16 %v34
    %v74 = vpack.c.b16 %v59, %v58
    %v75 = vpack.c.b16 %v61, %v60
    %v76 = vpack.c.b16 %v63, %v62
    %v77 = vpack.c.b16 %v65, %v64
    %v78 = vpack.c.b16 %v67, %v66
    %v79 = vpack.c.b16 %v69, %v68
    %v80 = vpack.c.b16 %v71, %v70
    %v81 = vpack.c.b16 %v73, %v72
    %90 = vmatprep.subr.bf16.mxu0 0
    %91 = vmatpush1.bf16.msra.mxu0 %v74
    %92 = vmatprep.subr.bf16.mxu0 0
    %93 = vmatpush1.bf16.msra.mxu0 %v75
    %94 = vmatprep.subr.bf16.mxu0 0
    %95 = vmatpush1.bf16.msra.mxu0 %v76
    %96 = vmatprep.subr.bf16.mxu0 0
    %97 = vmatpush1.bf16.msra.mxu0 %v77
    %98 = vmatprep.subr.bf16.mxu0 0
    %99 = vmatpush1.bf16.msra.mxu0 %v78
    %100 = vmatprep.subr.bf16.mxu0 0
    %101 = vmatpush1.bf16.msra.mxu0 %v79
    %102 = vmatprep.subr.bf16.mxu0 0
    %103 = vmatpush1.bf16.msra.mxu0 %v80
    %104 = vmatprep.subr.bf16.mxu0 0
    %105 = vmatpush1.bf16.msra.mxu0 %v81
    %106 = vmatprep.subr.bf16.mxu0 0
    %107 = vmatpush1.bf16.msra.mxu0 0
    %108 = vmatprep.subr.bf16.mxu0 0
    %109 = vmatpush1.bf16.msra.mxu0 0
    %110 = vmatprep.subr.bf16.mxu0 0
    %111 = vmatpush1.bf16.msra.mxu0 0
    %112 = vmatprep.subr.bf16.mxu0 0
    %113 = vmatpush1.bf16.msra.mxu0 0
    %114 = vmatprep.subr.bf16.mxu0 0
    %115 = vmatpush1.bf16.msra.mxu0 0
    %116 = vmatprep.subr.bf16.mxu0 0
    %117 = vmatpush1.bf16.msra.mxu0 0
    %118 = vmatprep.subr.bf16.mxu0 0
    %119 = vmatpush1.bf16.msra.mxu0 0
    %120 = vmatprep.subr.bf16.mxu0 0
    %121 = vmatpush1.bf16.msra.mxu0 0
    %122 = vmatprep.mubr.bf16.mxu0 0
    %123 = vmatmul.mubr.bf16.gmra.mrb[0].mxu0 %v18
    %v124 = vpop.f32.mrb[0].mxu0
    %v125 = vadd.f32 %v40, %v124
    %v126 = vpop.f32.mrb[0].mxu0
    %v127 = vpop.f32.mrb[0].mxu0
    %v128 = vadd.f32 %v40, %v127
    %v129 = vpop.f32.mrb[0].mxu0
    %130 = vdwg.mxu0
    %131 = vmax.xlane.f32.xlu0 %v125
    %v132 = vpop.xlane.xlu0 %131
    %133 = vmax.xlane.f32.xlu0 %v128
    %v134 = vpop.xlane.xlu0 %133
    %v135 = vsub.f32 %v125, %v132
    %v136 = vsub.f32 %v128, %v134
    %v137 = vmul.f32 %v135, 1.442695
    %v138 = vpow.pop %v137
    %v139 = vmul.f32 %v136, 1.442695
    %v140 = vpow.pop %v139
    %141 = vadd.xlane.f32.xlu0 %v138
    %v142 = vpop.xlane.xlu0 %141
    %143 = vadd.xlane.f32.xlu0 %v140
    %v144 = vpop.xlane.xlu0 %143
    %v145 = vrcp.pop %v142
    %v146 = vrcp.pop %v144
    %v147 = vmul.f32 %v138, %v145
    %v148 = vmul.f32 %v140, %v146
    %149 = vst [vmem:[#allocation2] sm:$0xff] %v147
    %150 = vst [vmem:[#allocation2 + $0x8] sm:$0xff] %v148
    // Predicated region
    $region14: #{language_model_forward.7} parent=1 // pred_check
      _
    $region15: #{language_model_forward.7} parent=1 // pred_check_branch
      %152 = sbr.rel (0) target = $region17
    $region16: #{language_model_forward.7} parent=1 // pred_region
      %s154 = ssub.s32 256, 256
      %155 = vsyncadd [#allocation3], %s154
      %s156 = sshll.u32 [#allocation2], 4
      %s157 = int_to_ptr.vmem [resolvable:$true] %s156
      %162 = dma.vmem_to_hbm [thread:$0]  %s157, 256, %s3, [#allocation3], 128, 128, 8
    $region17: #{language_model_forward.7} parent=1 // pred_fallthru
      _
    // Predicated region
    $region18: #{language_model_forward.7} parent=1 // pred_check
      _
    $region19: #{language_model_forward.7} parent=1 // pred_check_branch
      %164 = sbr.rel (0) target = $region21
    $region20: #{language_model_forward.7} parent=1 // pred_region
      %165 = dma.done [#allocation3], 256
    $region21: #{language_model_forward.7} parent=1 // pred_fallthru
      _
    %166 = vsyncpa [#allocation3], 1

// kernel: language_model_forward.6
$region0: #{language_model_forward.6}
  #allocation0 [shape = 'u32[]', space=smem, size = 0x4, offset = 0x4, fixed_abs, tag = 'smem constant byte address 0x4 - core index']
  #allocation1 [shape = 'u32[144,128]{1,0:T(1,128)}', space=vmem, size = 0x12000, scoped, tag = 'internal scratch']
  %s0 = inlined_call_operand.vmem [shape: f32[16,128], index: 0, kind: input, shape index: {}]
  %s1 = inlined_call_operand.vmem [shape: bf16[128,384], index: 1, kind: input, shape index: {}]
  %s2 = inlined_call_operand.vmem [shape: f32[1,384], index: 2, kind: input, shape index: {}]
  %s3 = inlined_call_operand.vmem [shape: bf16[128,128], index: 3, kind: input, shape index: {}]
  %s4 = inlined_call_operand.vmem [shape: f32[1,128], index: 4, kind: input, shape index: {}]
  %s5 = inlined_call_operand.vmem [shape: f32[1,128], index: 5, kind: input, shape index: {}]
  %s6 = inlined_call_operand.vmem [shape: f32[1,128], index: 6, kind: input, shape index: {}]
  %s7 = inlined_call_operand.vmem [shape: bf16[128,256], index: 7, kind: input, shape index: {}]
  %s8 = inlined_call_operand.vmem [shape: f32[1,256], index: 8, kind: input, shape index: {}]
  %s9 = inlined_call_operand.vmem [shape: bf16[256,128], index: 9, kind: input, shape index: {}]
  %s10 = inlined_call_operand.vmem [shape: f32[1,128], index: 10, kind: input, shape index: {}]
  %s11 = inlined_call_operand.vmem [shape: f32[1,128], index: 11, kind: input, shape index: {}]
  %s12 = inlined_call_operand.vmem [shape: f32[1,128], index: 12, kind: input, shape index: {}]
  %s13 = inlined_call_operand.vmem [shape: f32[16,128], index: 13, kind: output, shape index: {}]
  %s14 = sld [smem:[#allocation0]]
  $region62: #{language_model_forward.6} parent=0
    _
  %s16 = ssub.s32 1, %s14
  %s17 = scalar_select 0, %s16, %s14
  // Predicated region
  $region2: #{language_model_forward.6} parent=0 // pred_check
    _
  $region3: #{language_model_forward.6} parent=0 // pred_check_branch
    %19 = sbr.rel (0) target = $region5
  $region4: #{language_model_forward.6} parent=0 // pred_region
    _
  $region5: #{language_model_forward.6} parent=0 // pred_fallthru
    _
  // Predicated region
  $region6: #{language_model_forward.6} parent=0 // pred_check
    _
  $region7: #{language_model_forward.6} parent=0 // pred_check_branch
    %21 = sbr.rel (0) target = $region9
  $region8: #{language_model_forward.6} parent=0 // pred_region
    _
  $region9: #{language_model_forward.6} parent=0 // pred_fallthru
    _
  // Predicated region
  $region10: #{language_model_forward.6} parent=0 // pred_check
    _
  $region11: #{language_model_forward.6} parent=0 // pred_check_branch
    %23 = sbr.rel (0) target = $region13
  $region12: #{language_model_forward.6} parent=0 // pred_region
    _
  $region13: #{language_model_forward.6} parent=0 // pred_fallthru
    _
  // Predicated region
  $region14: #{language_model_forward.6} parent=0 // pred_check
    _
  $region15: #{language_model_forward.6} parent=0 // pred_check_branch
    %25 = sbr.rel (0) target = $region17
  $region16: #{language_model_forward.6} parent=0 // pred_region
    _
  $region17: #{language_model_forward.6} parent=0 // pred_fallthru
    _
  // Predicated region
  $region18: #{language_model_forward.6} parent=0 // pred_check
    _
  $region19: #{language_model_forward.6} parent=0 // pred_check_branch
    %27 = sbr.rel (0) target = $region21
  $region20: #{language_model_forward.6} parent=0 // pred_region
    _
  $region21: #{language_model_forward.6} parent=0 // pred_fallthru
    _
  // Predicated region
  $region22: #{language_model_forward.6} parent=0 // pred_check
    _
  $region23: #{language_model_forward.6} parent=0 // pred_check_branch
    %29 = sbr.rel (0) target = $region25
  $region24: #{language_model_forward.6} parent=0 // pred_region
    _
  $region25: #{language_model_forward.6} parent=0 // pred_fallthru
    _
  // Predicated region
  $region26: #{language_model_forward.6} parent=0 // pred_check
    _
  $region27: #{language_model_forward.6} parent=0 // pred_check_branch
    %31 = sbr.rel (0) target = $region29
  $region28: #{language_model_forward.6} parent=0 // pred_region
    _
  $region29: #{language_model_forward.6} parent=0 // pred_fallthru
    _
  // Predicated region
  $region30: #{language_model_forward.6} parent=0 // pred_check
    _
  $region31: #{language_model_forward.6} parent=0 // pred_check_branch
    %33 = sbr.rel (0) target = $region33
  $region32: #{language_model_forward.6} parent=0 // pred_region
    _
  $region33: #{language_model_forward.6} parent=0 // pred_fallthru
    _
  // Predicated region
  $region34: #{language_model_forward.6} parent=0 // pred_check
    _
  $region35: #{language_model_forward.6} parent=0 // pred_check_branch
    %35 = sbr.rel (0) target = $region37
  $region36: #{language_model_forward.6} parent=0 // pred_region
    _
  $region37: #{language_model_forward.6} parent=0 // pred_fallthru
    _
  // Predicated region
  $region38: #{language_model_forward.6} parent=0 // pred_check
    _
  $region39: #{language_model_forward.6} parent=0 // pred_check_branch
    %37 = sbr.rel (0) target = $region41
  $region40: #{language_model_forward.6} parent=0 // pred_region
    _
  $region41: #{language_model_forward.6} parent=0 // pred_fallthru
    _
  // Predicated region
  $region42: #{language_model_forward.6} parent=0 // pred_check
    _
  $region43: #{language_model_forward.6} parent=0 // pred_check_branch
    %39 = sbr.rel (0) target = $region45
  $region44: #{language_model_forward.6} parent=0 // pred_region
    _
  $region45: #{language_model_forward.6} parent=0 // pred_fallthru
    _
  // Predicated region
  $region46: #{language_model_forward.6} parent=0 // pred_check
    _
  $region47: #{language_model_forward.6} parent=0 // pred_check_branch
    %41 = sbr.rel (0) target = $region49
  $region48: #{language_model_forward.6} parent=0 // pred_region
    _
  $region49: #{language_model_forward.6} parent=0 // pred_fallthru
    _
  // Predicated region
  $region50: #{language_model_forward.6} parent=0 // pred_check
    _
  $region51: #{language_model_forward.6} parent=0 // pred_check_branch
    %43 = sbr.rel (0) target = $region53
  $region52: #{language_model_forward.6} parent=0 // pred_region
    _
  $region53: #{language_model_forward.6} parent=0 // pred_fallthru
    _
  %v45 = vld [vmem:[%s0] sm:$0xff]
  %v46 = vld [vmem:[%s0 + $0x8] sm:$0xff]
  %v47 = vpack.c.bf16 %v46, %v45
  %v48 = vld [vmem:[%s1] sm:$0xff]
  %v49 = vld [vmem:[%s1 + $0x8] sm:$0xf]
  %v50 = vld [vmem:[%s1 + $0xc] sm:$0xff]
  %v51 = vld [vmem:[%s1 + $0x14] sm:$0xf]
  %v52 = vld [vmem:[%s1 + $0x18] sm:$0xff]
  %v53 = vld [vmem:[%s1 + $0x20] sm:$0xf]
  %v54 = vld [vmem:[%s1 + $0x24] sm:$0xff]
  %v55 = vld [vmem:[%s1 + $0x2c] sm:$0xf]
  %v56 = vld [vmem:[%s1 + $0x30] sm:$0xff]
  %v57 = vld [vmem:[%s1 + $0x38] sm:$0xf]
  %v58 = vld [vmem:[%s1 + $0x3c] sm:$0xff]
  %v59 = vld [vmem:[%s1 + $0x44] sm:$0xf]
  %v60 = vld [vmem:[%s1 + $0x48] sm:$0xff]
  %v61 = vld [vmem:[%s1 + $0x50] sm:$0xf]
  %v62 = vld [vmem:[%s1 + $0x54] sm:$0xff]
  %v63 = vld [vmem:[%s1 + $0x5c] sm:$0xf]
  %v64 = vld [vmem:[%s1 + $0x60] sm:$0xff]
  %v65 = vld [vmem:[%s1 + $0x68] sm:$0xf]
  %v66 = vld [vmem:[%s1 + $0x6c] sm:$0xff]
  %v67 = vld [vmem:[%s1 + $0x74] sm:$0xf]
  %v68 = vld [vmem:[%s1 + $0x78] sm:$0xff]
  %v69 = vld [vmem:[%s1 + $0x80] sm:$0xf]
  %v70 = vld [vmem:[%s1 + $0x84] sm:$0xff]
  %v71 = vld [vmem:[%s1 + $0x8c] sm:$0xf]
  %v72 = vld [vmem:[%s1 + $0x90] sm:$0xff]
  %v73 = vld [vmem:[%s1 + $0x98] sm:$0xf]
  %v74 = vld [vmem:[%s1 + $0x9c] sm:$0xff]
  %v75 = vld [vmem:[%s1 + $0xa4] sm:$0xf]
  %v76 = vld [vmem:[%s1 + $0xa8] sm:$0xff]
  %v77 = vld [vmem:[%s1 + $0xb0] sm:$0xf]
  %v78 = vld [vmem:[%s1 + $0xb4] sm:$0xff]
  %v79 = vld [vmem:[%s1 + $0xbc] sm:$0xf]
  %v80 = vld [vmem:[%s2] sm:$0x7]
  %v82 = vlaneseq
  %v83 = vshrl.u32 %v82, 7
  %v84 = vsub.s32 0, %v83
  %v85 = vrot.slane %v80, %v84
  %v86 = vlaneseq
  %v87 = vshrl.u32 %v86, 7
  %v88 = vsub.s32 1, %v87
  %v89 = vrot.slane %v80, %v88
  %v90 = vlaneseq
  %v91 = vshrl.u32 %v90, 7
  %v92 = vsub.s32 2, %v91
  %v93 = vrot.slane %v80, %v92
  %v129 = vunpack.c.l.b16 %v48
  %v130 = vunpack.c.h.b16 %v48
  %v131 = vunpack.c.l.b16 %v49
  %v132 = vunpack.c.l.b16 %v50
  %v133 = vunpack.c.h.b16 %v50
  %v134 = vunpack.c.l.b16 %v51
  %v135 = vunpack.c.l.b16 %v52
  %v136 = vunpack.c.h.b16 %v52
  %v137 = vunpack.c.l.b16 %v53
  %v138 = vunpack.c.l.b16 %v54
  %v139 = vunpack.c.h.b16 %v54
  %v140 = vunpack.c.l.b16 %v55
  %v141 = vunpack.c.l.b16 %v56
  %v142 = vunpack.c.h.b16 %v56
  %v143 = vunpack.c.l.b16 %v57
  %v144 = vunpack.c.l.b16 %v58
  %v145 = vunpack.c.h.b16 %v58
  %v146 = vunpack.c.l.b16 %v59
  %v147 = vunpack.c.l.b16 %v60
  %v148 = vunpack.c.h.b16 %v60
  %v149 = vunpack.c.l.b16 %v61
  %v150 = vunpack.c.l.b16 %v62
  %v151 = vunpack.c.h.b16 %v62
  %v152 = vunpack.c.l.b16 %v63
  %v153 = vunpack.c.l.b16 %v64
  %v154 = vunpack.c.h.b16 %v64
  %v155 = vunpack.c.l.b16 %v65
  %v156 = vunpack.c.l.b16 %v66
  %v157 = vunpack.c.h.b16 %v66
  %v158 = vunpack.c.l.b16 %v67
  %v159 = vunpack.c.l.b16 %v68
  %v160 = vunpack.c.h.b16 %v68
  %v161 = vunpack.c.l.b16 %v69
  %v162 = vunpack.c.l.b16 %v70
  %v163 = vunpack.c.h.b16 %v70
  %v164 = vunpack.c.l.b16 %v71
  %v165 = vunpack.c.l.b16 %v72
  %v166 = vunpack.c.h.b16 %v72
  %v167 = vunpack.c.l.b16 %v73
  %v168 = vunpack.c.l.b16 %v74
  %v169 = vunpack.c.h.b16 %v74
  %v170 = vunpack.c.l.b16 %v75
  %v171 = vunpack.c.l.b16 %v76
  %v172 = vunpack.c.h.b16 %v76
  %v173 = vunpack.c.l.b16 %v77
  %v174 = vunpack.c.l.b16 %v78
  %v175 = vunpack.c.h.b16 %v78
  %v176 = vunpack.c.l.b16 %v79
  %v177 = vpack.c.b16 %v132, %v129
  %v178 = vpack.c.b16 %v133, %v130
  %v179 = vpack.c.b16 %v134, %v131
  %v180 = vpack.c.b16 %v138, %v135
  %v181 = vpack.c.b16 %v139, %v136
  %v182 = vpack.c.b16 %v140, %v137
  %v183 = vpack.c.b16 %v144, %v141
  %v184 = vpack.c.b16 %v145, %v142
  %v185 = vpack.c.b16 %v146, %v143
  %v186 = vpack.c.b16 %v150, %v147
  %v187 = vpack.c.b16 %v151, %v148
  %v188 = vpack.c.b16 %v152, %v149
  %v189 = vpack.c.b16 %v156, %v153
  %v190 = vpack.c.b16 %v157, %v154
  %v191 = vpack.c.b16 %v158, %v155
  %v192 = vpack.c.b16 %v162, %v159
  %v193 = vpack.c.b16 %v163, %v160
  %v194 = vpack.c.b16 %v164, %v161
  %v195 = vpack.c.b16 %v168, %v165
  %v196 = vpack.c.b16 %v169, %v166
  %v197 = vpack.c.b16 %v170, %v167
  %v198 = vpack.c.b16 %v174, %v171
  %v199 = vpack.c.b16 %v175, %v172
  %v200 = vpack.c.b16 %v176, %v173
  %225 = vmatprep.subr.bf16.mxu0 %v178
  %226 = vmatpush1.bf16.msra.mxu0 %v177
  %227 = vmatprep.subr.bf16.mxu0 %v181
  %228 = vmatpush1.bf16.msra.mxu0 %v180
  %229 = vmatprep.subr.bf16.mxu0 %v184
  %230 = vmatpush1.bf16.msra.mxu0 %v183
  %231 = vmatprep.subr.bf16.mxu0 %v187
  %232 = vmatpush1.bf16.msra.mxu0 %v186
  %233 = vmatprep.subr.bf16.mxu0 %v190
  %234 = vmatpush1.bf16.msra.mxu0 %v189
  %235 = vmatprep.subr.bf16.mxu0 %v193
  %236 = vmatpush1.bf16.msra.mxu0 %v192
  %237 = vmatprep.subr.bf16.mxu0 %v196
  %238 = vmatpush1.bf16.msra.mxu0 %v195
  %239 = vmatprep.subr.bf16.mxu0 %v199
  %240 = vmatpush1.bf16.msra.mxu0 %v198
  %241 = vmatprep.subr.bf16.mxu0 0
  %242 = vmatpush1.bf16.msra.mxu0 0
  %243 = vmatprep.subr.bf16.mxu0 0
  %244 = vmatpush1.bf16.msra.mxu0 0
  %245 = vmatprep.subr.bf16.mxu0 0
  %246 = vmatpush1.bf16.msra.mxu0 0
  %247 = vmatprep.subr.bf16.mxu0 0
  %248 = vmatpush1.bf16.msra.mxu0 0
  %249 = vmatprep.subr.bf16.mxu0 0
  %250 = vmatpush1.bf16.msra.mxu0 0
  %251 = vmatprep.subr.bf16.mxu0 0
  %252 = vmatpush1.bf16.msra.mxu0 0
  %253 = vmatprep.subr.bf16.mxu0 0
  %254 = vmatpush1.bf16.msra.mxu0 0
  %255 = vmatprep.subr.bf16.mxu0 0
  %256 = vmatpush1.bf16.msra.mxu0 0
  %257 = vmatprep.mubr.bf16.mxu0 0
  %258 = vmatmul.mubr.bf16.gmra.mrb[0].mxu0 %v47
  %v259 = vpop.f32.mrb[0].mxu0
  %v260 = vadd.f32 %v85, %v259
  %v261 = vpop.f32.mrb[0].mxu0
  %v262 = vadd.f32 %v89, %v261
  %v263 = vpop.f32.mrb[0].mxu0
  %v264 = vadd.f32 %v85, %v263
  %v265 = vpop.f32.mrb[0].mxu0
  %v266 = vadd.f32 %v89, %v265
  %267 = vdwg.mxu0
  %268 = vmatprep.subr.bf16.mxu0 0
  %269 = vmatpush1.bf16.msra.mxu0 %v179
  %270 = vmatprep.subr.bf16.mxu0 0
  %271 = vmatpush1.bf16.msra.mxu0 %v182
  %272 = vmatprep.subr.bf16.mxu0 0
  %273 = vmatpush1.bf16.msra.mxu0 %v185
  %274 = vmatprep.subr.bf16.mxu0 0
  %275 = vmatpush1.bf16.msra.mxu0 %v188
  %276 = vmatprep.subr.bf16.mxu0 0
  %277 = vmatpush1.bf16.msra.mxu0 %v191
  %278 = vmatprep.subr.bf16.mxu0 0
  %279 = vmatpush1.bf16.msra.mxu0 %v194
  %280 = vmatprep.subr.bf16.mxu0 0
  %281 = vmatpush1.bf16.msra.mxu0 %v197
  %282 = vmatprep.subr.bf16.mxu0 0
  %283 = vmatpush1.bf16.msra.mxu0 %v200
  %284 = vmatprep.subr.bf16.mxu0 0
  %285 = vmatpush1.bf16.msra.mxu0 0
  %286 = vmatprep.subr.bf16.mxu0 0
  %287 = vmatpush1.bf16.msra.mxu0 0
  %288 = vmatprep.subr.bf16.mxu0 0
  %289 = vmatpush1.bf16.msra.mxu0 0
  %290 = vmatprep.subr.bf16.mxu0 0
  %291 = vmatpush1.bf16.msra.mxu0 0
  %292 = vmatprep.subr.bf16.mxu0 0
  %293 = vmatpush1.bf16.msra.mxu0 0
  %294 = vmatprep.subr.bf16.mxu0 0
  %295 = vmatpush1.bf16.msra.mxu0 0
  %296 = vmatprep.subr.bf16.mxu0 0
  %297 = vmatpush1.bf16.msra.mxu0 0
  %298 = vmatprep.subr.bf16.mxu0 0
  %299 = vmatpush1.bf16.msra.mxu0 0
  %300 = vmatprep.mubr.bf16.mxu0 0
  %301 = vmatmul.mubr.bf16.gmra.mrb[0].mxu0 %v47
  %v302 = vpop.f32.mrb[0].mxu0
  %v303 = vadd.f32 %v93, %v302
  %v304 = vpop.f32.mrb[0].mxu0
  %v305 = vpop.f32.mrb[0].mxu0
  %v306 = vadd.f32 %v93, %v305
  %v307 = vpop.f32.mrb[0].mxu0
  %308 = vdwg.mxu0
  %v309 = vpack.c.bf16 %v260, %v260
  %v310 = vpack.c.bf16 %v262, %v262
  %v311 = vpack.c.bf16 %v303, %v303
  %vm312 = vcmask 523264
  %v314 = vsel %vm312, %v309, 0
  %v317 = vsel %vm312, %v310, 0
  %319 = vmatprep.subr.bf16.mxu0 0
  %320 = vmatpush1.bf16.xpose.msra.mxu0 %v317
  %321 = vmatprep.subr.bf16.mxu0 0
  %322 = vmatpush1.bf16.xpose.msra.mxu0 0
  %323 = vmatprep.subr.bf16.mxu0 0
  %324 = vmatpush1.bf16.xpose.msra.mxu0 0
  %325 = vmatprep.subr.bf16.mxu0 0
  %326 = vmatpush1.bf16.xpose.msra.mxu0 0
  %327 = vmatprep.subr.bf16.mxu0 0
  %328 = vmatpush1.bf16.xpose.msra.mxu0 0
  %329 = vmatprep.subr.bf16.mxu0 0
  %330 = vmatpush1.bf16.xpose.msra.mxu0 0
  %331 = vmatprep.subr.bf16.mxu0 0
  %332 = vmatpush1.bf16.xpose.msra.mxu0 0
  %333 = vmatprep.subr.bf16.mxu0 0
  %334 = vmatpush1.bf16.xpose.msra.mxu0 0
  %335 = vmatprep.subr.bf16.mxu0 0
  %336 = vmatpush1.bf16.xpose.msra.mxu0 0
  %337 = vmatprep.subr.bf16.mxu0 0
  %338 = vmatpush1.bf16.xpose.msra.mxu0 0
  %339 = vmatprep.subr.bf16.mxu0 0
  %340 = vmatpush1.bf16.xpose.msra.mxu0 0
  %341 = vmatprep.subr.bf16.mxu0 0
  %342 = vmatpush1.bf16.xpose.msra.mxu0 0
  %343 = vmatprep.subr.bf16.mxu0 0
  %344 = vmatpush1.bf16.xpose.msra.mxu0 0
  %345 = vmatprep.subr.bf16.mxu0 0
  %346 = vmatpush1.bf16.xpose.msra.mxu0 0
  %347 = vmatprep.subr.bf16.mxu0 0
  %348 = vmatpush1.bf16.xpose.msra.mxu0 0
  %349 = vmatprep.subr.bf16.mxu0 0
  %350 = vmatpush1.bf16.xpose.msra.mxu0 0
  %351 = vmatprep.mubr.bf16.mxu0 0
  %352 = vmatmul.mubr.bf16.gmra.mrb[0].mxu0 %v314
  %v353 = vpop.f32.mrb[0].mxu0
  %v354 = vadd.f32 0.0, %v353
  %v355 = vpop.f32.mrb[0].mxu0
  %v356 = vpop.f32.mrb[0].mxu0
  %v357 = vpop.f32.mrb[0].mxu0
  %358 = vdwg.mxu0
  %v359 = vmul.f32 %v354, 0.125
  %vm360 = vcmask 64512
  %v361 = vsel %vm360, %v359, -inf
  %362 = vmax.xlane.f32.xlu0 %v361
  %v363 = vpop.xlane.xlu0 %362
  %v364 = vsub.f32 %v359, %v363
  %v365 = vmul.f32 %v364, 1.442695
  %v366 = vpow.pop %v365
  %v367 = vsel %vm360, %v366, 0.0
  %368 = vadd.xlane.f32.xlu0 %v367
  %v369 = vpop.xlane.xlu0 %368
  %v370 = vrcp.pop %v369
  %v371 = vmul.f32 %v366, %v370
  %v372 = vpack.c.bf16 %v371, %v371
  %v374 = vsel %vm360, %v372, 0
  %vm376 = vcmask 1043456
  %v378 = vsel %vm376, %v311, 0
  %380 = vmatprep.subr.bf16.mxu0 0
  %381 = vmatpush1.bf16.msra.mxu0 %v378
  %382 = vmatprep.subr.bf16.mxu0 0
  %383 = vmatpush1.bf16.msra.mxu0 0
  %384 = vmatprep.subr.bf16.mxu0 0
  %385 = vmatpush1.bf16.msra.mxu0 0
  %386 = vmatprep.subr.bf16.mxu0 0
  %387 = vmatpush1.bf16.msra.mxu0 0
  %388 = vmatprep.subr.bf16.mxu0 0
  %389 = vmatpush1.bf16.msra.mxu0 0
  %390 = vmatprep.subr.bf16.mxu0 0
  %391 = vmatpush1.bf16.msra.mxu0 0
  %392 = vmatprep.subr.bf16.mxu0 0
  %393 = vmatpush1.bf16.msra.mxu0 0
  %394 = vmatprep.subr.bf16.mxu0 0
  %395 = vmatpush1.bf16.msra.mxu0 0
  %396 = vmatprep.subr.bf16.mxu0 0
  %397 = vmatpush1.bf16.msra.mxu0 0
  %398 = vmatprep.subr.bf16.mxu0 0
  %399 = vmatpush1.bf16.msra.mxu0 0
  %400 = vmatprep.subr.bf16.mxu0 0
  %401 = vmatpush1.bf16.msra.mxu0 0
  %402 = vmatprep.subr.bf16.mxu0 0
  %403 = vmatpush1.bf16.msra.mxu0 0
  %404 = vmatprep.subr.bf16.mxu0 0
  %405 = vmatpush1.bf16.msra.mxu0 0
  %406 = vmatprep.subr.bf16.mxu0 0
  %407 = vmatpush1.bf16.msra.mxu0 0
  %408 = vmatprep.subr.bf16.mxu0 0
  %409 = vmatpush1.bf16.msra.mxu0 0
  %410 = vmatprep.subr.bf16.mxu0 0
  %411 = vmatpush1.bf16.msra.mxu0 0
  %412 = vmatprep.mubr.bf16.mxu0 0
  %413 = vmatmul.mubr.bf16.gmra.mrb[0].mxu0 %v374
  %v414 = vpop.f32.mrb[0].mxu0
  %v415 = vadd.f32 0.0, %v414
  %v416 = vpop.f32.mrb[0].mxu0
  %v417 = vpop.f32.mrb[0].mxu0
  %v418 = vpop.f32.mrb[0].mxu0
  %419 = vdwg.mxu0
  %421 = vrot.lane.b32.xlu0 %v309, 64
  %v422 = vpop.permute.xlu0 %421
  %424 = vrot.lane.b32.xlu0 %v310, 64
  %v425 = vpop.permute.xlu0 %424
  %v427 = vsel %vm312, %v422, 0
  %v430 = vsel %vm312, %v425, 0
  %432 = vmatprep.subr.bf16.mxu0 0
  %433 = vmatpush1.bf16.xpose.msra.mxu0 %v430
  %434 = vmatprep.subr.bf16.mxu0 0
  %435 = vmatpush1.bf16.xpose.msra.mxu0 0
  %436 = vmatprep.subr.bf16.mxu0 0
  %437 = vmatpush1.bf16.xpose.msra.mxu0 0
  %438 = vmatprep.subr.bf16.mxu0 0
  %439 = vmatpush1.bf16.xpose.msra.mxu0 0
  %440 = vmatprep.subr.bf16.mxu0 0
  %441 = vmatpush1.bf16.xpose.msra.mxu0 0
  %442 = vmatprep.subr.bf16.mxu0 0
  %443 = vmatpush1.bf16.xpose.msra.mxu0 0
  %444 = vmatprep.subr.bf16.mxu0 0
  %445 = vmatpush1.bf16.xpose.msra.mxu0 0
  %446 = vmatprep.subr.bf16.mxu0 0
  %447 = vmatpush1.bf16.xpose.msra.mxu0 0
  %448 = vmatprep.subr.bf16.mxu0 0
  %449 = vmatpush1.bf16.xpose.msra.mxu0 0
  %450 = vmatprep.subr.bf16.mxu0 0
  %451 = vmatpush1.bf16.xpose.msra.mxu0 0
  %452 = vmatprep.subr.bf16.mxu0 0
  %453 = vmatpush1.bf16.xpose.msra.mxu0 0
  %454 = vmatprep.subr.bf16.mxu0 0
  %455 = vmatpush1.bf16.xpose.msra.mxu0 0
  %456 = vmatprep.subr.bf16.mxu0 0
  %457 = vmatpush1.bf16.xpose.msra.mxu0 0
  %458 = vmatprep.subr.bf16.mxu0 0
  %459 = vmatpush1.bf16.xpose.msra.mxu0 0
  %460 = vmatprep.subr.bf16.mxu0 0
  %461 = vmatpush1.bf16.xpose.msra.mxu0 0
  %462 = vmatprep.subr.bf16.mxu0 0
  %463 = vmatpush1.bf16.xpose.msra.mxu0 0
  %464 = vmatprep.mubr.bf16.mxu0 0
  %465 = vmatmul.mubr.bf16.gmra.mrb[0].mxu0 %v427
  %v466 = vpop.f32.mrb[0].mxu0
  %v467 = vadd.f32 0.0, %v466
  %v468 = vpop.f32.mrb[0].mxu0
  %v469 = vpop.f32.mrb[0].mxu0
  %v470 = vpop.f32.mrb[0].mxu0
  %471 = vdwg.mxu0
  %v472 = vmul.f32 %v467, 0.125
  %v473 = vsel %vm360, %v472, -inf
  %474 = vmax.xlane.f32.xlu0 %v473
  %v475 = vpop.xlane.xlu0 %474
  %v476 = vsub.f32 %v472, %v475
  %v477 = vmul.f32 %v476, 1.442695
  %v478 = vpow.pop %v477
  %v479 = vsel %vm360, %v478, 0.0
  %480 = vadd.xlane.f32.xlu0 %v479
  %v481 = vpop.xlane.xlu0 %480
  %v482 = vrcp.pop %v481
  %v483 = vmul.f32 %v478, %v482
  %v484 = vpack.c.bf16 %v483, %v483
  %486 = vrot.lane.b32.xlu0 %v311, 64
  %v487 = vpop.permute.xlu0 %486
  %v489 = vsel %vm360, %v484, 0
  %v492 = vsel %vm376, %v487, 0
  %494 = vmatprep.subr.bf16.mxu0 0
  %495 = vmatpush1.bf16.msra.mxu0 %v492
  %496 = vmatprep.subr.bf16.mxu0 0
  %497 = vmatpush1.bf16.msra.mxu0 0
  %498 = vmatprep.subr.bf16.mxu0 0
  %499 = vmatpush1.bf16.msra.mxu0 0
  %500 = vmatprep.subr.bf16.mxu0 0
  %501 = vmatpush1.bf16.msra.mxu0 0
  %502 = vmatprep.subr.bf16.mxu0 0
  %503 = vmatpush1.bf16.msra.mxu0 0
  %504 = vmatprep.subr.bf16.mxu0 0
  %505 = vmatpush1.bf16.msra.mxu0 0
  %506 = vmatprep.subr.bf16.mxu0 0
  %507 = vmatpush1.bf16.msra.mxu0 0
  %508 = vmatprep.subr.bf16.mxu0 0
  %509 = vmatpush1.bf16.msra.mxu0 0
  %510 = vmatprep.subr.bf16.mxu0 0
  %511 = vmatpush1.bf16.msra.mxu0 0
  %512 = vmatprep.subr.bf16.mxu0 0
  %513 = vmatpush1.bf16.msra.mxu0 0
  %514 = vmatprep.subr.bf16.mxu0 0
  %515 = vmatpush1.bf16.msra.mxu0 0
  %516 = vmatprep.subr.bf16.mxu0 0
  %517 = vmatpush1.bf16.msra.mxu0 0
  %518 = vmatprep.subr.bf16.mxu0 0
  %519 = vmatpush1.bf16.msra.mxu0 0
  %520 = vmatprep.subr.bf16.mxu0 0
  %521 = vmatpush1.bf16.msra.mxu0 0
  %522 = vmatprep.subr.bf16.mxu0 0
  %523 = vmatpush1.bf16.msra.mxu0 0
  %524 = vmatprep.subr.bf16.mxu0 0
  %525 = vmatpush1.bf16.msra.mxu0 0
  %526 = vmatprep.mubr.bf16.mxu0 0
  %527 = vmatmul.mubr.bf16.gmra.mrb[0].mxu0 %v489
  %v528 = vpop.f32.mrb[0].mxu0
  %v529 = vadd.f32 0.0, %v528
  %v530 = vpop.f32.mrb[0].mxu0
  %v531 = vpop.f32.mrb[0].mxu0
  %v532 = vpop.f32.mrb[0].mxu0
  %533 = vdwg.mxu0
  %535 = vrot.lane.b32.xlu0 %v529, 64
  %v536 = vpop.permute.xlu0 %535
  %v538 = vsel %vm312, %v415, %v536
  %v539 = vpack.c.bf16 %v264, %v264
  %v540 = vpack.c.bf16 %v266, %v266
  %v541 = vpack.c.bf16 %v306, %v306
  %v543 = vsel %vm312, %v539, 0
  %v546 = vsel %vm312, %v540, 0
  %548 = vmatprep.subr.bf16.mxu0 0
  %549 = vmatpush1.bf16.xpose.msra.mxu0 %v546
  %550 = vmatprep.subr.bf16.mxu0 0
  %551 = vmatpush1.bf16.xpose.msra.mxu0 0
  %552 = vmatprep.subr.bf16.mxu0 0
  %553 = vmatpush1.bf16.xpose.msra.mxu0 0
  %554 = vmatprep.subr.bf16.mxu0 0
  %555 = vmatpush1.bf16.xpose.msra.mxu0 0
  %556 = vmatprep.subr.bf16.mxu0 0
  %557 = vmatpush1.bf16.xpose.msra.mxu0 0
  %558 = vmatprep.subr.bf16.mxu0 0
  %559 = vmatpush1.bf16.xpose.msra.mxu0 0
  %560 = vmatprep.subr.bf16.mxu0 0
  %561 = vmatpush1.bf16.xpose.msra.mxu0 0
  %562 = vmatprep.subr.bf16.mxu0 0
  %563 = vmatpush1.bf16.xpose.msra.mxu0 0
  %564 = vmatprep.subr.bf16.mxu0 0
  %565 = vmatpush1.bf16.xpose.msra.mxu0 0
  %566 = vmatprep.subr.bf16.mxu0 0
  %567 = vmatpush1.bf16.xpose.msra.mxu0 0
  %568 = vmatprep.subr.bf16.mxu0 0
  %569 = vmatpush1.bf16.xpose.msra.mxu0 0
  %570 = vmatprep.subr.bf16.mxu0 0
  %571 = vmatpush1.bf16.xpose.msra.mxu0 0
  %572 = vmatprep.subr.bf16.mxu0 0
  %573 = vmatpush1.bf16.xpose.msra.mxu0 0
  %574 = vmatprep.subr.bf16.mxu0 0
  %575 = vmatpush1.bf16.xpose.msra.mxu0 0
  %576 = vmatprep.subr.bf16.mxu0 0
  %577 = vmatpush1.bf16.xpose.msra.mxu0 0
  %578 = vmatprep.subr.bf16.mxu0 0
  %579 = vmatpush1.bf16.xpose.msra.mxu0 0
  %580 = vmatprep.mubr.bf16.mxu0 0
  %581 = vmatmul.mubr.bf16.gmra.mrb[0].mxu0 %v543
  %v582 = vpop.f32.mrb[0].mxu0
  %v583 = vadd.f32 0.0, %v582
  %v584 = vpop.f32.mrb[0].mxu0
  %v585 = vpop.f32.mrb[0].mxu0
  %v586 = vpop.f32.mrb[0].mxu0
  %587 = vdwg.mxu0
  %v588 = vmul.f32 %v583, 0.125
  %v589 = vsel %vm360, %v588, -inf
  %590 = vmax.xlane.f32.xlu0 %v589
  %v591 = vpop.xlane.xlu0 %590
  %v592 = vsub.f32 %v588, %v591
  %v593 = vmul.f32 %v592, 1.442695
  %v594 = vpow.pop %v593
  %v595 = vsel %vm360, %v594, 0.0
  %596 = vadd.xlane.f32.xlu0 %v595
  %v597 = vpop.xlane.xlu0 %596
  %v598 = vrcp.pop %v597
  %v599 = vmul.f32 %v594, %v598
  %v600 = vpack.c.bf16 %v599, %v599
  %v602 = vsel %vm360, %v600, 0
  %v605 = vsel %vm376, %v541, 0
  %607 = vmatprep.subr.bf16.mxu0 0
  %608 = vmatpush1.bf16.msra.mxu0 %v605
  %609 = vmatprep.subr.bf16.mxu0 0
  %610 = vmatpush1.bf16.msra.mxu0 0
  %611 = vmatprep.subr.bf16.mxu0 0
  %612 = vmatpush1.bf16.msra.mxu0 0
  %613 = vmatprep.subr.bf16.mxu0 0
  %614 = vmatpush1.bf16.msra.mxu0 0
  %615 = vmatprep.subr.bf16.mxu0 0
  %616 = vmatpush1.bf16.msra.mxu0 0
  %617 = vmatprep.subr.bf16.mxu0 0
  %618 = vmatpush1.bf16.msra.mxu0 0
  %619 = vmatprep.subr.bf16.mxu0 0
  %620 = vmatpush1.bf16.msra.mxu0 0
  %621 = vmatprep.subr.bf16.mxu0 0
  %622 = vmatpush1.bf16.msra.mxu0 0
  %623 = vmatprep.subr.bf16.mxu0 0
  %624 = vmatpush1.bf16.msra.mxu0 0
  %625 = vmatprep.subr.bf16.mxu0 0
  %626 = vmatpush1.bf16.msra.mxu0 0
  %627 = vmatprep.subr.bf16.mxu0 0
  %628 = vmatpush1.bf16.msra.mxu0 0
  %629 = vmatprep.subr.bf16.mxu0 0
  %630 = vmatpush1.bf16.msra.mxu0 0
  %631 = vmatprep.subr.bf16.mxu0 0
  %632 = vmatpush1.bf16.msra.mxu0 0
  %633 = vmatprep.subr.bf16.mxu0 0
  %634 = vmatpush1.bf16.msra.mxu0 0
  %635 = vmatprep.subr.bf16.mxu0 0
  %636 = vmatpush1.bf16.msra.mxu0 0
  %637 = vmatprep.subr.bf16.mxu0 0
  %638 = vmatpush1.bf16.msra.mxu0 0
  %639 = vmatprep.mubr.bf16.mxu0 0
  %640 = vmatmul.mubr.bf16.gmra.mrb[0].mxu0 %v602
  %v641 = vpop.f32.mrb[0].mxu0
  %v642 = vadd.f32 0.0, %v641
  %v643 = vpop.f32.mrb[0].mxu0
  %v644 = vpop.f32.mrb[0].mxu0
  %v645 = vpop.f32.mrb[0].mxu0
  %646 = vdwg.mxu0
  %648 = vrot.lane.b32.xlu0 %v539, 64
  %v649 = vpop.permute.xlu0 %648
  %651 = vrot.lane.b32.xlu0 %v540, 64
  %v652 = vpop.permute.xlu0 %651
  %v654 = vsel %vm312, %v649, 0
  %v657 = vsel %vm312, %v652, 0
  %659 = vmatprep.subr.bf16.mxu0 0
  %660 = vmatpush1.bf16.xpose.msra.mxu0 %v657
  %661 = vmatprep.subr.bf16.mxu0 0
  %662 = vmatpush1.bf16.xpose.msra.mxu0 0
  %663 = vmatprep.subr.bf16.mxu0 0
  %664 = vmatpush1.bf16.xpose.msra.mxu0 0
  %665 = vmatprep.subr.bf16.mxu0 0
  %666 = vmatpush1.bf16.xpose.msra.mxu0 0
  %667 = vmatprep.subr.bf16.mxu0 0
  %668 = vmatpush1.bf16.xpose.msra.mxu0 0
  %669 = vmatprep.subr.bf16.mxu0 0
  %670 = vmatpush1.bf16.xpose.msra.mxu0 0
  %671 = vmatprep.subr.bf16.mxu0 0
  %672 = vmatpush1.bf16.xpose.msra.mxu0 0
  %673 = vmatprep.subr.bf16.mxu0 0
  %674 = vmatpush1.bf16.xpose.msra.mxu0 0
  %675 = vmatprep.subr.bf16.mxu0 0
  %676 = vmatpush1.bf16.xpose.msra.mxu0 0
  %677 = vmatprep.subr.bf16.mxu0 0
  %678 = vmatpush1.bf16.xpose.msra.mxu0 0
  %679 = vmatprep.subr.bf16.mxu0 0
  %680 = vmatpush1.bf16.xpose.msra.mxu0 0
  %681 = vmatprep.subr.bf16.mxu0 0
  %682 = vmatpush1.bf16.xpose.msra.mxu0 0
  %683 = vmatprep.subr.bf16.mxu0 0
  %684 = vmatpush1.bf16.xpose.msra.mxu0 0
  %685 = vmatprep.subr.bf16.mxu0 0
  %686 = vmatpush1.bf16.xpose.msra.mxu0 0
  %687 = vmatprep.subr.bf16.mxu0 0
  %688 = vmatpush1.bf16.xpose.msra.mxu0 0
  %689 = vmatprep.subr.bf16.mxu0 0
  %690 = vmatpush1.bf16.xpose.msra.mxu0 0
  %691 = vmatprep.mubr.bf16.mxu0 0
  %692 = vmatmul.mubr.bf16.gmra.mrb[0].mxu0 %v654
  %v693 = vpop.f32.mrb[0].mxu0
  %v694 = vadd.f32 0.0, %v693
  %v695 = vpop.f32.mrb[0].mxu0
  %v696 = vpop.f32.mrb[0].mxu0
  %v697 = vpop.f32.mrb[0].mxu0
  %698 = vdwg.mxu0
  %v699 = vmul.f32 %v694, 0.125
  %v700 = vsel %vm360, %v699, -inf
  %701 = vmax.xlane.f32.xlu0 %v700
  %v702 = vpop.xlane.xlu0 %701
  %v703 = vsub.f32 %v699, %v702
  %v704 = vmul.f32 %v703, 1.442695
  %v705 = vpow.pop %v704
  %v706 = vsel %vm360, %v705, 0.0
  %707 = vadd.xlane.f32.xlu0 %v706
  %v708 = vpop.xlane.xlu0 %707
  %v709 = vrcp.pop %v708
  %v710 = vmul.f32 %v705, %v709
  %v711 = vpack.c.bf16 %v710, %v710
  %713 = vrot.lane.b32.xlu0 %v541, 64
  %v714 = vpop.permute.xlu0 %713
  %v716 = vsel %vm360, %v711, 0
  %v719 = vsel %vm376, %v714, 0
  %721 = vmatprep.subr.bf16.mxu0 0
  %722 = vmatpush1.bf16.msra.mxu0 %v719
  %723 = vmatprep.subr.bf16.mxu0 0
  %724 = vmatpush1.bf16.msra.mxu0 0
  %725 = vmatprep.subr.bf16.mxu0 0
  %726 = vmatpush1.bf16.msra.mxu0 0
  %727 = vmatprep.subr.bf16.mxu0 0
  %728 = vmatpush1.bf16.msra.mxu0 0
  %729 = vmatprep.subr.bf16.mxu0 0
  %730 = vmatpush1.bf16.msra.mxu0 0
  %731 = vmatprep.subr.bf16.mxu0 0
  %732 = vmatpush1.bf16.msra.mxu0 0
  %733 = vmatprep.subr.bf16.mxu0 0
  %734 = vmatpush1.bf16.msra.mxu0 0
  %735 = vmatprep.subr.bf16.mxu0 0
  %736 = vmatpush1.bf16.msra.mxu0 0
  %737 = vmatprep.subr.bf16.mxu0 0
  %738 = vmatpush1.bf16.msra.mxu0 0
  %739 = vmatprep.subr.bf16.mxu0 0
  %740 = vmatpush1.bf16.msra.mxu0 0
  %741 = vmatprep.subr.bf16.mxu0 0
  %742 = vmatpush1.bf16.msra.mxu0 0
  %743 = vmatprep.subr.bf16.mxu0 0
  %744 = vmatpush1.bf16.msra.mxu0 0
  %745 = vmatprep.subr.bf16.mxu0 0
  %746 = vmatpush1.bf16.msra.mxu0 0
  %747 = vmatprep.subr.bf16.mxu0 0
  %748 = vmatpush1.bf16.msra.mxu0 0
  %749 = vmatprep.subr.bf16.mxu0 0
  %750 = vmatpush1.bf16.msra.mxu0 0
  %751 = vmatprep.subr.bf16.mxu0 0
  %752 = vmatpush1.bf16.msra.mxu0 0
  %753 = vmatprep.mubr.bf16.mxu0 0
  %754 = vmatmul.mubr.bf16.gmra.mrb[0].mxu0 %v716
  %v755 = vpop.f32.mrb[0].mxu0
  %v756 = vadd.f32 0.0, %v755
  %v757 = vpop.f32.mrb[0].mxu0
  %v758 = vpop.f32.mrb[0].mxu0
  %v759 = vpop.f32.mrb[0].mxu0
  %760 = vdwg.mxu0
  %762 = vrot.lane.b32.xlu0 %v756, 64
  %v763 = vpop.permute.xlu0 %762
  %v765 = vsel %vm312, %v642, %v763
  %v766 = vpack.c.bf16 %v765, %v538
  %v767 = vld [vmem:[%s3] sm:$0xf]
  %v768 = vld [vmem:[%s3 + $0x4] sm:$0xf]
  %v769 = vld [vmem:[%s3 + $0x8] sm:$0xf]
  %v770 = vld [vmem:[%s3 + $0xc] sm:$0xf]
  %v771 = vld [vmem:[%s3 + $0x10] sm:$0xf]
  %v772 = vld [vmem:[%s3 + $0x14] sm:$0xf]
  %v773 = vld [vmem:[%s3 + $0x18] sm:$0xf]
  %v774 = vld [vmem:[%s3 + $0x1c] sm:$0xf]
  %v775 = vld [vmem:[%s3 + $0x20] sm:$0xf]
  %v776 = vld [vmem:[%s3 + $0x24] sm:$0xf]
  %v777 = vld [vmem:[%s3 + $0x28] sm:$0xf]
  %v778 = vld [vmem:[%s3 + $0x2c] sm:$0xf]
  %v779 = vld [vmem:[%s3 + $0x30] sm:$0xf]
  %v780 = vld [vmem:[%s3 + $0x34] sm:$0xf]
  %v781 = vld [vmem:[%s3 + $0x38] sm:$0xf]
  %v782 = vld [vmem:[%s3 + $0x3c] sm:$0xf]
  %v783 = vld [vmem:[%s4] sm:$0x1]
  %v785 = vlaneseq
  %v786 = vshrl.u32 %v785, 7
  %v787 = vsub.s32 0, %v786
  %v788 = vrot.slane %v783, %v787
  %v806 = vunpack.c.l.b16 %v767
  %v807 = vunpack.c.l.b16 %v768
  %v808 = vunpack.c.l.b16 %v769
  %v809 = vunpack.c.l.b16 %v770
  %v810 = vunpack.c.l.b16 %v771
  %v811 = vunpack.c.l.b16 %v772
  %v812 = vunpack.c.l.b16 %v773
  %v813 = vunpack.c.l.b16 %v774
  %v814 = vunpack.c.l.b16 %v775
  %v815 = vunpack.c.l.b16 %v776
  %v816 = vunpack.c.l.b16 %v777
  %v817 = vunpack.c.l.b16 %v778
  %v818 = vunpack.c.l.b16 %v779
  %v819 = vunpack.c.l.b16 %v780
  %v820 = vunpack.c.l.b16 %v781
  %v821 = vunpack.c.l.b16 %v782
  %v822 = vpack.c.b16 %v807, %v806
  %v823 = vpack.c.b16 %v809, %v808
  %v824 = vpack.c.b16 %v811, %v810
  %v825 = vpack.c.b16 %v813, %v812
  %v826 = vpack.c.b16 %v815, %v814
  %v827 = vpack.c.b16 %v817, %v816
  %v828 = vpack.c.b16 %v819, %v818
  %v829 = vpack.c.b16 %v821, %v820
  %838 = vmatprep.subr.bf16.mxu0 0
  %839 = vmatpush1.bf16.msra.mxu0 %v822
  %840 = vmatprep.subr.bf16.mxu0 0
  %841 = vmatpush1.bf16.msra.mxu0 %v823
  %842 = vmatprep.subr.bf16.mxu0 0
  %843 = vmatpush1.bf16.msra.mxu0 %v824
  %844 = vmatprep.subr.bf16.mxu0 0
  %845 = vmatpush1.bf16.msra.mxu0 %v825
  %846 = vmatprep.subr.bf16.mxu0 0
  %847 = vmatpush1.bf16.msra.mxu0 %v826
  %848 = vmatprep.subr.bf16.mxu0 0
  %849 = vmatpush1.bf16.msra.mxu0 %v827
  %850 = vmatprep.subr.bf16.mxu0 0
  %851 = vmatpush1.bf16.msra.mxu0 %v828
  %852 = vmatprep.subr.bf16.mxu0 0
  %853 = vmatpush1.bf16.msra.mxu0 %v829
  %854 = vmatprep.subr.bf16.mxu0 0
  %855 = vmatpush1.bf16.msra.mxu0 0
  %856 = vmatprep.subr.bf16.mxu0 0
  %857 = vmatpush1.bf16.msra.mxu0 0
  %858 = vmatprep.subr.bf16.mxu0 0
  %859 = vmatpush1.bf16.msra.mxu0 0
  %860 = vmatprep.subr.bf16.mxu0 0
  %861 = vmatpush1.bf16.msra.mxu0 0
  %862 = vmatprep.subr.bf16.mxu0 0
  %863 = vmatpush1.bf16.msra.mxu0 0
  %864 = vmatprep.subr.bf16.mxu0 0
  %865 = vmatpush1.bf16.msra.mxu0 0
  %866 = vmatprep.subr.bf16.mxu0 0
  %867 = vmatpush1.bf16.msra.mxu0 0
  %868 = vmatprep.subr.bf16.mxu0 0
  %869 = vmatpush1.bf16.msra.mxu0 0
  %870 = vmatprep.mubr.bf16.mxu0 0
  %871 = vmatmul.mubr.bf16.gmra.mrb[0].mxu0 %v766
  %v872 = vpop.f32.mrb[0].mxu0
  %v873 = vadd.f32 %v788, %v872
  %v874 = vpop.f32.mrb[0].mxu0
  %v875 = vpop.f32.mrb[0].mxu0
  %v876 = vadd.f32 %v788, %v875
  %v877 = vpop.f32.mrb[0].mxu0
  %878 = vdwg.mxu0
  %v879 = vadd.f32 %v45, %v873
  %v880 = vadd.f32 %v46, %v876
  %v881 = vld [vmem:[%s5] sm:$0x1]
  %v882 = vld [vmem:[%s6] sm:$0x1]
  %883 = vadd.xlane.f32.xlu0 %v879
  %v884 = vpop.xlane.xlu0 %883
  %885 = vadd.xlane.f32.xlu0 %v880
  %v886 = vpop.xlane.xlu0 %885
  %v887 = vrcp.pop 128.0
  %v888 = vmul.f32 %v884, %v887
  %v889 = vmul.f32 %v886, %v887
  %v890 = vsub.f32 %v879, %v888
  %v891 = vsub.f32 %v880, %v889
  %v892 = vmul.f32 %v890, %v890
  %v893 = vmul.f32 %v891, %v891
  %894 = vadd.xlane.f32.xlu0 %v892
  %v895 = vpop.xlane.xlu0 %894
  %896 = vadd.xlane.f32.xlu0 %v893
  %v897 = vpop.xlane.xlu0 %896
  %v898 = vmul.f32 %v895, %v887
  %v899 = vmul.f32 %v897, %v887
  %v900 = vadd.f32 %v898, 1e-12
  %v901 = vadd.f32 %v899, 1e-12
  %v902 = vrsqrt.pop %v900
  %v903 = vrsqrt.pop %v901
  %v904 = vmul.f32 %v890, %v902
  %v905 = vmul.f32 %v891, %v903
  %v907 = vlaneseq
  %v908 = vshrl.u32 %v907, 7
  %v909 = vsub.s32 0, %v908
  %v910 = vrot.slane %v881, %v909
  %v912 = vmul.f32 %v904, %v910
  %v913 = vmul.f32 %v905, %v910
  %v915 = vlaneseq
  %v916 = vshrl.u32 %v915, 7
  %v917 = vsub.s32 0, %v916
  %v918 = vrot.slane %v882, %v917
  %v920 = vadd.f32 %v912, %v918
  %v921 = vadd.f32 %v913, %v918
  %v922 = vpack.c.bf16 %v921, %v920
  %v923 = vld [vmem:[%s7] sm:$0xff]
  %v924 = vld [vmem:[%s7 + $0x8] sm:$0xff]
  %v925 = vld [vmem:[%s7 + $0x10] sm:$0xff]
  %v926 = vld [vmem:[%s7 + $0x18] sm:$0xff]
  %v927 = vld [vmem:[%s7 + $0x20] sm:$0xff]
  %v928 = vld [vmem:[%s7 + $0x28] sm:$0xff]
  %v929 = vld [vmem:[%s7 + $0x30] sm:$0xff]
  %v930 = vld [vmem:[%s7 + $0x38] sm:$0xff]
  %v931 = vld [vmem:[%s7 + $0x40] sm:$0xff]
  %v932 = vld [vmem:[%s7 + $0x48] sm:$0xff]
  %v933 = vld [vmem:[%s7 + $0x50] sm:$0xff]
  %v934 = vld [vmem:[%s7 + $0x58] sm:$0xff]
  %v935 = vld [vmem:[%s7 + $0x60] sm:$0xff]
  %v936 = vld [vmem:[%s7 + $0x68] sm:$0xff]
  %v937 = vld [vmem:[%s7 + $0x70] sm:$0xff]
  %v938 = vld [vmem:[%s7 + $0x78] sm:$0xff]
  %v939 = vld [vmem:[%s8] sm:$0x3]
  %v941 = vlaneseq
  %v942 = vshrl.u32 %v941, 7
  %v943 = vsub.s32 0, %v942
  %v944 = vrot.slane %v939, %v943
  %v945 = vlaneseq
  %v946 = vshrl.u32 %v945, 7
  %v947 = vsub.s32 1, %v946
  %v948 = vrot.slane %v939, %v947
  %v967 = vunpack.c.l.b16 %v923
  %v968 = vunpack.c.h.b16 %v923
  %v969 = vunpack.c.l.b16 %v924
  %v970 = vunpack.c.h.b16 %v924
  %v971 = vunpack.c.l.b16 %v925
  %v972 = vunpack.c.h.b16 %v925
  %v973 = vunpack.c.l.b16 %v926
  %v974 = vunpack.c.h.b16 %v926
  %v975 = vunpack.c.l.b16 %v927
  %v976 = vunpack.c.h.b16 %v927
  %v977 = vunpack.c.l.b16 %v928
  %v978 = vunpack.c.h.b16 %v928
  %v979 = vunpack.c.l.b16 %v929
  %v980 = vunpack.c.h.b16 %v929
  %v981 = vunpack.c.l.b16 %v930
  %v982 = vunpack.c.h.b16 %v930
  %v983 = vunpack.c.l.b16 %v931
  %v984 = vunpack.c.h.b16 %v931
  %v985 = vunpack.c.l.b16 %v932
  %v986 = vunpack.c.h.b16 %v932
  %v987 = vunpack.c.l.b16 %v933
  %v988 = vunpack.c.h.b16 %v933
  %v989 = vunpack.c.l.b16 %v934
  %v990 = vunpack.c.h.b16 %v934
  %v991 = vunpack.c.l.b16 %v935
  %v992 = vunpack.c.h.b16 %v935
  %v993 = vunpack.c.l.b16 %v936
  %v994 = vunpack.c.h.b16 %v936
  %v995 = vunpack.c.l.b16 %v937
  %v996 = vunpack.c.h.b16 %v937
  %v997 = vunpack.c.l.b16 %v938
  %v998 = vunpack.c.h.b16 %v938
  %v999 = vpack.c.b16 %v969, %v967
  %v1000 = vpack.c.b16 %v970, %v968
  %v1001 = vpack.c.b16 %v973, %v971
  %v1002 = vpack.c.b16 %v974, %v972
  %v1003 = vpack.c.b16 %v977, %v975
  %v1004 = vpack.c.b16 %v978, %v976
  %v1005 = vpack.c.b16 %v981, %v979
  %v1006 = vpack.c.b16 %v982, %v980
  %v1007 = vpack.c.b16 %v985, %v983
  %v1008 = vpack.c.b16 %v986, %v984
  %v1009 = vpack.c.b16 %v989, %v987
  %v1010 = vpack.c.b16 %v990, %v988
  %v1011 = vpack.c.b16 %v993, %v991
  %v1012 = vpack.c.b16 %v994, %v992
  %v1013 = vpack.c.b16 %v997, %v995
  %v1014 = vpack.c.b16 %v998, %v996
  %1031 = vmatprep.subr.bf16.mxu0 %v1000
  %1032 = vmatpush1.bf16.msra.mxu0 %v999
  %1033 = vmatprep.subr.bf16.mxu0 %v1002
  %1034 = vmatpush1.bf16.msra.mxu0 %v1001
  %1035 = vmatprep.subr.bf16.mxu0 %v1004
  %1036 = vmatpush1.bf16.msra.mxu0 %v1003
  %1037 = vmatprep.subr.bf16.mxu0 %v1006
  %1038 = vmatpush1.bf16.msra.mxu0 %v1005
  %1039 = vmatprep.subr.bf16.mxu0 %v1008
  %1040 = vmatpush1.bf16.msra.mxu0 %v1007
  %1041 = vmatprep.subr.bf16.mxu0 %v1010
  %1042 = vmatpush1.bf16.msra.mxu0 %v1009
  %1043 = vmatprep.subr.bf16.mxu0 %v1012
  %1044 = vmatpush1.bf16.msra.mxu0 %v1011
  %1045 = vmatprep.subr.bf16.mxu0 %v1014
  %1046 = vmatpush1.bf16.msra.mxu0 %v1013
  %1047 = vmatprep.subr.bf16.mxu0 0
  %1048 = vmatpush1.bf16.msra.mxu0 0
  %1049 = vmatprep.subr.bf16.mxu0 0
  %1050 = vmatpush1.bf16.msra.mxu0 0
  %1051 = vmatprep.subr.bf16.mxu0 0
  %1052 = vmatpush1.bf16.msra.mxu0 0
  %1053 = vmatprep.subr.bf16.mxu0 0
  %1054 = vmatpush1.bf16.msra.mxu0 0
  %1055 = vmatprep.subr.bf16.mxu0 0
  %1056 = vmatpush1.bf16.msra.mxu0 0
  %1057 = vmatprep.subr.bf16.mxu0 0
  %1058 = vmatpush1.bf16.msra.mxu0 0
  %1059 = vmatprep.subr.bf16.mxu0 0
  %1060 = vmatpush1.bf16.msra.mxu0 0
  %1061 = vmatprep.subr.bf16.mxu0 0
  %1062 = vmatpush1.bf16.msra.mxu0 0
  %1063 = vmatprep.mubr.bf16.mxu0 0
  %1064 = vmatmul.mubr.bf16.gmra.mrb[0].mxu0 %v922
  %v1065 = vpop.f32.mrb[0].mxu0
  %v1066 = vadd.f32 %v944, %v1065
  %v1067 = vpop.f32.mrb[0].mxu0
  %v1068 = vadd.f32 %v948, %v1067
  %v1069 = vpop.f32.mrb[0].mxu0
  %v1070 = vadd.f32 %v944, %v1069
  %v1071 = vpop.f32.mrb[0].mxu0
  %v1072 = vadd.f32 %v948, %v1071
  %1073 = vdwg.mxu0
  %v1074 = vmul.f32 %v1066, 0.5
  %v1075 = vmul.f32 %v1068, 0.5
  %v1076 = vmul.f32 %v1070, 0.5
  %v1077 = vmul.f32 %v1072, 0.5
  %v1078 = vmul.f32 %v1066, 0.044715
  %v1079 = vmul.f32 %v1068, 0.044715
  %v1080 = vmul.f32 %v1070, 0.044715
  %v1081 = vmul.f32 %v1072, 0.044715
  %v1082 = vmul.f32 %v1078, %v1066
  %v1083 = vmul.f32 %v1079, %v1068
  %v1084 = vmul.f32 %v1080, %v1070
  %v1085 = vmul.f32 %v1081, %v1072
  %v1086 = vmul.f32 %v1082, %v1066
  %v1087 = vmul.f32 %v1083, %v1068
  %v1088 = vmul.f32 %v1084, %v1070
  %v1089 = vmul.f32 %v1085, %v1072
  %v1090 = vadd.f32 %v1066, %v1086
  %v1091 = vadd.f32 %v1068, %v1087
  %v1092 = vadd.f32 %v1070, %v1088
  %v1093 = vadd.f32 %v1072, %v1089
  %v1094 = vmul.f32 %v1090, 0.7978846
  %v1095 = vmul.f32 %v1091, 0.7978846
  %v1096 = vmul.f32 %v1092, 0.7978846
  %v1097 = vmul.f32 %v1093, 0.7978846
  %v1098 = vtanh.pop %v1094
  %v1099 = vtanh.pop %v1095
  %v1100 = vtanh.pop %v1096
  %v1101 = vtanh.pop %v1097
  %v1102 = vadd.f32 %v1098, 1.0
  %v1103 = vadd.f32 %v1099, 1.0
  %v1104 = vadd.f32 %v1100, 1.0
  %v1105 = vadd.f32 %v1101, 1.0
  %v1106 = vmul.f32 %v1074, %v1102
  %v1107 = vmul.f32 %v1075, %v1103
  %v1108 = vmul.f32 %v1076, %v1104
  %v1109 = vmul.f32 %v1077, %v1105
  %v1110 = vpack.c.bf16 %v1108, %v1106
  %v1111 = vpack.c.bf16 %v1109, %v1107
  %v1112 = vld [vmem:[%s9] sm:$0xf]
  %v1113 = vld [vmem:[%s9 + $0x4] sm:$0xf]
  %v1114 = vld [vmem:[%s9 + $0x8] sm:$0xf]
  %v1115 = vld [vmem:[%s9 + $0xc] sm:$0xf]
  %v1116 = vld [vmem:[%s9 + $0x10] sm:$0xf]
  %v1117 = vld [vmem:[%s9 + $0x14] sm:$0xf]
  %v1118 = vld [vmem:[%s9 + $0x18] sm:$0xf]
  %v1119 = vld [vmem:[%s9 + $0x1c] sm:$0xf]
  %v1120 = vld [vmem:[%s9 + $0x20] sm:$0xf]
  %v1121 = vld [vmem:[%s9 + $0x24] sm:$0xf]
  %v1122 = vld [vmem:[%s9 + $0x28] sm:$0xf]
  %v1123 = vld [vmem:[%s9 + $0x2c] sm:$0xf]
  %v1124 = vld [vmem:[%s9 + $0x30] sm:$0xf]
  %v1125 = vld [vmem:[%s9 + $0x34] sm:$0xf]
  %v1126 = vld [vmem:[%s9 + $0x38] sm:$0xf]
  %v1127 = vld [vmem:[%s9 + $0x3c] sm:$0xf]
  %v1128 = vld [vmem:[%s9 + $0x40] sm:$0xf]
  %v1129 = vld [vmem:[%s9 + $0x44] sm:$0xf]
  %v1130 = vld [vmem:[%s9 + $0x48] sm:$0xf]
  %v1131 = vld [vmem:[%s9 + $0x4c] sm:$0xf]
  %v1132 = vld [vmem:[%s9 + $0x50] sm:$0xf]
  %v1133 = vld [vmem:[%s9 + $0x54] sm:$0xf]
  %v1134 = vld [vmem:[%s9 + $0x58] sm:$0xf]
  %v1135 = vld [vmem:[%s9 + $0x5c] sm:$0xf]
  %v1136 = vld [vmem:[%s9 + $0x60] sm:$0xf]
  %v1137 = vld [vmem:[%s9 + $0x64] sm:$0xf]
  %v1138 = vld [vmem:[%s9 + $0x68] sm:$0xf]
  %v1139 = vld [vmem:[%s9 + $0x6c] sm:$0xf]
  %v1140 = vld [vmem:[%s9 + $0x70] sm:$0xf]
  %v1141 = vld [vmem:[%s9 + $0x74] sm:$0xf]
  %v1142 = vld [vmem:[%s9 + $0x78] sm:$0xf]
  %v1143 = vld [vmem:[%s9 + $0x7c] sm:$0xf]
  %v1144 = vld [vmem:[%s10] sm:$0x1]
  %v1146 = vlaneseq
  %v1147 = vshrl.u32 %v1146, 7
  %v1148 = vsub.s32 0, %v1147
  %v1149 = vrot.slane %v1144, %v1148
  %v1183 = vunpack.c.l.b16 %v1112
  %v1184 = vunpack.c.l.b16 %v1113
  %v1185 = vunpack.c.l.b16 %v1114
  %v1186 = vunpack.c.l.b16 %v1115
  %v1187 = vunpack.c.l.b16 %v1116
  %v1188 = vunpack.c.l.b16 %v1117
  %v1189 = vunpack.c.l.b16 %v1118
  %v1190 = vunpack.c.l.b16 %v1119
  %v1191 = vunpack.c.l.b16 %v1120
  %v1192 = vunpack.c.l.b16 %v1121
  %v1193 = vunpack.c.l.b16 %v1122
  %v1194 = vunpack.c.l.b16 %v1123
  %v1195 = vunpack.c.l.b16 %v1124
  %v1196 = vunpack.c.l.b16 %v1125
  %v1197 = vunpack.c.l.b16 %v1126
  %v1198 = vunpack.c.l.b16 %v1127
  %v1199 = vunpack.c.l.b16 %v1128
  %v1200 = vunpack.c.l.b16 %v1129
  %v1201 = vunpack.c.l.b16 %v1130
  %v1202 = vunpack.c.l.b16 %v1131
  %v1203 = vunpack.c.l.b16 %v1132
  %v1204 = vunpack.c.l.b16 %v1133
  %v1205 = vunpack.c.l.b16 %v1134
  %v1206 = vunpack.c.l.b16 %v1135
  %v1207 = vunpack.c.l.b16 %v1136
  %v1208 = vunpack.c.l.b16 %v1137
  %v1209 = vunpack.c.l.b16 %v1138
  %v1210 = vunpack.c.l.b16 %v1139
  %v1211 = vunpack.c.l.b16 %v1140
  %v1212 = vunpack.c.l.b16 %v1141
  %v1213 = vunpack.c.l.b16 %v1142
  %v1214 = vunpack.c.l.b16 %v1143
  %v1215 = vpack.c.b16 %v1184, %v1183
  %v1216 = vpack.c.b16 %v1186, %v1185
  %v1217 = vpack.c.b16 %v1188, %v1187
  %v1218 = vpack.c.b16 %v1190, %v1189
  %v1219 = vpack.c.b16 %v1192, %v1191
  %v1220 = vpack.c.b16 %v1194, %v1193
  %v1221 = vpack.c.b16 %v1196, %v1195
  %v1222 = vpack.c.b16 %v1198, %v1197
  %v1223 = vpack.c.b16 %v1200, %v1199
  %v1224 = vpack.c.b16 %v1202, %v1201
  %v1225 = vpack.c.b16 %v1204, %v1203
  %v1226 = vpack.c.b16 %v1206, %v1205
  %v1227 = vpack.c.b16 %v1208, %v1207
  %v1228 = vpack.c.b16 %v1210, %v1209
  %v1229 = vpack.c.b16 %v1212, %v1211
  %v1230 = vpack.c.b16 %v1214, %v1213
  %1247 = vmatprep.subr.bf16.mxu0 0
  %1248 = vmatpush1.bf16.msra.mxu0 %v1215
  %1249 = vmatprep.subr.bf16.mxu0 0
  %1250 = vmatpush1.bf16.msra.mxu0 %v1216
  %1251 = vmatprep.subr.bf16.mxu0 0
  %1252 = vmatpush1.bf16.msra.mxu0 %v1217
  %1253 = vmatprep.subr.bf16.mxu0 0
  %1254 = vmatpush1.bf16.msra.mxu0 %v1218
  %1255 = vmatprep.subr.bf16.mxu0 0
  %1256 = vmatpush1.bf16.msra.mxu0 %v1219
  %1257 = vmatprep.subr.bf16.mxu0 0
  %1258 = vmatpush1.bf16.msra.mxu0 %v1220
  %1259 = vmatprep.subr.bf16.mxu0 0
  %1260 = vmatpush1.bf16.msra.mxu0 %v1221
  %1261 = vmatprep.subr.bf16.mxu0 0
  %1262 = vmatpush1.bf16.msra.mxu0 %v1222
  %1263 = vmatprep.subr.bf16.mxu0 0
  %1264 = vmatpush1.bf16.msra.mxu0 %v1223
  %1265 = vmatprep.subr.bf16.mxu0 0
  %1266 = vmatpush1.bf16.msra.mxu0 %v1224
  %1267 = vmatprep.subr.bf16.mxu0 0
  %1268 = vmatpush1.bf16.msra.mxu0 %v1225
  %1269 = vmatprep.subr.bf16.mxu0 0
  %1270 = vmatpush1.bf16.msra.mxu0 %v1226
  %1271 = vmatprep.subr.bf16.mxu0 0
  %1272 = vmatpush1.bf16.msra.mxu0 %v1227
  %1273 = vmatprep.subr.bf16.mxu0 0
  %1274 = vmatpush1.bf16.msra.mxu0 %v1228
  %1275 = vmatprep.subr.bf16.mxu0 0
  %1276 = vmatpush1.bf16.msra.mxu0 %v1229
  %1277 = vmatprep.subr.bf16.mxu0 0
  %1278 = vmatpush1.bf16.msra.mxu0 %v1230
  %1279 = vmatprep.mubr.bf16.mxu0 %v1111
  %1280 = vmatmul.mubr.bf16.gmra.mrb[0].mxu0 %v1110
  %v1281 = vpop.f32.mrb[0].mxu0
  %v1282 = vadd.f32 %v1149, %v1281
  %v1283 = vpop.f32.mrb[0].mxu0
  %v1284 = vpop.f32.mrb[0].mxu0
  %v1285 = vadd.f32 %v1149, %v1284
  %v1286 = vpop.f32.mrb[0].mxu0
  %1287 = vdwg.mxu0
  %v1288 = vadd.f32 %v920, %v1282
  %v1289 = vadd.f32 %v921, %v1285
  %v1290 = vld [vmem:[%s11] sm:$0x1]
  %v1291 = vld [vmem:[%s12] sm:$0x1]
  %1292 = vadd.xlane.f32.xlu0 %v1288
  %v1293 = vpop.xlane.xlu0 %1292
  %1294 = vadd.xlane.f32.xlu0 %v1289
  %v1295 = vpop.xlane.xlu0 %1294
  %v1296 = vmul.f32 %v1293, %v887
  %v1297 = vmul.f32 %v1295, %v887
  %v1298 = vsub.f32 %v1288, %v1296
  %v1299 = vsub.f32 %v1289, %v1297
  %v1300 = vmul.f32 %v1298, %v1298
  %v1301 = vmul.f32 %v1299, %v1299
  %1302 = vadd.xlane.f32.xlu0 %v1300
  %v1303 = vpop.xlane.xlu0 %1302
  %1304 = vadd.xlane.f32.xlu0 %v1301
  %v1305 = vpop.xlane.xlu0 %1304
  %v1306 = vmul.f32 %v1303, %v887
  %v1307 = vmul.f32 %v1305, %v887
  %v1308 = vadd.f32 %v1306, 1e-12
  %v1309 = vadd.f32 %v1307, 1e-12
  %v1310 = vrsqrt.pop %v1308
  %v1311 = vrsqrt.pop %v1309
  %v1312 = vmul.f32 %v1298, %v1310
  %v1313 = vmul.f32 %v1299, %v1311
  %v1315 = vlaneseq
  %v1316 = vshrl.u32 %v1315, 7
  %v1317 = vsub.s32 0, %v1316
  %v1318 = vrot.slane %v1290, %v1317
  %v1320 = vmul.f32 %v1312, %v1318
  %v1321 = vmul.f32 %v1313, %v1318
  %v1323 = vlaneseq
  %v1324 = vshrl.u32 %v1323, 7
  %v1325 = vsub.s32 0, %v1324
  %v1326 = vrot.slane %v1291, %v1325
  %v1328 = vadd.f32 %v1320, %v1326
  %v1329 = vadd.f32 %v1321, %v1326
  %1330 = vst [vmem:[%s13] sm:$0xff] %v1328
  %1331 = vst [vmem:[%s13 + $0x8] sm:$0xff] %v1329
  // Predicated region
  $region54: #{language_model_forward.6} parent=0 // pred_check
    _
  $region55: #{language_model_forward.6} parent=0 // pred_check_branch
    %1333 = sbr.rel (0) target = $region57
  $region56: #{language_model_forward.6} parent=0 // pred_region
    _
  $region57: #{language_model_forward.6} parent=0 // pred_fallthru
    _
  // Predicated region
  $region58: #{language_model_forward.6} parent=0 // pred_check
    _
  $region59: #{language_model_forward.6} parent=0 // pred_check_branch
    %1335 = sbr.rel (0) target = $region61
  $region60: #{language_model_forward.6} parent=0 // pred_region
    _
  $region61: #{language_model_forward.6} parent=0 // pred_fallthru
    _

// kernel: language_model_forward.5
$region0: #{language_model_forward.5}
  #allocation0 [shape = 'u32[]', space=smem, size = 0x4, offset = 0x4, fixed_abs, tag = 'smem constant byte address 0x4 - core index']
  #allocation1 [shape = 'u32[144,128]{1,0:T(1,128)}', space=vmem, size = 0x12000, scoped, tag = 'internal scratch']
  %s0 = inlined_call_operand.vmem [shape: f32[16,128], index: 0, kind: input, shape index: {}]
  %s1 = inlined_call_operand.vmem [shape: bf16[128,384], index: 1, kind: input, shape index: {}]
  %s2 = inlined_call_operand.vmem [shape: f32[1,384], index: 2, kind: input, shape index: {}]
  %s3 = inlined_call_operand.vmem [shape: bf16[128,128], index: 3, kind: input, shape index: {}]
  %s4 = inlined_call_operand.vmem [shape: f32[1,128], index: 4, kind: input, shape index: {}]
  %s5 = inlined_call_operand.vmem [shape: f32[1,128], index: 5, kind: input, shape index: {}]
  %s6 = inlined_call_operand.vmem [shape: f32[1,128], index: 6, kind: input, shape index: {}]
  %s7 = inlined_call_operand.hbm [shape: bf16[128,256], index: 7, kind: input, shape index: {}]
  %s8 = inlined_call_operand.vmem [shape: f32[1,256], index: 8, kind: input, shape index: {}]
  %s9 = inlined_call_operand.hbm [shape: bf16[256,128], index: 9, kind: input, shape index: {}]
  %s10 = inlined_call_operand.vmem [shape: f32[1,128], index: 10, kind: input, shape index: {}]
  %s11 = inlined_call_operand.vmem [shape: f32[1,128], index: 11, kind: input, shape index: {}]
  %s12 = inlined_call_operand.vmem [shape: f32[1,128], index: 12, kind: input, shape index: {}]
  %s13 = inlined_call_operand.vmem [shape: f32[16,128], index: 13, kind: output, shape index: {}]
  %s14 = sld [smem:[#allocation0]]
  $region70: #{language_model_forward.5} parent=0
    _
  %s16 = ssub.s32 1, %s14
  %s17 = scalar_select 0, %s16, %s14
  $region1: #{language_model_forward.5} parent=0
    #allocation2 [shape = 'u8[65536]{0}', space=vmem, size = 0x10000, scoped, tag = 'input window, operand 7, single buffered']
    #allocation3 [shape = 's32[1]{0}', space=sflag, size = 0x4, scoped, tag = 'scoped memory for language_model_forward.5']
    #allocation4 [shape = 'u8[65536]{0}', space=vmem, size = 0x10000, scoped, tag = 'input window, operand 9, single buffered']
    #allocation5 [shape = 's32[1]{0}', space=sflag, size = 0x4, scoped, tag = 'scoped memory for language_model_forward.5']
    %18 = vsyncpa [#allocation3], 0
    %19 = vsyncpa [#allocation5], 0
    // Predicated region
    $region2: #{language_model_forward.5} parent=1 // pred_check
      _
    $region3: #{language_model_forward.5} parent=1 // pred_check_branch
      %21 = sbr.rel (0) target = $region5
    $region4: #{language_model_forward.5} parent=1 // pred_region
      _
    $region5: #{language_model_forward.5} parent=1 // pred_fallthru
      _
    // Predicated region
    $region6: #{language_model_forward.5} parent=1 // pred_check
      _
    $region7: #{language_model_forward.5} parent=1 // pred_check_branch
      %23 = sbr.rel (0) target = $region9
    $region8: #{language_model_forward.5} parent=1 // pred_region
      _
    $region9: #{language_model_forward.5} parent=1 // pred_fallthru
      _
    // Predicated region
    $region10: #{language_model_forward.5} parent=1 // pred_check
      _
    $region11: #{language_model_forward.5} parent=1 // pred_check_branch
      %25 = sbr.rel (0) target = $region13
    $region12: #{language_model_forward.5} parent=1 // pred_region
      _
    $region13: #{language_model_forward.5} parent=1 // pred_fallthru
      _
    // Predicated region
    $region14: #{language_model_forward.5} parent=1 // pred_check
      _
    $region15: #{language_model_forward.5} parent=1 // pred_check_branch
      %27 = sbr.rel (0) target = $region17
    $region16: #{language_model_forward.5} parent=1 // pred_region
      _
    $region17: #{language_model_forward.5} parent=1 // pred_fallthru
      _
    // Predicated region
    $region18: #{language_model_forward.5} parent=1 // pred_check
      _
    $region19: #{language_model_forward.5} parent=1 // pred_check_branch
      %29 = sbr.rel (0) target = $region21
    $region20: #{language_model_forward.5} parent=1 // pred_region
      _
    $region21: #{language_model_forward.5} parent=1 // pred_fallthru
      _
    // Predicated region
    $region22: #{language_model_forward.5} parent=1 // pred_check
      _
    $region23: #{language_model_forward.5} parent=1 // pred_check_branch
      %31 = sbr.rel (0) target = $region25
    $region24: #{language_model_forward.5} parent=1 // pred_region
      _
    $region25: #{language_model_forward.5} parent=1 // pred_fallthru
      _
    // Predicated region
    $region26: #{language_model_forward.5} parent=1 // pred_check
      _
    $region27: #{language_model_forward.5} parent=1 // pred_check_branch
      %33 = sbr.rel (0) target = $region29
    $region28: #{language_model_forward.5} parent=1 // pred_region
      _
    $region29: #{language_model_forward.5} parent=1 // pred_fallthru
      _
    // Predicated region
    $region30: #{language_model_forward.5} parent=1 // pred_check
      _
    $region31: #{language_model_forward.5} parent=1 // pred_check_branch
      %35 = sbr.rel (0) target = $region33
    $region32: #{language_model_forward.5} parent=1 // pred_region
      %s37 = ssub.s32 2048, 2048
      %38 = vsyncadd [#allocation3], %s37
      %s39 = sshll.u32 [#allocation2], 4
      %s40 = int_to_ptr.vmem [resolvable:$true] %s39
      %45 = dma.hbm_to_vmem [thread:$0]  %s7, 2048, %s40, [#allocation3], 128, 128, 8
    $region33: #{language_model_forward.5} parent=1 // pred_fallthru
      _
    // Predicated region
    $region34: #{language_model_forward.5} parent=1 // pred_check
      _
    $region35: #{language_model_forward.5} parent=1 // pred_check_branch
      %47 = sbr.rel (0) target = $region37
    $region36: #{language_model_forward.5} parent=1 // pred_region
      _
    $region37: #{language_model_forward.5} parent=1 // pred_fallthru
      _
    // Predicated region
    $region38: #{language_model_forward.5} parent=1 // pred_check
      _
    $region39: #{language_model_forward.5} parent=1 // pred_check_branch
      %49 = sbr.rel (0) target = $region41
    $region40: #{language_model_forward.5} parent=1 // pred_region
      %s51 = ssub.s32 2048, 2048
      %52 = vsyncadd [#allocation5], %s51
      %s53 = sshll.u32 [#allocation4], 4
      %s54 = int_to_ptr.vmem [resolvable:$true] %s53
      %59 = dma.hbm_to_vmem [thread:$0]  %s9, 2048, %s54, [#allocation5], 64, 64, 4
    $region41: #{language_model_forward.5} parent=1 // pred_fallthru
      _
    // Predicated region
    $region42: #{language_model_forward.5} parent=1 // pred_check
      _
    $region43: #{language_model_forward.5} parent=1 // pred_check_branch
      %61 = sbr.rel (0) target = $region45
    $region44: #{language_model_forward.5} parent=1 // pred_region
      _
    $region45: #{language_model_forward.5} parent=1 // pred_fallthru
      _
    // Predicated region
    $region46: #{language_model_forward.5} parent=1 // pred_check
      _
    $region47: #{language_model_forward.5} parent=1 // pred_check_branch
      %63 = sbr.rel (0) target = $region49
    $region48: #{language_model_forward.5} parent=1 // pred_region
      _
    $region49: #{language_model_forward.5} parent=1 // pred_fallthru
      _
    // Predicated region
    $region50: #{language_model_forward.5} parent=1 // pred_check
      _
    $region51: #{language_model_forward.5} parent=1 // pred_check_branch
      %65 = sbr.rel (0) target = $region53
    $region52: #{language_model_forward.5} parent=1 // pred_region
      _
    $region53: #{language_model_forward.5} parent=1 // pred_fallthru
      _
    // Predicated region
    $region54: #{language_model_forward.5} parent=1 // pred_check
      _
    $region55: #{language_model_forward.5} parent=1 // pred_check_branch
      %67 = sbr.rel (0) target = $region57
    $region56: #{language_model_forward.5} parent=1 // pred_region
      %68 = dma.done [#allocation3], 2048
    $region57: #{language_model_forward.5} parent=1 // pred_fallthru
      _
    // Predicated region
    $region58: #{language_model_forward.5} parent=1 // pred_check
      _
    $region59: #{language_model_forward.5} parent=1 // pred_check_branch
      %70 = sbr.rel (0) target = $region61
    $region60: #{language_model_forward.5} parent=1 // pred_region
      %71 = dma.done [#allocation5], 2048
    $region61: #{language_model_forward.5} parent=1 // pred_fallthru
      _
    %v73 = vld [vmem:[%s0] sm:$0xff]
    %v74 = vld [vmem:[%s0 + $0x8] sm:$0xff]
    %v75 = vpack.c.bf16 %v74, %v73
    %v76 = vld [vmem:[%s1] sm:$0xff]
    %v77 = vld [vmem:[%s1 + $0x8] sm:$0xf]
    %v78 = vld [vmem:[%s1 + $0xc] sm:$0xff]
    %v79 = vld [vmem:[%s1 + $0x14] sm:$0xf]
    %v80 = vld [vmem:[%s1 + $0x18] sm:$0xff]
    %v81 = vld [vmem:[%s1 + $0x20] sm:$0xf]
    %v82 = vld [vmem:[%s1 + $0x24] sm:$0xff]
    %v83 = vld [vmem:[%s1 + $0x2c] sm:$0xf]
    %v84 = vld [vmem:[%s1 + $0x30] sm:$0xff]
    %v85 = vld [vmem:[%s1 + $0x38] sm:$0xf]
    %v86 = vld [vmem:[%s1 + $0x3c] sm:$0xff]
    %v87 = vld [vmem:[%s1 + $0x44] sm:$0xf]
    %v88 = vld [vmem:[%s1 + $0x48] sm:$0xff]
    %v89 = vld [vmem:[%s1 + $0x50] sm:$0xf]
    %v90 = vld [vmem:[%s1 + $0x54] sm:$0xff]
    %v91 = vld [vmem:[%s1 + $0x5c] sm:$0xf]
    %v92 = vld [vmem:[%s1 + $0x60] sm:$0xff]
    %v93 = vld [vmem:[%s1 + $0x68] sm:$0xf]
    %v94 = vld [vmem:[%s1 + $0x6c] sm:$0xff]
    %v95 = vld [vmem:[%s1 + $0x74] sm:$0xf]
    %v96 = vld [vmem:[%s1 + $0x78] sm:$0xff]
    %v97 = vld [vmem:[%s1 + $0x80] sm:$0xf]
    %v98 = vld [vmem:[%s1 + $0x84] sm:$0xff]
    %v99 = vld [vmem:[%s1 + $0x8c] sm:$0xf]
    %v100 = vld [vmem:[%s1 + $0x90] sm:$0xff]
    %v101 = vld [vmem:[%s1 + $0x98] sm:$0xf]
    %v102 = vld [vmem:[%s1 + $0x9c] sm:$0xff]
    %v103 = vld [vmem:[%s1 + $0xa4] sm:$0xf]
    %v104 = vld [vmem:[%s1 + $0xa8] sm:$0xff]
    %v105 = vld [vmem:[%s1 + $0xb0] sm:$0xf]
    %v106 = vld [vmem:[%s1 + $0xb4] sm:$0xff]
    %v107 = vld [vmem:[%s1 + $0xbc] sm:$0xf]
    %v108 = vld [vmem:[%s2] sm:$0x7]
    %v110 = vlaneseq
    %v111 = vshrl.u32 %v110, 7
    %v112 = vsub.s32 0, %v111
    %v113 = vrot.slane %v108, %v112
    %v114 = vlaneseq
    %v115 = vshrl.u32 %v114, 7
    %v116 = vsub.s32 1, %v115
    %v117 = vrot.slane %v108, %v116
    %v118 = vlaneseq
    %v119 = vshrl.u32 %v118, 7
    %v120 = vsub.s32 2, %v119
    %v121 = vrot.slane %v108, %v120
    %v157 = vunpack.c.l.b16 %v76
    %v158 = vunpack.c.h.b16 %v76
    %v159 = vunpack.c.l.b16 %v77
    %v160 = vunpack.c.l.b16 %v78
    %v161 = vunpack.c.h.b16 %v78
    %v162 = vunpack.c.l.b16 %v79
    %v163 = vunpack.c.l.b16 %v80
    %v164 = vunpack.c.h.b16 %v80
    %v165 = vunpack.c.l.b16 %v81
    %v166 = vunpack.c.l.b16 %v82
    %v167 = vunpack.c.h.b16 %v82
    %v168 = vunpack.c.l.b16 %v83
    %v169 = vunpack.c.l.b16 %v84
    %v170 = vunpack.c.h.b16 %v84
    %v171 = vunpack.c.l.b16 %v85
    %v172 = vunpack.c.l.b16 %v86
    %v173 = vunpack.c.h.b16 %v86
    %v174 = vunpack.c.l.b16 %v87
    %v175 = vunpack.c.l.b16 %v88
    %v176 = vunpack.c.h.b16 %v88
    %v177 = vunpack.c.l.b16 %v89
    %v178 = vunpack.c.l.b16 %v90
    %v179 = vunpack.c.h.b16 %v90
    %v180 = vunpack.c.l.b16 %v91
    %v181 = vunpack.c.l.b16 %v92
    %v182 = vunpack.c.h.b16 %v92
    %v183 = vunpack.c.l.b16 %v93
    %v184 = vunpack.c.l.b16 %v94
    %v185 = vunpack.c.h.b16 %v94
    %v186 = vunpack.c.l.b16 %v95
    %v187 = vunpack.c.l.b16 %v96
    %v188 = vunpack.c.h.b16 %v96
    %v189 = vunpack.c.l.b16 %v97
    %v190 = vunpack.c.l.b16 %v98
    %v191 = vunpack.c.h.b16 %v98
    %v192 = vunpack.c.l.b16 %v99
    %v193 = vunpack.c.l.b16 %v100
    %v194 = vunpack.c.h.b16 %v100
    %v195 = vunpack.c.l.b16 %v101
    %v196 = vunpack.c.l.b16 %v102
    %v197 = vunpack.c.h.b16 %v102
    %v198 = vunpack.c.l.b16 %v103
    %v199 = vunpack.c.l.b16 %v104
    %v200 = vunpack.c.h.b16 %v104
    %v201 = vunpack.c.l.b16 %v105
    %v202 = vunpack.c.l.b16 %v106
    %v203 = vunpack.c.h.b16 %v106
    %v204 = vunpack.c.l.b16 %v107
    %v205 = vpack.c.b16 %v160, %v157
    %v206 = vpack.c.b16 %v161, %v158
    %v207 = vpack.c.b16 %v162, %v159
    %v208 = vpack.c.b16 %v166, %v163
    %v209 = vpack.c.b16 %v167, %v164
    %v210 = vpack.c.b16 %v168, %v165
    %v211 = vpack.c.b16 %v172, %v169
    %v212 = vpack.c.b16 %v173, %v170
    %v213 = vpack.c.b16 %v174, %v171
    %v214 = vpack.c.b16 %v178, %v175
    %v215 = vpack.c.b16 %v179, %v176
    %v216 = vpack.c.b16 %v180, %v177
    %v217 = vpack.c.b16 %v184, %v181
    %v218 = vpack.c.b16 %v185, %v182
    %v219 = vpack.c.b16 %v186, %v183
    %v220 = vpack.c.b16 %v190, %v187
    %v221 = vpack.c.b16 %v191, %v188
    %v222 = vpack.c.b16 %v192, %v189
    %v223 = vpack.c.b16 %v196, %v193
    %v224 = vpack.c.b16 %v197, %v194
    %v225 = vpack.c.b16 %v198, %v195
    %v226 = vpack.c.b16 %v202, %v199
    %v227 = vpack.c.b16 %v203, %v200
    %v228 = vpack.c.b16 %v204, %v201
    %253 = vmatprep.subr.bf16.mxu0 %v206
    %254 = vmatpush1.bf16.msra.mxu0 %v205
    %255 = vmatprep.subr.bf16.mxu0 %v209
    %256 = vmatpush1.bf16.msra.mxu0 %v208
    %257 = vmatprep.subr.bf16.mxu0 %v212
    %258 = vmatpush1.bf16.msra.mxu0 %v211
    %259 = vmatprep.subr.bf16.mxu0 %v215
    %260 = vmatpush1.bf16.msra.mxu0 %v214
    %261 = vmatprep.subr.bf16.mxu0 %v218
    %262 = vmatpush1.bf16.msra.mxu0 %v217
    %263 = vmatprep.subr.bf16.mxu0 %v221
    %264 = vmatpush1.bf16.msra.mxu0 %v220
    %265 = vmatprep.subr.bf16.mxu0 %v224
    %266 = vmatpush1.bf16.msra.mxu0 %v223
    %267 = vmatprep.subr.bf16.mxu0 %v227
    %268 = vmatpush1.bf16.msra.mxu0 %v226
    %269 = vmatprep.subr.bf16.mxu0 0
    %270 = vmatpush1.bf16.msra.mxu0 0
    %271 = vmatprep.subr.bf16.mxu0 0
    %272 = vmatpush1.bf16.msra.mxu0 0
    %273 = vmatprep.subr.bf16.mxu0 0
    %274 = vmatpush1.bf16.msra.mxu0 0
    %275 = vmatprep.subr.bf16.mxu0 0
    %276 = vmatpush1.bf16.msra.mxu0 0
    %277 = vmatprep.subr.bf16.mxu0 0
    %278 = vmatpush1.bf16.msra.mxu0 0
    %279 = vmatprep.subr.bf16.mxu0 0
    %280 = vmatpush1.bf16.msra.mxu0 0
    %281 = vmatprep.subr.bf16.mxu0 0
    %282 = vmatpush1.bf16.msra.mxu0 0
    %283 = vmatprep.subr.bf16.mxu0 0
    %284 = vmatpush1.bf16.msra.mxu0 0
    %285 = vmatprep.mubr.bf16.mxu0 0
    %286 = vmatmul.mubr.bf16.gmra.mrb[0].mxu0 %v75
    %v287 = vpop.f32.mrb[0].mxu0
    %v288 = vadd.f32 %v113, %v287
    %v289 = vpop.f32.mrb[0].mxu0
    %v290 = vadd.f32 %v117, %v289
    %v291 = vpop.f32.mrb[0].mxu0
    %v292 = vadd.f32 %v113, %v291
    %v293 = vpop.f32.mrb[0].mxu0
    %v294 = vadd.f32 %v117, %v293
    %295 = vdwg.mxu0
    %296 = vmatprep.subr.bf16.mxu0 0
    %297 = vmatpush1.bf16.msra.mxu0 %v207
    %298 = vmatprep.subr.bf16.mxu0 0
    %299 = vmatpush1.bf16.msra.mxu0 %v210
    %300 = vmatprep.subr.bf16.mxu0 0
    %301 = vmatpush1.bf16.msra.mxu0 %v213
    %302 = vmatprep.subr.bf16.mxu0 0
    %303 = vmatpush1.bf16.msra.mxu0 %v216
    %304 = vmatprep.subr.bf16.mxu0 0
    %305 = vmatpush1.bf16.msra.mxu0 %v219
    %306 = vmatprep.subr.bf16.mxu0 0
    %307 = vmatpush1.bf16.msra.mxu0 %v222
    %308 = vmatprep.subr.bf16.mxu0 0
    %309 = vmatpush1.bf16.msra.mxu0 %v225
    %310 = vmatprep.subr.bf16.mxu0 0
    %311 = vmatpush1.bf16.msra.mxu0 %v228
    %312 = vmatprep.subr.bf16.mxu0 0
    %313 = vmatpush1.bf16.msra.mxu0 0
    %314 = vmatprep.subr.bf16.mxu0 0
    %315 = vmatpush1.bf16.msra.mxu0 0
    %316 = vmatprep.subr.bf16.mxu0 0
    %317 = vmatpush1.bf16.msra.mxu0 0
    %318 = vmatprep.subr.bf16.mxu0 0
    %319 = vmatpush1.bf16.msra.mxu0 0
    %320 = vmatprep.subr.bf16.mxu0 0
    %321 = vmatpush1.bf16.msra.mxu0 0
    %322 = vmatprep.subr.bf16.mxu0 0
    %323 = vmatpush1.bf16.msra.mxu0 0
    %324 = vmatprep.subr.bf16.mxu0 0
    %325 = vmatpush1.bf16.msra.mxu0 0
    %326 = vmatprep.subr.bf16.mxu0 0
    %327 = vmatpush1.bf16.msra.mxu0 0
    %328 = vmatprep.mubr.bf16.mxu0 0
    %329 = vmatmul.mubr.bf16.gmra.mrb[0].mxu0 %v75
    %v330 = vpop.f32.mrb[0].mxu0
    %v331 = vadd.f32 %v121, %v330
    %v332 = vpop.f32.mrb[0].mxu0
    %v333 = vpop.f32.mrb[0].mxu0
    %v334 = vadd.f32 %v121, %v333
    %v335 = vpop.f32.mrb[0].mxu0
    %336 = vdwg.mxu0
    %v337 = vpack.c.bf16 %v288, %v288
    %v338 = vpack.c.bf16 %v290, %v290
    %v339 = vpack.c.bf16 %v331, %v331
    %vm340 = vcmask 523264
    %v342 = vsel %vm340, %v337, 0
    %v345 = vsel %vm340, %v338, 0
    %347 = vmatprep.subr.bf16.mxu0 0
    %348 = vmatpush1.bf16.xpose.msra.mxu0 %v345
    %349 = vmatprep.subr.bf16.mxu0 0
    %350 = vmatpush1.bf16.xpose.msra.mxu0 0
    %351 = vmatprep.subr.bf16.mxu0 0
    %352 = vmatpush1.bf16.xpose.msra.mxu0 0
    %353 = vmatprep.subr.bf16.mxu0 0
    %354 = vmatpush1.bf16.xpose.msra.mxu0 0
    %355 = vmatprep.subr.bf16.mxu0 0
    %356 = vmatpush1.bf16.xpose.msra.mxu0 0
    %357 = vmatprep.subr.bf16.mxu0 0
    %358 = vmatpush1.bf16.xpose.msra.mxu0 0
    %359 = vmatprep.subr.bf16.mxu0 0
    %360 = vmatpush1.bf16.xpose.msra.mxu0 0
    %361 = vmatprep.subr.bf16.mxu0 0
    %362 = vmatpush1.bf16.xpose.msra.mxu0 0
    %363 = vmatprep.subr.bf16.mxu0 0
    %364 = vmatpush1.bf16.xpose.msra.mxu0 0
    %365 = vmatprep.subr.bf16.mxu0 0
    %366 = vmatpush1.bf16.xpose.msra.mxu0 0
    %367 = vmatprep.subr.bf16.mxu0 0
    %368 = vmatpush1.bf16.xpose.msra.mxu0 0
    %369 = vmatprep.subr.bf16.mxu0 0
    %370 = vmatpush1.bf16.xpose.msra.mxu0 0
    %371 = vmatprep.subr.bf16.mxu0 0
    %372 = vmatpush1.bf16.xpose.msra.mxu0 0
    %373 = vmatprep.subr.bf16.mxu0 0
    %374 = vmatpush1.bf16.xpose.msra.mxu0 0
    %375 = vmatprep.subr.bf16.mxu0 0
    %376 = vmatpush1.bf16.xpose.msra.mxu0 0
    %377 = vmatprep.subr.bf16.mxu0 0
    %378 = vmatpush1.bf16.xpose.msra.mxu0 0
    %379 = vmatprep.mubr.bf16.mxu0 0
    %380 = vmatmul.mubr.bf16.gmra.mrb[0].mxu0 %v342
    %v381 = vpop.f32.mrb[0].mxu0
    %v382 = vadd.f32 0.0, %v381
    %v383 = vpop.f32.mrb[0].mxu0
    %v384 = vpop.f32.mrb[0].mxu0
    %v385 = vpop.f32.mrb[0].mxu0
    %386 = vdwg.mxu0
    %v387 = vmul.f32 %v382, 0.125
    %vm388 = vcmask 64512
    %v389 = vsel %vm388, %v387, -inf
    %390 = vmax.xlane.f32.xlu0 %v389
    %v391 = vpop.xlane.xlu0 %390
    %v392 = vsub.f32 %v387, %v391
    %v393 = vmul.f32 %v392, 1.442695
    %v394 = vpow.pop %v393
    %v395 = vsel %vm388, %v394, 0.0
    %396 = vadd.xlane.f32.xlu0 %v395
    %v397 = vpop.xlane.xlu0 %396
    %v398 = vrcp.pop %v397
    %v399 = vmul.f32 %v394, %v398
    %v400 = vpack.c.bf16 %v399, %v399
    %v402 = vsel %vm388, %v400, 0
    %vm404 = vcmask 1043456
    %v406 = vsel %vm404, %v339, 0
    %408 = vmatprep.subr.bf16.mxu0 0
    %409 = vmatpush1.bf16.msra.mxu0 %v406
    %410 = vmatprep.subr.bf16.mxu0 0
    %411 = vmatpush1.bf16.msra.mxu0 0
    %412 = vmatprep.subr.bf16.mxu0 0
    %413 = vmatpush1.bf16.msra.mxu0 0
    %414 = vmatprep.subr.bf16.mxu0 0
    %415 = vmatpush1.bf16.msra.mxu0 0
    %416 = vmatprep.subr.bf16.mxu0 0
    %417 = vmatpush1.bf16.msra.mxu0 0
    %418 = vmatprep.subr.bf16.mxu0 0
    %419 = vmatpush1.bf16.msra.mxu0 0
    %420 = vmatprep.subr.bf16.mxu0 0
    %421 = vmatpush1.bf16.msra.mxu0 0
    %422 = vmatprep.subr.bf16.mxu0 0
    %423 = vmatpush1.bf16.msra.mxu0 0
    %424 = vmatprep.subr.bf16.mxu0 0
    %425 = vmatpush1.bf16.msra.mxu0 0
    %426 = vmatprep.subr.bf16.mxu0 0
    %427 = vmatpush1.bf16.msra.mxu0 0
    %428 = vmatprep.subr.bf16.mxu0 0
    %429 = vmatpush1.bf16.msra.mxu0 0
    %430 = vmatprep.subr.bf16.mxu0 0
    %431 = vmatpush1.bf16.msra.mxu0 0
    %432 = vmatprep.subr.bf16.mxu0 0
    %433 = vmatpush1.bf16.msra.mxu0 0
    %434 = vmatprep.subr.bf16.mxu0 0
    %435 = vmatpush1.bf16.msra.mxu0 0
    %436 = vmatprep.subr.bf16.mxu0 0
    %437 = vmatpush1.bf16.msra.mxu0 0
    %438 = vmatprep.subr.bf16.mxu0 0
    %439 = vmatpush1.bf16.msra.mxu0 0
    %440 = vmatprep.mubr.bf16.mxu0 0
    %441 = vmatmul.mubr.bf16.gmra.mrb[0].mxu0 %v402
    %v442 = vpop.f32.mrb[0].mxu0
    %v443 = vadd.f32 0.0, %v442
    %v444 = vpop.f32.mrb[0].mxu0
    %v445 = vpop.f32.mrb[0].mxu0
    %v446 = vpop.f32.mrb[0].mxu0
    %447 = vdwg.mxu0
    %449 = vrot.lane.b32.xlu0 %v337, 64
    %v450 = vpop.permute.xlu0 %449
    %452 = vrot.lane.b32.xlu0 %v338, 64
    %v453 = vpop.permute.xlu0 %452
    %v455 = vsel %vm340, %v450, 0
    %v458 = vsel %vm340, %v453, 0
    %460 = vmatprep.subr.bf16.mxu0 0
    %461 = vmatpush1.bf16.xpose.msra.mxu0 %v458
    %462 = vmatprep.subr.bf16.mxu0 0
    %463 = vmatpush1.bf16.xpose.msra.mxu0 0
    %464 = vmatprep.subr.bf16.mxu0 0
    %465 = vmatpush1.bf16.xpose.msra.mxu0 0
    %466 = vmatprep.subr.bf16.mxu0 0
    %467 = vmatpush1.bf16.xpose.msra.mxu0 0
    %468 = vmatprep.subr.bf16.mxu0 0
    %469 = vmatpush1.bf16.xpose.msra.mxu0 0
    %470 = vmatprep.subr.bf16.mxu0 0
    %471 = vmatpush1.bf16.xpose.msra.mxu0 0
    %472 = vmatprep.subr.bf16.mxu0 0
    %473 = vmatpush1.bf16.xpose.msra.mxu0 0
    %474 = vmatprep.subr.bf16.mxu0 0
    %475 = vmatpush1.bf16.xpose.msra.mxu0 0
    %476 = vmatprep.subr.bf16.mxu0 0
    %477 = vmatpush1.bf16.xpose.msra.mxu0 0
    %478 = vmatprep.subr.bf16.mxu0 0
    %479 = vmatpush1.bf16.xpose.msra.mxu0 0
    %480 = vmatprep.subr.bf16.mxu0 0
    %481 = vmatpush1.bf16.xpose.msra.mxu0 0
    %482 = vmatprep.subr.bf16.mxu0 0
    %483 = vmatpush1.bf16.xpose.msra.mxu0 0
    %484 = vmatprep.subr.bf16.mxu0 0
    %485 = vmatpush1.bf16.xpose.msra.mxu0 0
    %486 = vmatprep.subr.bf16.mxu0 0
    %487 = vmatpush1.bf16.xpose.msra.mxu0 0
    %488 = vmatprep.subr.bf16.mxu0 0
    %489 = vmatpush1.bf16.xpose.msra.mxu0 0
    %490 = vmatprep.subr.bf16.mxu0 0
    %491 = vmatpush1.bf16.xpose.msra.mxu0 0
    %492 = vmatprep.mubr.bf16.mxu0 0
    %493 = vmatmul.mubr.bf16.gmra.mrb[0].mxu0 %v455
    %v494 = vpop.f32.mrb[0].mxu0
    %v495 = vadd.f32 0.0, %v494
    %v496 = vpop.f32.mrb[0].mxu0
    %v497 = vpop.f32.mrb[0].mxu0
    %v498 = vpop.f32.mrb[0].mxu0
    %499 = vdwg.mxu0
    %v500 = vmul.f32 %v495, 0.125
    %v501 = vsel %vm388, %v500, -inf
    %502 = vmax.xlane.f32.xlu0 %v501
    %v503 = vpop.xlane.xlu0 %502
    %v504 = vsub.f32 %v500, %v503
    %v505 = vmul.f32 %v504, 1.442695
    %v506 = vpow.pop %v505
    %v507 = vsel %vm388, %v506, 0.0
    %508 = vadd.xlane.f32.xlu0 %v507
    %v509 = vpop.xlane.xlu0 %508
    %v510 = vrcp.pop %v509
    %v511 = vmul.f32 %v506, %v510
    %v512 = vpack.c.bf16 %v511, %v511
    %514 = vrot.lane.b32.xlu0 %v339, 64
    %v515 = vpop.permute.xlu0 %514
    %v517 = vsel %vm388, %v512, 0
    %v520 = vsel %vm404, %v515, 0
    %522 = vmatprep.subr.bf16.mxu0 0
    %523 = vmatpush1.bf16.msra.mxu0 %v520
    %524 = vmatprep.subr.bf16.mxu0 0
    %525 = vmatpush1.bf16.msra.mxu0 0
    %526 = vmatprep.subr.bf16.mxu0 0
    %527 = vmatpush1.bf16.msra.mxu0 0
    %528 = vmatprep.subr.bf16.mxu0 0
    %529 = vmatpush1.bf16.msra.mxu0 0
    %530 = vmatprep.subr.bf16.mxu0 0
    %531 = vmatpush1.bf16.msra.mxu0 0
    %532 = vmatprep.subr.bf16.mxu0 0
    %533 = vmatpush1.bf16.msra.mxu0 0
    %534 = vmatprep.subr.bf16.mxu0 0
    %535 = vmatpush1.bf16.msra.mxu0 0
    %536 = vmatprep.subr.bf16.mxu0 0
    %537 = vmatpush1.bf16.msra.mxu0 0
    %538 = vmatprep.subr.bf16.mxu0 0
    %539 = vmatpush1.bf16.msra.mxu0 0
    %540 = vmatprep.subr.bf16.mxu0 0
    %541 = vmatpush1.bf16.msra.mxu0 0
    %542 = vmatprep.subr.bf16.mxu0 0
    %543 = vmatpush1.bf16.msra.mxu0 0
    %544 = vmatprep.subr.bf16.mxu0 0
    %545 = vmatpush1.bf16.msra.mxu0 0
    %546 = vmatprep.subr.bf16.mxu0 0
    %547 = vmatpush1.bf16.msra.mxu0 0
    %548 = vmatprep.subr.bf16.mxu0 0
    %549 = vmatpush1.bf16.msra.mxu0 0
    %550 = vmatprep.subr.bf16.mxu0 0
    %551 = vmatpush1.bf16.msra.mxu0 0
    %552 = vmatprep.subr.bf16.mxu0 0
    %553 = vmatpush1.bf16.msra.mxu0 0
    %554 = vmatprep.mubr.bf16.mxu0 0
    %555 = vmatmul.mubr.bf16.gmra.mrb[0].mxu0 %v517
    %v556 = vpop.f32.mrb[0].mxu0
    %v557 = vadd.f32 0.0, %v556
    %v558 = vpop.f32.mrb[0].mxu0
    %v559 = vpop.f32.mrb[0].mxu0
    %v560 = vpop.f32.mrb[0].mxu0
    %561 = vdwg.mxu0
    %563 = vrot.lane.b32.xlu0 %v557, 64
    %v564 = vpop.permute.xlu0 %563
    %v566 = vsel %vm340, %v443, %v564
    %v567 = vpack.c.bf16 %v292, %v292
    %v568 = vpack.c.bf16 %v294, %v294
    %v569 = vpack.c.bf16 %v334, %v334
    %v571 = vsel %vm340, %v567, 0
    %v574 = vsel %vm340, %v568, 0
    %576 = vmatprep.subr.bf16.mxu0 0
    %577 = vmatpush1.bf16.xpose.msra.mxu0 %v574
    %578 = vmatprep.subr.bf16.mxu0 0
    %579 = vmatpush1.bf16.xpose.msra.mxu0 0
    %580 = vmatprep.subr.bf16.mxu0 0
    %581 = vmatpush1.bf16.xpose.msra.mxu0 0
    %582 = vmatprep.subr.bf16.mxu0 0
    %583 = vmatpush1.bf16.xpose.msra.mxu0 0
    %584 = vmatprep.subr.bf16.mxu0 0
    %585 = vmatpush1.bf16.xpose.msra.mxu0 0
    %586 = vmatprep.subr.bf16.mxu0 0
    %587 = vmatpush1.bf16.xpose.msra.mxu0 0
    %588 = vmatprep.subr.bf16.mxu0 0
    %589 = vmatpush1.bf16.xpose.msra.mxu0 0
    %590 = vmatprep.subr.bf16.mxu0 0
    %591 = vmatpush1.bf16.xpose.msra.mxu0 0
    %592 = vmatprep.subr.bf16.mxu0 0
    %593 = vmatpush1.bf16.xpose.msra.mxu0 0
    %594 = vmatprep.subr.bf16.mxu0 0
    %595 = vmatpush1.bf16.xpose.msra.mxu0 0
    %596 = vmatprep.subr.bf16.mxu0 0
    %597 = vmatpush1.bf16.xpose.msra.mxu0 0
    %598 = vmatprep.subr.bf16.mxu0 0
    %599 = vmatpush1.bf16.xpose.msra.mxu0 0
    %600 = vmatprep.subr.bf16.mxu0 0
    %601 = vmatpush1.bf16.xpose.msra.mxu0 0
    %602 = vmatprep.subr.bf16.mxu0 0
    %603 = vmatpush1.bf16.xpose.msra.mxu0 0
    %604 = vmatprep.subr.bf16.mxu0 0
    %605 = vmatpush1.bf16.xpose.msra.mxu0 0
    %606 = vmatprep.subr.bf16.mxu0 0
    %607 = vmatpush1.bf16.xpose.msra.mxu0 0
    %608 = vmatprep.mubr.bf16.mxu0 0
    %609 = vmatmul.mubr.bf16.gmra.mrb[0].mxu0 %v571
    %v610 = vpop.f32.mrb[0].mxu0
    %v611 = vadd.f32 0.0, %v610
    %v612 = vpop.f32.mrb[0].mxu0
    %v613 = vpop.f32.mrb[0].mxu0
    %v614 = vpop.f32.mrb[0].mxu0
    %615 = vdwg.mxu0
    %v616 = vmul.f32 %v611, 0.125
    %v617 = vsel %vm388, %v616, -inf
    %618 = vmax.xlane.f32.xlu0 %v617
    %v619 = vpop.xlane.xlu0 %618
    %v620 = vsub.f32 %v616, %v619
    %v621 = vmul.f32 %v620, 1.442695
    %v622 = vpow.pop %v621
    %v623 = vsel %vm388, %v622, 0.0
    %624 = vadd.xlane.f32.xlu0 %v623
    %v625 = vpop.xlane.xlu0 %624
    %v626 = vrcp.pop %v625
    %v627 = vmul.f32 %v622, %v626
    %v628 = vpack.c.bf16 %v627, %v627
    %v630 = vsel %vm388, %v628, 0
    %v633 = vsel %vm404, %v569, 0
    %635 = vmatprep.subr.bf16.mxu0 0
    %636 = vmatpush1.bf16.msra.mxu0 %v633
    %637 = vmatprep.subr.bf16.mxu0 0
    %638 = vmatpush1.bf16.msra.mxu0 0
    %639 = vmatprep.subr.bf16.mxu0 0
    %640 = vmatpush1.bf16.msra.mxu0 0
    %641 = vmatprep.subr.bf16.mxu0 0
    %642 = vmatpush1.bf16.msra.mxu0 0
    %643 = vmatprep.subr.bf16.mxu0 0
    %644 = vmatpush1.bf16.msra.mxu0 0
    %645 = vmatprep.subr.bf16.mxu0 0
    %646 = vmatpush1.bf16.msra.mxu0 0
    %647 = vmatprep.subr.bf16.mxu0 0
    %648 = vmatpush1.bf16.msra.mxu0 0
    %649 = vmatprep.subr.bf16.mxu0 0
    %650 = vmatpush1.bf16.msra.mxu0 0
    %651 = vmatprep.subr.bf16.mxu0 0
    %652 = vmatpush1.bf16.msra.mxu0 0
    %653 = vmatprep.subr.bf16.mxu0 0
    %654 = vmatpush1.bf16.msra.mxu0 0
    %655 = vmatprep.subr.bf16.mxu0 0
    %656 = vmatpush1.bf16.msra.mxu0 0
    %657 = vmatprep.subr.bf16.mxu0 0
    %658 = vmatpush1.bf16.msra.mxu0 0
    %659 = vmatprep.subr.bf16.mxu0 0
    %660 = vmatpush1.bf16.msra.mxu0 0
    %661 = vmatprep.subr.bf16.mxu0 0
    %662 = vmatpush1.bf16.msra.mxu0 0
    %663 = vmatprep.subr.bf16.mxu0 0
    %664 = vmatpush1.bf16.msra.mxu0 0
    %665 = vmatprep.subr.bf16.mxu0 0
    %666 = vmatpush1.bf16.msra.mxu0 0
    %667 = vmatprep.mubr.bf16.mxu0 0
    %668 = vmatmul.mubr.bf16.gmra.mrb[0].mxu0 %v630
    %v669 = vpop.f32.mrb[0].mxu0
    %v670 = vadd.f32 0.0, %v669
    %v671 = vpop.f32.mrb[0].mxu0
    %v672 = vpop.f32.mrb[0].mxu0
    %v673 = vpop.f32.mrb[0].mxu0
    %674 = vdwg.mxu0
    %676 = vrot.lane.b32.xlu0 %v567, 64
    %v677 = vpop.permute.xlu0 %676
    %679 = vrot.lane.b32.xlu0 %v568, 64
    %v680 = vpop.permute.xlu0 %679
    %v682 = vsel %vm340, %v677, 0
    %v685 = vsel %vm340, %v680, 0
    %687 = vmatprep.subr.bf16.mxu0 0
    %688 = vmatpush1.bf16.xpose.msra.mxu0 %v685
    %689 = vmatprep.subr.bf16.mxu0 0
    %690 = vmatpush1.bf16.xpose.msra.mxu0 0
    %691 = vmatprep.subr.bf16.mxu0 0
    %692 = vmatpush1.bf16.xpose.msra.mxu0 0
    %693 = vmatprep.subr.bf16.mxu0 0
    %694 = vmatpush1.bf16.xpose.msra.mxu0 0
    %695 = vmatprep.subr.bf16.mxu0 0
    %696 = vmatpush1.bf16.xpose.msra.mxu0 0
    %697 = vmatprep.subr.bf16.mxu0 0
    %698 = vmatpush1.bf16.xpose.msra.mxu0 0
    %699 = vmatprep.subr.bf16.mxu0 0
    %700 = vmatpush1.bf16.xpose.msra.mxu0 0
    %701 = vmatprep.subr.bf16.mxu0 0
    %702 = vmatpush1.bf16.xpose.msra.mxu0 0
    %703 = vmatprep.subr.bf16.mxu0 0
    %704 = vmatpush1.bf16.xpose.msra.mxu0 0
    %705 = vmatprep.subr.bf16.mxu0 0
    %706 = vmatpush1.bf16.xpose.msra.mxu0 0
    %707 = vmatprep.subr.bf16.mxu0 0
    %708 = vmatpush1.bf16.xpose.msra.mxu0 0
    %709 = vmatprep.subr.bf16.mxu0 0
    %710 = vmatpush1.bf16.xpose.msra.mxu0 0
    %711 = vmatprep.subr.bf16.mxu0 0
    %712 = vmatpush1.bf16.xpose.msra.mxu0 0
    %713 = vmatprep.subr.bf16.mxu0 0
    %714 = vmatpush1.bf16.xpose.msra.mxu0 0
    %715 = vmatprep.subr.bf16.mxu0 0
    %716 = vmatpush1.bf16.xpose.msra.mxu0 0
    %717 = vmatprep.subr.bf16.mxu0 0
    %718 = vmatpush1.bf16.xpose.msra.mxu0 0
    %719 = vmatprep.mubr.bf16.mxu0 0
    %720 = vmatmul.mubr.bf16.gmra.mrb[0].mxu0 %v682
    %v721 = vpop.f32.mrb[0].mxu0
    %v722 = vadd.f32 0.0, %v721
    %v723 = vpop.f32.mrb[0].mxu0
    %v724 = vpop.f32.mrb[0].mxu0
    %v725 = vpop.f32.mrb[0].mxu0
    %726 = vdwg.mxu0
    %v727 = vmul.f32 %v722, 0.125
    %v728 = vsel %vm388, %v727, -inf
    %729 = vmax.xlane.f32.xlu0 %v728
    %v730 = vpop.xlane.xlu0 %729
    %v731 = vsub.f32 %v727, %v730
    %v732 = vmul.f32 %v731, 1.442695
    %v733 = vpow.pop %v732
    %v734 = vsel %vm388, %v733, 0.0
    %735 = vadd.xlane.f32.xlu0 %v734
    %v736 = vpop.xlane.xlu0 %735
    %v737 = vrcp.pop %v736
    %v738 = vmul.f32 %v733, %v737
    %v739 = vpack.c.bf16 %v738, %v738
    %741 = vrot.lane.b32.xlu0 %v569, 64
    %v742 = vpop.permute.xlu0 %741
    %v744 = vsel %vm388, %v739, 0
    %v747 = vsel %vm404, %v742, 0
    %749 = vmatprep.subr.bf16.mxu0 0
    %750 = vmatpush1.bf16.msra.mxu0 %v747
    %751 = vmatprep.subr.bf16.mxu0 0
    %752 = vmatpush1.bf16.msra.mxu0 0
    %753 = vmatprep.subr.bf16.mxu0 0
    %754 = vmatpush1.bf16.msra.mxu0 0
    %755 = vmatprep.subr.bf16.mxu0 0
    %756 = vmatpush1.bf16.msra.mxu0 0
    %757 = vmatprep.subr.bf16.mxu0 0
    %758 = vmatpush1.bf16.msra.mxu0 0
    %759 = vmatprep.subr.bf16.mxu0 0
    %760 = vmatpush1.bf16.msra.mxu0 0
    %761 = vmatprep.subr.bf16.mxu0 0
    %762 = vmatpush1.bf16.msra.mxu0 0
    %763 = vmatprep.subr.bf16.mxu0 0
    %764 = vmatpush1.bf16.msra.mxu0 0
    %765 = vmatprep.subr.bf16.mxu0 0
    %766 = vmatpush1.bf16.msra.mxu0 0
    %767 = vmatprep.subr.bf16.mxu0 0
    %768 = vmatpush1.bf16.msra.mxu0 0
    %769 = vmatprep.subr.bf16.mxu0 0
    %770 = vmatpush1.bf16.msra.mxu0 0
    %771 = vmatprep.subr.bf16.mxu0 0
    %772 = vmatpush1.bf16.msra.mxu0 0
    %773 = vmatprep.subr.bf16.mxu0 0
    %774 = vmatpush1.bf16.msra.mxu0 0
    %775 = vmatprep.subr.bf16.mxu0 0
    %776 = vmatpush1.bf16.msra.mxu0 0
    %777 = vmatprep.subr.bf16.mxu0 0
    %778 = vmatpush1.bf16.msra.mxu0 0
    %779 = vmatprep.subr.bf16.mxu0 0
    %780 = vmatpush1.bf16.msra.mxu0 0
    %781 = vmatprep.mubr.bf16.mxu0 0
    %782 = vmatmul.mubr.bf16.gmra.mrb[0].mxu0 %v744
    %v783 = vpop.f32.mrb[0].mxu0
    %v784 = vadd.f32 0.0, %v783
    %v785 = vpop.f32.mrb[0].mxu0
    %v786 = vpop.f32.mrb[0].mxu0
    %v787 = vpop.f32.mrb[0].mxu0
    %788 = vdwg.mxu0
    %790 = vrot.lane.b32.xlu0 %v784, 64
    %v791 = vpop.permute.xlu0 %790
    %v793 = vsel %vm340, %v670, %v791
    %v794 = vpack.c.bf16 %v793, %v566
    %v795 = vld [vmem:[%s3] sm:$0xf]
    %v796 = vld [vmem:[%s3 + $0x4] sm:$0xf]
    %v797 = vld [vmem:[%s3 + $0x8] sm:$0xf]
    %v798 = vld [vmem:[%s3 + $0xc] sm:$0xf]
    %v799 = vld [vmem:[%s3 + $0x10] sm:$0xf]
    %v800 = vld [vmem:[%s3 + $0x14] sm:$0xf]
    %v801 = vld [vmem:[%s3 + $0x18] sm:$0xf]
    %v802 = vld [vmem:[%s3 + $0x1c] sm:$0xf]
    %v803 = vld [vmem:[%s3 + $0x20] sm:$0xf]
    %v804 = vld [vmem:[%s3 + $0x24] sm:$0xf]
    %v805 = vld [vmem:[%s3 + $0x28] sm:$0xf]
    %v806 = vld [vmem:[%s3 + $0x2c] sm:$0xf]
    %v807 = vld [vmem:[%s3 + $0x30] sm:$0xf]
    %v808 = vld [vmem:[%s3 + $0x34] sm:$0xf]
    %v809 = vld [vmem:[%s3 + $0x38] sm:$0xf]
    %v810 = vld [vmem:[%s3 + $0x3c] sm:$0xf]
    %v811 = vld [vmem:[%s4] sm:$0x1]
    %v813 = vlaneseq
    %v814 = vshrl.u32 %v813, 7
    %v815 = vsub.s32 0, %v814
    %v816 = vrot.slane %v811, %v815
    %v834 = vunpack.c.l.b16 %v795
    %v835 = vunpack.c.l.b16 %v796
    %v836 = vunpack.c.l.b16 %v797
    %v837 = vunpack.c.l.b16 %v798
    %v838 = vunpack.c.l.b16 %v799
    %v839 = vunpack.c.l.b16 %v800
    %v840 = vunpack.c.l.b16 %v801
    %v841 = vunpack.c.l.b16 %v802
    %v842 = vunpack.c.l.b16 %v803
    %v843 = vunpack.c.l.b16 %v804
    %v844 = vunpack.c.l.b16 %v805
    %v845 = vunpack.c.l.b16 %v806
    %v846 = vunpack.c.l.b16 %v807
    %v847 = vunpack.c.l.b16 %v808
    %v848 = vunpack.c.l.b16 %v809
    %v849 = vunpack.c.l.b16 %v810
    %v850 = vpack.c.b16 %v835, %v834
    %v851 = vpack.c.b16 %v837, %v836
    %v852 = vpack.c.b16 %v839, %v838
    %v853 = vpack.c.b16 %v841, %v840
    %v854 = vpack.c.b16 %v843, %v842
    %v855 = vpack.c.b16 %v845, %v844
    %v856 = vpack.c.b16 %v847, %v846
    %v857 = vpack.c.b16 %v849, %v848
    %866 = vmatprep.subr.bf16.mxu0 0
    %867 = vmatpush1.bf16.msra.mxu0 %v850
    %868 = vmatprep.subr.bf16.mxu0 0
    %869 = vmatpush1.bf16.msra.mxu0 %v851
    %870 = vmatprep.subr.bf16.mxu0 0
    %871 = vmatpush1.bf16.msra.mxu0 %v852
    %872 = vmatprep.subr.bf16.mxu0 0
    %873 = vmatpush1.bf16.msra.mxu0 %v853
    %874 = vmatprep.subr.bf16.mxu0 0
    %875 = vmatpush1.bf16.msra.mxu0 %v854
    %876 = vmatprep.subr.bf16.mxu0 0
    %877 = vmatpush1.bf16.msra.mxu0 %v855
    %878 = vmatprep.subr.bf16.mxu0 0
    %879 = vmatpush1.bf16.msra.mxu0 %v856
    %880 = vmatprep.subr.bf16.mxu0 0
    %881 = vmatpush1.bf16.msra.mxu0 %v857
    %882 = vmatprep.subr.bf16.mxu0 0
    %883 = vmatpush1.bf16.msra.mxu0 0
    %884 = vmatprep.subr.bf16.mxu0 0
    %885 = vmatpush1.bf16.msra.mxu0 0
    %886 = vmatprep.subr.bf16.mxu0 0
    %887 = vmatpush1.bf16.msra.mxu0 0
    %888 = vmatprep.subr.bf16.mxu0 0
    %889 = vmatpush1.bf16.msra.mxu0 0
    %890 = vmatprep.subr.bf16.mxu0 0
    %891 = vmatpush1.bf16.msra.mxu0 0
    %892 = vmatprep.subr.bf16.mxu0 0
    %893 = vmatpush1.bf16.msra.mxu0 0
    %894 = vmatprep.subr.bf16.mxu0 0
    %895 = vmatpush1.bf16.msra.mxu0 0
    %896 = vmatprep.subr.bf16.mxu0 0
    %897 = vmatpush1.bf16.msra.mxu0 0
    %898 = vmatprep.mubr.bf16.mxu0 0
    %899 = vmatmul.mubr.bf16.gmra.mrb[0].mxu0 %v794
    %v900 = vpop.f32.mrb[0].mxu0
    %v901 = vadd.f32 %v816, %v900
    %v902 = vpop.f32.mrb[0].mxu0
    %v903 = vpop.f32.mrb[0].mxu0
    %v904 = vadd.f32 %v816, %v903
    %v905 = vpop.f32.mrb[0].mxu0
    %906 = vdwg.mxu0
    %v907 = vadd.f32 %v73, %v901
    %v908 = vadd.f32 %v74, %v904
    %v909 = vld [vmem:[%s5] sm:$0x1]
    %v910 = vld [vmem:[%s6] sm:$0x1]
    %911 = vadd.xlane.f32.xlu0 %v907
    %v912 = vpop.xlane.xlu0 %911
    %913 = vadd.xlane.f32.xlu0 %v908
    %v914 = vpop.xlane.xlu0 %913
    %v915 = vrcp.pop 128.0
    %v916 = vmul.f32 %v912, %v915
    %v917 = vmul.f32 %v914, %v915
    %v918 = vsub.f32 %v907, %v916
    %v919 = vsub.f32 %v908, %v917
    %v920 = vmul.f32 %v918, %v918
    %v921 = vmul.f32 %v919, %v919
    %922 = vadd.xlane.f32.xlu0 %v920
    %v923 = vpop.xlane.xlu0 %922
    %924 = vadd.xlane.f32.xlu0 %v921
    %v925 = vpop.xlane.xlu0 %924
    %v926 = vmul.f32 %v923, %v915
    %v927 = vmul.f32 %v925, %v915
    %v928 = vadd.f32 %v926, 1e-12
    %v929 = vadd.f32 %v927, 1e-12
    %v930 = vrsqrt.pop %v928
    %v931 = vrsqrt.pop %v929
    %v932 = vmul.f32 %v918, %v930
    %v933 = vmul.f32 %v919, %v931
    %v935 = vlaneseq
    %v936 = vshrl.u32 %v935, 7
    %v937 = vsub.s32 0, %v936
    %v938 = vrot.slane %v909, %v937
    %v940 = vmul.f32 %v932, %v938
    %v941 = vmul.f32 %v933, %v938
    %v943 = vlaneseq
    %v944 = vshrl.u32 %v943, 7
    %v945 = vsub.s32 0, %v944
    %v946 = vrot.slane %v910, %v945
    %v948 = vadd.f32 %v940, %v946
    %v949 = vadd.f32 %v941, %v946
    %v950 = vpack.c.bf16 %v949, %v948
    %v951 = vld [vmem:[#allocation2] sm:$0xff]
    %v952 = vld [vmem:[#allocation2 + $0x8] sm:$0xff]
    %v953 = vld [vmem:[#allocation2 + $0x10] sm:$0xff]
    %v954 = vld [vmem:[#allocation2 + $0x18] sm:$0xff]
    %v955 = vld [vmem:[#allocation2 + $0x20] sm:$0xff]
    %v956 = vld [vmem:[#allocation2 + $0x28] sm:$0xff]
    %v957 = vld [vmem:[#allocation2 + $0x30] sm:$0xff]
    %v958 = vld [vmem:[#allocation2 + $0x38] sm:$0xff]
    %v959 = vld [vmem:[#allocation2 + $0x40] sm:$0xff]
    %v960 = vld [vmem:[#allocation2 + $0x48] sm:$0xff]
    %v961 = vld [vmem:[#allocation2 + $0x50] sm:$0xff]
    %v962 = vld [vmem:[#allocation2 + $0x58] sm:$0xff]
    %v963 = vld [vmem:[#allocation2 + $0x60] sm:$0xff]
    %v964 = vld [vmem:[#allocation2 + $0x68] sm:$0xff]
    %v965 = vld [vmem:[#allocation2 + $0x70] sm:$0xff]
    %v966 = vld [vmem:[#allocation2 + $0x78] sm:$0xff]
    %v967 = vld [vmem:[%s8] sm:$0x3]
    %v969 = vlaneseq
    %v970 = vshrl.u32 %v969, 7
    %v971 = vsub.s32 0, %v970
    %v972 = vrot.slane %v967, %v971
    %v973 = vlaneseq
    %v974 = vshrl.u32 %v973, 7
    %v975 = vsub.s32 1, %v974
    %v976 = vrot.slane %v967, %v975
    %v995 = vunpack.c.l.b16 %v951
    %v996 = vunpack.c.h.b16 %v951
    %v997 = vunpack.c.l.b16 %v952
    %v998 = vunpack.c.h.b16 %v952
    %v999 = vunpack.c.l.b16 %v953
    %v1000 = vunpack.c.h.b16 %v953
    %v1001 = vunpack.c.l.b16 %v954
    %v1002 = vunpack.c.h.b16 %v954
    %v1003 = vunpack.c.l.b16 %v955
    %v1004 = vunpack.c.h.b16 %v955
    %v1005 = vunpack.c.l.b16 %v956
    %v1006 = vunpack.c.h.b16 %v956
    %v1007 = vunpack.c.l.b16 %v957
    %v1008 = vunpack.c.h.b16 %v957
    %v1009 = vunpack.c.l.b16 %v958
    %v1010 = vunpack.c.h.b16 %v958
    %v1011 = vunpack.c.l.b16 %v959
    %v1012 = vunpack.c.h.b16 %v959
    %v1013 = vunpack.c.l.b16 %v960
    %v1014 = vunpack.c.h.b16 %v960
    %v1015 = vunpack.c.l.b16 %v961
    %v1016 = vunpack.c.h.b16 %v961
    %v1017 = vunpack.c.l.b16 %v962
    %v1018 = vunpack.c.h.b16 %v962
    %v1019 = vunpack.c.l.b16 %v963
    %v1020 = vunpack.c.h.b16 %v963
    %v1021 = vunpack.c.l.b16 %v964
    %v1022 = vunpack.c.h.b16 %v964
    %v1023 = vunpack.c.l.b16 %v965
    %v1024 = vunpack.c.h.b16 %v965
    %v1025 = vunpack.c.l.b16 %v966
    %v1026 = vunpack.c.h.b16 %v966
    %v1027 = vpack.c.b16 %v997, %v995
    %v1028 = vpack.c.b16 %v998, %v996
    %v1029 = vpack.c.b16 %v1001, %v999
    %v1030 = vpack.c.b16 %v1002, %v1000
    %v1031 = vpack.c.b16 %v1005, %v1003
    %v1032 = vpack.c.b16 %v1006, %v1004
    %v1033 = vpack.c.b16 %v1009, %v1007
    %v1034 = vpack.c.b16 %v1010, %v1008
    %v1035 = vpack.c.b16 %v1013, %v1011
    %v1036 = vpack.c.b16 %v1014, %v1012
    %v1037 = vpack.c.b16 %v1017, %v1015
    %v1038 = vpack.c.b16 %v1018, %v1016
    %v1039 = vpack.c.b16 %v1021, %v1019
    %v1040 = vpack.c.b16 %v1022, %v1020
    %v1041 = vpack.c.b16 %v1025, %v1023
    %v1042 = vpack.c.b16 %v1026, %v1024
    %1059 = vmatprep.subr.bf16.mxu0 %v1028
    %1060 = vmatpush1.bf16.msra.mxu0 %v1027
    %1061 = vmatprep.subr.bf16.mxu0 %v1030
    %1062 = vmatpush1.bf16.msra.mxu0 %v1029
    %1063 = vmatprep.subr.bf16.mxu0 %v1032
    %1064 = vmatpush1.bf16.msra.mxu0 %v1031
    %1065 = vmatprep.subr.bf16.mxu0 %v1034
    %1066 = vmatpush1.bf16.msra.mxu0 %v1033
    %1067 = vmatprep.subr.bf16.mxu0 %v1036
    %1068 = vmatpush1.bf16.msra.mxu0 %v1035
    %1069 = vmatprep.subr.bf16.mxu0 %v1038
    %1070 = vmatpush1.bf16.msra.mxu0 %v1037
    %1071 = vmatprep.subr.bf16.mxu0 %v1040
    %1072 = vmatpush1.bf16.msra.mxu0 %v1039
    %1073 = vmatprep.subr.bf16.mxu0 %v1042
    %1074 = vmatpush1.bf16.msra.mxu0 %v1041
    %1075 = vmatprep.subr.bf16.mxu0 0
    %1076 = vmatpush1.bf16.msra.mxu0 0
    %1077 = vmatprep.subr.bf16.mxu0 0
    %1078 = vmatpush1.bf16.msra.mxu0 0
    %1079 = vmatprep.subr.bf16.mxu0 0
    %1080 = vmatpush1.bf16.msra.mxu0 0
    %1081 = vmatprep.subr.bf16.mxu0 0
    %1082 = vmatpush1.bf16.msra.mxu0 0
    %1083 = vmatprep.subr.bf16.mxu0 0
    %1084 = vmatpush1.bf16.msra.mxu0 0
    %1085 = vmatprep.subr.bf16.mxu0 0
    %1086 = vmatpush1.bf16.msra.mxu0 0
    %1087 = vmatprep.subr.bf16.mxu0 0
    %1088 = vmatpush1.bf16.msra.mxu0 0
    %1089 = vmatprep.subr.bf16.mxu0 0
    %1090 = vmatpush1.bf16.msra.mxu0 0
    %1091 = vmatprep.mubr.bf16.mxu0 0
    %1092 = vmatmul.mubr.bf16.gmra.mrb[0].mxu0 %v950
    %v1093 = vpop.f32.mrb[0].mxu0
    %v1094 = vadd.f32 %v972, %v1093
    %v1095 = vpop.f32.mrb[0].mxu0
    %v1096 = vadd.f32 %v976, %v1095
    %v1097 = vpop.f32.mrb[0].mxu0
    %v1098 = vadd.f32 %v972, %v1097
    %v1099 = vpop.f32.mrb[0].mxu0
    %v1100 = vadd.f32 %v976, %v1099
    %1101 = vdwg.mxu0
    %v1102 = vmul.f32 %v1094, 0.5
    %v1103 = vmul.f32 %v1096, 0.5
    %v1104 = vmul.f32 %v1098, 0.5
    %v1105 = vmul.f32 %v1100, 0.5
    %v1106 = vmul.f32 %v1094, 0.044715
    %v1107 = vmul.f32 %v1096, 0.044715
    %v1108 = vmul.f32 %v1098, 0.044715
    %v1109 = vmul.f32 %v1100, 0.044715
    %v1110 = vmul.f32 %v1106, %v1094
    %v1111 = vmul.f32 %v1107, %v1096
    %v1112 = vmul.f32 %v1108, %v1098
    %v1113 = vmul.f32 %v1109, %v1100
    %v1114 = vmul.f32 %v1110, %v1094
    %v1115 = vmul.f32 %v1111, %v1096
    %v1116 = vmul.f32 %v1112, %v1098
    %v1117 = vmul.f32 %v1113, %v1100
    %v1118 = vadd.f32 %v1094, %v1114
    %v1119 = vadd.f32 %v1096, %v1115
    %v1120 = vadd.f32 %v1098, %v1116
    %v1121 = vadd.f32 %v1100, %v1117
    %v1122 = vmul.f32 %v1118, 0.7978846
    %v1123 = vmul.f32 %v1119, 0.7978846
    %v1124 = vmul.f32 %v1120, 0.7978846
    %v1125 = vmul.f32 %v1121, 0.7978846
    %v1126 = vtanh.pop %v1122
    %v1127 = vtanh.pop %v1123
    %v1128 = vtanh.pop %v1124
    %v1129 = vtanh.pop %v1125
    %v1130 = vadd.f32 %v1126, 1.0
    %v1131 = vadd.f32 %v1127, 1.0
    %v1132 = vadd.f32 %v1128, 1.0
    %v1133 = vadd.f32 %v1129, 1.0
    %v1134 = vmul.f32 %v1102, %v1130
    %v1135 = vmul.f32 %v1103, %v1131
    %v1136 = vmul.f32 %v1104, %v1132
    %v1137 = vmul.f32 %v1105, %v1133
    %v1138 = vpack.c.bf16 %v1136, %v1134
    %v1139 = vpack.c.bf16 %v1137, %v1135
    %v1140 = vld [vmem:[#allocation4] sm:$0xf]
    %v1141 = vld [vmem:[#allocation4 + $0x4] sm:$0xf]
    %v1142 = vld [vmem:[#allocation4 + $0x8] sm:$0xf]
    %v1143 = vld [vmem:[#allocation4 + $0xc] sm:$0xf]
    %v1144 = vld [vmem:[#allocation4 + $0x10] sm:$0xf]
    %v1145 = vld [vmem:[#allocation4 + $0x14] sm:$0xf]
    %v1146 = vld [vmem:[#allocation4 + $0x18] sm:$0xf]
    %v1147 = vld [vmem:[#allocation4 + $0x1c] sm:$0xf]
    %v1148 = vld [vmem:[#allocation4 + $0x20] sm:$0xf]
    %v1149 = vld [vmem:[#allocation4 + $0x24] sm:$0xf]
    %v1150 = vld [vmem:[#allocation4 + $0x28] sm:$0xf]
    %v1151 = vld [vmem:[#allocation4 + $0x2c] sm:$0xf]
    %v1152 = vld [vmem:[#allocation4 + $0x30] sm:$0xf]
    %v1153 = vld [vmem:[#allocation4 + $0x34] sm:$0xf]
    %v1154 = vld [vmem:[#allocation4 + $0x38] sm:$0xf]
    %v1155 = vld [vmem:[#allocation4 + $0x3c] sm:$0xf]
    %v1156 = vld [vmem:[#allocation4 + $0x40] sm:$0xf]
    %v1157 = vld [vmem:[#allocation4 + $0x44] sm:$0xf]
    %v1158 = vld [vmem:[#allocation4 + $0x48] sm:$0xf]
    %v1159 = vld [vmem:[#allocation4 + $0x4c] sm:$0xf]
    %v1160 = vld [vmem:[#allocation4 + $0x50] sm:$0xf]
    %v1161 = vld [vmem:[#allocation4 + $0x54] sm:$0xf]
    %v1162 = vld [vmem:[#allocation4 + $0x58] sm:$0xf]
    %v1163 = vld [vmem:[#allocation4 + $0x5c] sm:$0xf]
    %v1164 = vld [vmem:[#allocation4 + $0x60] sm:$0xf]
    %v1165 = vld [vmem:[#allocation4 + $0x64] sm:$0xf]
    %v1166 = vld [vmem:[#allocation4 + $0x68] sm:$0xf]
    %v1167 = vld [vmem:[#allocation4 + $0x6c] sm:$0xf]
    %v1168 = vld [vmem:[#allocation4 + $0x70] sm:$0xf]
    %v1169 = vld [vmem:[#allocation4 + $0x74] sm:$0xf]
    %v1170 = vld [vmem:[#allocation4 + $0x78] sm:$0xf]
    %v1171 = vld [vmem:[#allocation4 + $0x7c] sm:$0xf]
    %v1172 = vld [vmem:[%s10] sm:$0x1]
    %v1174 = vlaneseq
    %v1175 = vshrl.u32 %v1174, 7
    %v1176 = vsub.s32 0, %v1175
    %v1177 = vrot.slane %v1172, %v1176
    %v1211 = vunpack.c.l.b16 %v1140
    %v1212 = vunpack.c.l.b16 %v1141
    %v1213 = vunpack.c.l.b16 %v1142
    %v1214 = vunpack.c.l.b16 %v1143
    %v1215 = vunpack.c.l.b16 %v1144
    %v1216 = vunpack.c.l.b16 %v1145
    %v1217 = vunpack.c.l.b16 %v1146
    %v1218 = vunpack.c.l.b16 %v1147
    %v1219 = vunpack.c.l.b16 %v1148
    %v1220 = vunpack.c.l.b16 %v1149
    %v1221 = vunpack.c.l.b16 %v1150
    %v1222 = vunpack.c.l.b16 %v1151
    %v1223 = vunpack.c.l.b16 %v1152
    %v1224 = vunpack.c.l.b16 %v1153
    %v1225 = vunpack.c.l.b16 %v1154
    %v1226 = vunpack.c.l.b16 %v1155
    %v1227 = vunpack.c.l.b16 %v1156
    %v1228 = vunpack.c.l.b16 %v1157
    %v1229 = vunpack.c.l.b16 %v1158
    %v1230 = vunpack.c.l.b16 %v1159
    %v1231 = vunpack.c.l.b16 %v1160
    %v1232 = vunpack.c.l.b16 %v1161
    %v1233 = vunpack.c.l.b16 %v1162
    %v1234 = vunpack.c.l.b16 %v1163
    %v1235 = vunpack.c.l.b16 %v1164
    %v1236 = vunpack.c.l.b16 %v1165
    %v1237 = vunpack.c.l.b16 %v1166
    %v1238 = vunpack.c.l.b16 %v1167
    %v1239 = vunpack.c.l.b16 %v1168
    %v1240 = vunpack.c.l.b16 %v1169
    %v1241 = vunpack.c.l.b16 %v1170
    %v1242 = vunpack.c.l.b16 %v1171
    %v1243 = vpack.c.b16 %v1212, %v1211
    %v1244 = vpack.c.b16 %v1214, %v1213
    %v1245 = vpack.c.b16 %v1216, %v1215
    %v1246 = vpack.c.b16 %v1218, %v1217
    %v1247 = vpack.c.b16 %v1220, %v1219
    %v1248 = vpack.c.b16 %v1222, %v1221
    %v1249 = vpack.c.b16 %v1224, %v1223
    %v1250 = vpack.c.b16 %v1226, %v1225
    %v1251 = vpack.c.b16 %v1228, %v1227
    %v1252 = vpack.c.b16 %v1230, %v1229
    %v1253 = vpack.c.b16 %v1232, %v1231
    %v1254 = vpack.c.b16 %v1234, %v1233
    %v1255 = vpack.c.b16 %v1236, %v1235
    %v1256 = vpack.c.b16 %v1238, %v1237
    %v1257 = vpack.c.b16 %v1240, %v1239
    %v1258 = vpack.c.b16 %v1242, %v1241
    %1275 = vmatprep.subr.bf16.mxu0 0
    %1276 = vmatpush1.bf16.msra.mxu0 %v1243
    %1277 = vmatprep.subr.bf16.mxu0 0
    %1278 = vmatpush1.bf16.msra.mxu0 %v1244
    %1279 = vmatprep.subr.bf16.mxu0 0
    %1280 = vmatpush1.bf16.msra.mxu0 %v1245
    %1281 = vmatprep.subr.bf16.mxu0 0
    %1282 = vmatpush1.bf16.msra.mxu0 %v1246
    %1283 = vmatprep.subr.bf16.mxu0 0
    %1284 = vmatpush1.bf16.msra.mxu0 %v1247
    %1285 = vmatprep.subr.bf16.mxu0 0
    %1286 = vmatpush1.bf16.msra.mxu0 %v1248
    %1287 = vmatprep.subr.bf16.mxu0 0
    %1288 = vmatpush1.bf16.msra.mxu0 %v1249
    %1289 = vmatprep.subr.bf16.mxu0 0
    %1290 = vmatpush1.bf16.msra.mxu0 %v1250
    %1291 = vmatprep.subr.bf16.mxu0 0
    %1292 = vmatpush1.bf16.msra.mxu0 %v1251
    %1293 = vmatprep.subr.bf16.mxu0 0
    %1294 = vmatpush1.bf16.msra.mxu0 %v1252
    %1295 = vmatprep.subr.bf16.mxu0 0
    %1296 = vmatpush1.bf16.msra.mxu0 %v1253
    %1297 = vmatprep.subr.bf16.mxu0 0
    %1298 = vmatpush1.bf16.msra.mxu0 %v1254
    %1299 = vmatprep.subr.bf16.mxu0 0
    %1300 = vmatpush1.bf16.msra.mxu0 %v1255
    %1301 = vmatprep.subr.bf16.mxu0 0
    %1302 = vmatpush1.bf16.msra.mxu0 %v1256
    %1303 = vmatprep.subr.bf16.mxu0 0
    %1304 = vmatpush1.bf16.msra.mxu0 %v1257
    %1305 = vmatprep.subr.bf16.mxu0 0
    %1306 = vmatpush1.bf16.msra.mxu0 %v1258
    %1307 = vmatprep.mubr.bf16.mxu0 %v1139
    %1308 = vmatmul.mubr.bf16.gmra.mrb[0].mxu0 %v1138
    %v1309 = vpop.f32.mrb[0].mxu0
    %v1310 = vadd.f32 %v1177, %v1309
    %v1311 = vpop.f32.mrb[0].mxu0
    %v1312 = vpop.f32.mrb[0].mxu0
    %v1313 = vadd.f32 %v1177, %v1312
    %v1314 = vpop.f32.mrb[0].mxu0
    %1315 = vdwg.mxu0
    %v1316 = vadd.f32 %v948, %v1310
    %v1317 = vadd.f32 %v949, %v1313
    %v1318 = vld [vmem:[%s11] sm:$0x1]
    %v1319 = vld [vmem:[%s12] sm:$0x1]
    %1320 = vadd.xlane.f32.xlu0 %v1316
    %v1321 = vpop.xlane.xlu0 %1320
    %1322 = vadd.xlane.f32.xlu0 %v1317
    %v1323 = vpop.xlane.xlu0 %1322
    %v1324 = vmul.f32 %v1321, %v915
    %v1325 = vmul.f32 %v1323, %v915
    %v1326 = vsub.f32 %v1316, %v1324
    %v1327 = vsub.f32 %v1317, %v1325
    %v1328 = vmul.f32 %v1326, %v1326
    %v1329 = vmul.f32 %v1327, %v1327
    %1330 = vadd.xlane.f32.xlu0 %v1328
    %v1331 = vpop.xlane.xlu0 %1330
    %1332 = vadd.xlane.f32.xlu0 %v1329
    %v1333 = vpop.xlane.xlu0 %1332
    %v1334 = vmul.f32 %v1331, %v915
    %v1335 = vmul.f32 %v1333, %v915
    %v1336 = vadd.f32 %v1334, 1e-12
    %v1337 = vadd.f32 %v1335, 1e-12
    %v1338 = vrsqrt.pop %v1336
    %v1339 = vrsqrt.pop %v1337
    %v1340 = vmul.f32 %v1326, %v1338
    %v1341 = vmul.f32 %v1327, %v1339
    %v1343 = vlaneseq
    %v1344 = vshrl.u32 %v1343, 7
    %v1345 = vsub.s32 0, %v1344
    %v1346 = vrot.slane %v1318, %v1345
    %v1348 = vmul.f32 %v1340, %v1346
    %v1349 = vmul.f32 %v1341, %v1346
    %v1351 = vlaneseq
    %v1352 = vshrl.u32 %v1351, 7
    %v1353 = vsub.s32 0, %v1352
    %v1354 = vrot.slane %v1319, %v1353
    %v1356 = vadd.f32 %v1348, %v1354
    %v1357 = vadd.f32 %v1349, %v1354
    %1358 = vst [vmem:[%s13] sm:$0xff] %v1356
    %1359 = vst [vmem:[%s13 + $0x8] sm:$0xff] %v1357
    // Predicated region
    $region62: #{language_model_forward.5} parent=1 // pred_check
      _
    $region63: #{language_model_forward.5} parent=1 // pred_check_branch
      %1361 = sbr.rel (0) target = $region65
    $region64: #{language_model_forward.5} parent=1 // pred_region
      _
    $region65: #{language_model_forward.5} parent=1 // pred_fallthru
      _
    // Predicated region
    $region66: #{language_model_forward.5} parent=1 // pred_check
      _
    $region67: #{language_model_forward.5} parent=1 // pred_check_branch
      %1363 = sbr.rel (0) target = $region69
    $region68: #{language_model_forward.5} parent=1 // pred_region
      _
    $region69: #{language_model_forward.5} parent=1 // pred_fallthru
      _
    %1364 = vsyncpa [#allocation3], 1
    %1365 = vsyncpa [#allocation5], 1

</llo_original>
